<compile_context>
chip_gen: v5e
topology: v5e:2x2
jax: 0.10.0
libtpu: 0.0.40
codegen_flags: <defaults>
</compile_context>

<pallas_src>
import math

import jax
import jax.numpy as jnp
import numpy as np
from jax.experimental import pallas as pl
from jax.experimental.pallas import tpu as pltpu

D_MODEL = 50
N_HEADS = 12
D_HEAD = 64
D_FF = 200
LN_EPS = 1e-5


def _gelu_erf(x):
    # matches torch: x * 0.5 * (1 + erf(x / sqrt(2)))
    return x * 0.5 * (1.0 + jax.lax.erf(x * (1.0 / math.sqrt(2.0))))


def _make_kernel(B, S, return_attn):
    HD = N_HEADS * D_HEAD
    scale = 1.0 / math.sqrt(D_HEAD)

    def kernel(x_ref, bias_ref, wqkv_ref, bqkv_ref, wo_ref, bo_ref,
               gamma_ref, beta_ref, w1_ref, b1_ref, w2_ref, b2_ref,
               out_ref, *attn_refs):
        x = x_ref[...]                                   # [B*S, D_MODEL]

        # --- fused QKV projection: one MXU matmul for all tokens/heads ---
        qkv = jnp.dot(x, wqkv_ref[...],
                      preferred_element_type=jnp.float32) + bqkv_ref[...]
        wo_h = wo_ref[...]                               # [H, Dh, D_MODEL]

        per_batch_proj = []
        for b in range(B):                               # B is tiny & static
            qkv_b = qkv[b * S:(b + 1) * S]               # [S, 3*H*Dh]
            # lane slices at multiples of 128 (0 / 768 / 1536)
            q = qkv_b[:, 0:HD].reshape(S, N_HEADS, D_HEAD)
            k = qkv_b[:, HD:2 * HD].reshape(S, N_HEADS, D_HEAD)
            v = qkv_b[:, 2 * HD:3 * HD].reshape(S, N_HEADS, D_HEAD)
            q_h = jnp.transpose(q, (1, 0, 2))            # [H, S, Dh]
            k_h = jnp.transpose(k, (1, 0, 2))
            v_h = jnp.transpose(v, (1, 0, 2))

            # --- scaled dot-product attention (additive mask bias) ---
            scores = jnp.einsum('hqd,hkd->hqk', q_h, k_h,
                                preferred_element_type=jnp.float32) * scale
            scores = scores + bias_ref[b][None, :, :]    # [H, S, S]

            m = jnp.max(scores, axis=-1, keepdims=True)
            e = jnp.exp(scores - m)
            denom = jnp.sum(e, axis=-1, keepdims=True)
            attn = e * pl.reciprocal(denom, approx=True)  # EUP, not VALU divide

            if return_attn:
                attn_refs[0][b] = attn.astype(attn_refs[0].dtype)

            ctx = jnp.einsum('hqk,hkd->hqd', attn, v_h,
                             preferred_element_type=jnp.float32)   # [H, S, Dh]
            # per-head output projection (avoids transpose+reshape relayout)
            proj = jnp.einsum('hqd,hdo->hqo', ctx, wo_h,
                              preferred_element_type=jnp.float32)  # [H, S, D]
            per_batch_proj.append(jnp.sum(proj, axis=0))           # [S, D]

        # --- output bias + residual + LayerNorm over all tokens at once ---
        attn_out = jnp.concatenate(per_batch_proj, axis=0) + bo_ref[...]
        y = attn_out + x                                 # [B*S, D_MODEL]
        mu = jnp.mean(y, axis=-1, keepdims=True)
        var = jnp.mean((y - mu) ** 2, axis=-1, keepdims=True)
        yn = ((y - mu) * jax.lax.rsqrt(var + LN_EPS)) * gamma_ref[...] \
            + beta_ref[...]

        # --- position-wise feed forward (no residual / no norm, per ref) ---
        h = jnp.dot(yn, w1_ref[...],
                    preferred_element_type=jnp.float32) + b1_ref[...]
        h = _gelu_erf(h)
        out = jnp.dot(h, w2_ref[...],
                      preferred_element_type=jnp.float32) + b2_ref[...]

        out_ref[...] = out.astype(out_ref.dtype)

    return kernel


def encoder_layer(x, attn_mask, params, return_attn=True):
    """x: [B, S, D_MODEL]; attn_mask: [B, S, S] (nonzero == masked)."""
    B, S, D = x.shape
    assert D == D_MODEL

    # Fold batch into tokens for all position-wise math.
    x2d = x.reshape(B * S, D_MODEL)
    # Additive mask bias precomputed once in the wrapper.
    bias = jnp.where(attn_mask != 0, -1e9, 0.0).astype(jnp.float32)   # [B,S,S]

    # Fuse Q/K/V weights & biases; pre-split the output projection per head.
    wqkv = jnp.concatenate([params["wq"], params["wk"], params["wv"]], axis=1)
    bqkv = jnp.concatenate([params["bq"], params["bk"], params["bv"]], axis=1)
    wo_h = params["wo"].reshape(N_HEADS, D_HEAD, D_MODEL)

    args = (x2d, bias, wqkv, bqkv, wo_h, params["bo"],
            params["gamma"], params["beta"],
            params["w1"], params["b1"], params["w2"], params["b2"])

    in_specs = [pl.BlockSpec(memory_space=pltpu.MemorySpace.VMEM)
                for _ in args]

    out_shapes = [jax.ShapeDtypeStruct((B * S, D_MODEL), jnp.float32)]
    out_specs = [pl.BlockSpec(memory_space=pltpu.MemorySpace.VMEM)]
    if return_attn:
        out_shapes.append(
            jax.ShapeDtypeStruct((B, N_HEADS, S, S), jnp.float32))
        out_specs.append(pl.BlockSpec(memory_space=pltpu.MemorySpace.VMEM))

    results = pl.pallas_call(
        _make_kernel(B, S, return_attn),
        out_shape=tuple(out_shapes),
        in_specs=in_specs,
        out_specs=tuple(out_specs),
    )(*args)

    out = results[0].reshape(B, S, D_MODEL)
    if return_attn:
        return out, results[1]
    return out


def init_params(key):
    keys = jax.random.split(key, 16)
    s = 0.05

    def lin(kw, kb, fan_in, fan_out):
        w = s * jax.random.normal(kw, (fan_in, fan_out), jnp.float32)
        b = s * jax.random.normal(kb, (1, fan_out), jnp.float32)
        return w, b

    wq, bq = lin(keys[0], keys[1], D_MODEL, N_HEADS * D_HEAD)
    wk, bk = lin(keys[2], keys[3], D_MODEL, N_HEADS * D_HEAD)
    wv, bv = lin(keys[4], keys[5], D_MODEL, N_HEADS * D_HEAD)
    wo, bo = lin(keys[6], keys[7], N_HEADS * D_HEAD, D_MODEL)
    w1, b1 = lin(keys[8], keys[9], D_MODEL, D_FF)
    w2, b2 = lin(keys[10], keys[11], D_FF, D_MODEL)
    gamma = jnp.ones((1, D_MODEL), jnp.float32)
    beta = jnp.zeros((1, D_MODEL), jnp.float32)
    return dict(wq=wq, bq=bq, wk=wk, bk=bk, wv=wv, bv=bv,
                wo=wo, bo=bo, gamma=gamma, beta=beta,
                w1=w1, b1=b1, w2=w2, b2=b2)


def reference(x, mask_f, p):
    # Pure-JAX replica of the PyTorch forward for validation.
    B, S, _ = x.shape
    q = (x @ p["wq"] + p["bq"]).reshape(B, S, N_HEADS, D_HEAD).transpose(0, 2, 1, 3)
    k = (x @ p["wk"] + p["bk"]).reshape(B, S, N_HEADS, D_HEAD).transpose(0, 2, 1, 3)
    v = (x @ p["wv"] + p["bv"]).reshape(B, S, N_HEADS, D_HEAD).transpose(0, 2, 1, 3)
    scores = jnp.einsum('bhqd,bhkd->bhqk', q, k) / math.sqrt(D_HEAD)
    scores = jnp.where(mask_f[:, None, :, :] != 0, -1e9, scores)
    attn = jax.nn.softmax(scores, axis=-1)
    ctx = jnp.einsum('bhqk,bhkd->bhqd', attn, v).transpose(0, 2, 1, 3).reshape(B, S, -1)
    y = ctx @ p["wo"] + p["bo"] + x
    mu = jnp.mean(y, -1, keepdims=True)
    var = jnp.mean((y - mu) ** 2, -1, keepdims=True)
    yn = (y - mu) / jnp.sqrt(var + LN_EPS) * p["gamma"] + p["beta"]
    h = _gelu_erf(yn @ p["w1"] + p["b1"])
    out = h @ p["w2"] + p["b2"]
    return out, attn


if __name__ == "__main__":
    key = jax.random.PRNGKey(0)
    k_x, k_p = jax.random.split(key)

    B, S = 2, 8
    x = jax.random.normal(k_x, (B, S, D_MODEL), jnp.float32)

    # BERT-style padding mask: last tokens of each sequence are padding.
    pad = jnp.array([[0] * 6 + [1] * 2,
                     [0] * 7 + [1] * 1], dtype=jnp.float32)      # [B, S]
    mask_f = jnp.broadcast_to(pad[:, None, :], (B, S, S)).astype(jnp.float32)

    params = init_params(k_p)

    out, attn = encoder_layer(x, mask_f, params, return_attn=True)
    out = jax.block_until_ready(out)
    attn = jax.block_until_ready(attn)

    ref_out, ref_attn = reference(x, mask_f, params)
    assert out.shape == (B, S, D_MODEL) and attn.shape == (B, N_HEADS, S, S)
    np.testing.assert_allclose(np.asarray(out), np.asarray(ref_out),
                               rtol=1e-2, atol=1e-2)
    np.testing.assert_allclose(np.asarray(attn), np.asarray(ref_attn),
                               rtol=1e-2, atol=1e-2)

    print("KERNEL_OK")
</pallas_src>

<mosaic_0001>
module attributes {stable_mosaic.version = 11 : i64} {
  func.func @kernel(%arg0: memref<16x50xf32, #tpu.memory_space<vmem>>, %arg1: memref<2x8x8xf32, #tpu.memory_space<vmem>>, %arg2: memref<50x2304xf32, #tpu.memory_space<vmem>>, %arg3: memref<1x2304xf32, #tpu.memory_space<vmem>>, %arg4: memref<12x64x50xf32, #tpu.memory_space<vmem>>, %arg5: memref<1x50xf32, #tpu.memory_space<vmem>>, %arg6: memref<1x50xf32, #tpu.memory_space<vmem>>, %arg7: memref<1x50xf32, #tpu.memory_space<vmem>>, %arg8: memref<50x200xf32, #tpu.memory_space<vmem>>, %arg9: memref<1x200xf32, #tpu.memory_space<vmem>>, %arg10: memref<200x50xf32, #tpu.memory_space<vmem>>, %arg11: memref<1x50xf32, #tpu.memory_space<vmem>>, %arg12: memref<16x50xf32, #tpu.memory_space<vmem>>, %arg13: memref<2x12x8x8xf32, #tpu.memory_space<vmem>>) attributes {dimension_semantics = [], scalar_prefetch = 0 : i64, scratch_operands = 0 : i64, tpu.core_type = #tpu.core_type<tc>} {
    %c0 = arith.constant 0 : index
    %c0_0 = arith.constant 0 : index
    %0 = vector.load %arg0[%c0, %c0_0] : memref<16x50xf32, #tpu.memory_space<vmem>>, vector<16x50xf32>
    %c0_1 = arith.constant 0 : index
    %c0_2 = arith.constant 0 : index
    %1 = vector.load %arg2[%c0_1, %c0_2] : memref<50x2304xf32, #tpu.memory_space<vmem>>, vector<50x2304xf32>
    %cst = arith.constant dense<0.000000e+00> : vector<16x2304xf32>
    %2 = tpu.matmul %0, %1, %cst {dimension_numbers = #tpu.dot_dimension_numbers<[1], [0], [0], [1], [0, 0, 1, 1], [], []>} : vector<16x50xf32>, vector<50x2304xf32>, vector<16x2304xf32> -> vector<16x2304xf32>
    %c0_3 = arith.constant 0 : index
    %c0_4 = arith.constant 0 : index
    %3 = vector.load %arg3[%c0_3, %c0_4] : memref<1x2304xf32, #tpu.memory_space<vmem>>, vector<1x2304xf32>
    %4 = vector.broadcast %3 : vector<1x2304xf32> to vector<16x2304xf32>
    %5 = arith.addf %2, %4 : vector<16x2304xf32>
    %c0_5 = arith.constant 0 : index
    %c0_6 = arith.constant 0 : index
    %c0_7 = arith.constant 0 : index
    %6 = vector.load %arg4[%c0_5, %c0_6, %c0_7] : memref<12x64x50xf32, #tpu.memory_space<vmem>>, vector<12x64x50xf32>
    %7 = vector.extract_strided_slice %5 {offsets = [0, 0], sizes = [8, 2304], strides = [1, 1]} : vector<16x2304xf32> to vector<8x2304xf32>
    %8 = vector.extract_strided_slice %7 {offsets = [0, 0], sizes = [8, 768], strides = [1, 1]} : vector<8x2304xf32> to vector<8x768xf32>
    %9 = vector.shape_cast %8 : vector<8x768xf32> to vector<8x12x64xf32>
    %10 = vector.extract_strided_slice %7 {offsets = [0, 768], sizes = [8, 768], strides = [1, 1]} : vector<8x2304xf32> to vector<8x768xf32>
    %11 = vector.shape_cast %10 : vector<8x768xf32> to vector<8x12x64xf32>
    %12 = vector.extract_strided_slice %7 {offsets = [0, 1536], sizes = [8, 768], strides = [1, 1]} : vector<8x2304xf32> to vector<8x768xf32>
    %13 = vector.shape_cast %12 : vector<8x768xf32> to vector<8x12x64xf32>
    %14 = tpu.transpose %9, [1, 0, 2] : vector<8x12x64xf32> -> vector<12x8x64xf32>
    %15 = tpu.transpose %11, [1, 0, 2] : vector<8x12x64xf32> -> vector<12x8x64xf32>
    %16 = tpu.transpose %13, [1, 0, 2] : vector<8x12x64xf32> -> vector<12x8x64xf32>
    "tpu.trace_start"() <{level = 10 : i32, message = "hqd,hkd->hqk"}> : () -> ()
    %cst_8 = arith.constant dense<0.000000e+00> : vector<12x8x8xf32>
    %17 = tpu.matmul %14, %15, %cst_8 {dimension_numbers = #tpu.dot_dimension_numbers<[2], [2], [1], [1], [0, 0, 0, 1, 1, 1], [0], [0]>} : vector<12x8x64xf32>, vector<12x8x64xf32>, vector<12x8x8xf32> -> vector<12x8x8xf32>
    "tpu.trace_stop"() : () -> ()
    %cst_9 = arith.constant 1.250000e-01 : f32
    %18 = vector.broadcast %cst_9 : f32 to vector<12x8x8xf32>
    %19 = arith.mulf %17, %18 : vector<12x8x8xf32>
    %c0_10 = arith.constant 0 : index
    %c0_11 = arith.constant 0 : index
    %c0_12 = arith.constant 0 : index
    %20 = vector.load %arg1[%c0_10, %c0_11, %c0_12] : memref<2x8x8xf32, #tpu.memory_space<vmem>>, vector<1x8x8xf32>
    %21 = vector.shape_cast %20 : vector<1x8x8xf32> to vector<8x8xf32>
    %22 = vector.shape_cast %21 : vector<8x8xf32> to vector<1x8x8xf32>
    %23 = vector.broadcast %22 : vector<1x8x8xf32> to vector<12x8x8xf32>
    %24 = arith.addf %19, %23 : vector<12x8x8xf32>
    %cst_13 = arith.constant dense<0xFF800000> : vector<12x8xf32>
    %25 = vector.multi_reduction <maximumf>, %24, %cst_13 [2] : vector<12x8x8xf32> to vector<12x8xf32>
    %26 = vector.shape_cast %25 : vector<12x8xf32> to vector<12x8x1xf32>
    %27 = vector.broadcast %26 : vector<12x8x1xf32> to vector<12x8x8xf32>
    %28 = arith.subf %24, %27 : vector<12x8x8xf32>
    %29 = math.exp %28 : vector<12x8x8xf32>
    %cst_14 = arith.constant dense<0.000000e+00> : vector<12x8xf32>
    %30 = vector.multi_reduction <add>, %29, %cst_14 [2] : vector<12x8x8xf32> to vector<12x8xf32>
    %31 = vector.shape_cast %30 : vector<12x8xf32> to vector<12x8x1xf32>
    %32 = tpu.reciprocal %31 {approx = true} : vector<12x8x1xf32> -> vector<12x8x1xf32>
    %33 = vector.broadcast %32 : vector<12x8x1xf32> to vector<12x8x8xf32>
    %34 = arith.mulf %29, %33 : vector<12x8x8xf32>
    %c0_15 = arith.constant 0 : index
    %c0_16 = arith.constant 0 : index
    %c0_17 = arith.constant 0 : index
    %c0_18 = arith.constant 0 : index
    %35 = vector.load %arg13[%c0_15, %c0_16, %c0_17, %c0_18] : memref<2x12x8x8xf32, #tpu.memory_space<vmem>>, vector<1x12x8x8xf32>
    %36 = vector.shape_cast %35 : vector<1x12x8x8xf32> to vector<12x8x8xf32>
    %37 = vector.shape_cast %34 : vector<12x8x8xf32> to vector<1x12x8x8xf32>
    tpu.vector_store %arg13[%c0_15, %c0_16, %c0_17, %c0_18], %37 {strides = array<i32>} : memref<2x12x8x8xf32, #tpu.memory_space<vmem>>, vector<1x12x8x8xf32>,
    "tpu.trace_start"() <{level = 10 : i32, message = "hqk,hkd->hqd"}> : () -> ()
    %cst_19 = arith.constant dense<0.000000e+00> : vector<12x8x64xf32>
    %38 = tpu.matmul %34, %16, %cst_19 {dimension_numbers = #tpu.dot_dimension_numbers<[2], [1], [1], [2], [0, 0, 0, 1, 1, 2], [0], [0]>} : vector<12x8x8xf32>, vector<12x8x64xf32>, vector<12x8x64xf32> -> vector<12x8x64xf32>
    "tpu.trace_stop"() : () -> ()
    "tpu.trace_start"() <{level = 10 : i32, message = "hqd,hdo->hqo"}> : () -> ()
    %cst_20 = arith.constant dense<0.000000e+00> : vector<12x8x50xf32>
    %39 = tpu.matmul %38, %6, %cst_20 {dimension_numbers = #tpu.dot_dimension_numbers<[2], [1], [1], [2], [0, 0, 0, 1, 1, 2], [0], [0]>} : vector<12x8x64xf32>, vector<12x64x50xf32>, vector<12x8x50xf32> -> vector<12x8x50xf32>
    "tpu.trace_stop"() : () -> ()
    %cst_21 = arith.constant dense<0.000000e+00> : vector<8x50xf32>
    %40 = vector.multi_reduction <add>, %39, %cst_21 [0] : vector<12x8x50xf32> to vector<8x50xf32>
    %41 = vector.extract_strided_slice %5 {offsets = [8, 0], sizes = [8, 2304], strides = [1, 1]} : vector<16x2304xf32> to vector<8x2304xf32>
    %42 = vector.extract_strided_slice %41 {offsets = [0, 0], sizes = [8, 768], strides = [1, 1]} : vector<8x2304xf32> to vector<8x768xf32>
    %43 = vector.shape_cast %42 : vector<8x768xf32> to vector<8x12x64xf32>
    %44 = vector.extract_strided_slice %41 {offsets = [0, 768], sizes = [8, 768], strides = [1, 1]} : vector<8x2304xf32> to vector<8x768xf32>
    %45 = vector.shape_cast %44 : vector<8x768xf32> to vector<8x12x64xf32>
    %46 = vector.extract_strided_slice %41 {offsets = [0, 1536], sizes = [8, 768], strides = [1, 1]} : vector<8x2304xf32> to vector<8x768xf32>
    %47 = vector.shape_cast %46 : vector<8x768xf32> to vector<8x12x64xf32>
    %48 = tpu.transpose %43, [1, 0, 2] : vector<8x12x64xf32> -> vector<12x8x64xf32>
    %49 = tpu.transpose %45, [1, 0, 2] : vector<8x12x64xf32> -> vector<12x8x64xf32>
    %50 = tpu.transpose %47, [1, 0, 2] : vector<8x12x64xf32> -> vector<12x8x64xf32>
    "tpu.trace_start"() <{level = 10 : i32, message = "hqd,hkd->hqk"}> : () -> ()
    %cst_22 = arith.constant dense<0.000000e+00> : vector<12x8x8xf32>
    %51 = tpu.matmul %48, %49, %cst_22 {dimension_numbers = #tpu.dot_dimension_numbers<[2], [2], [1], [1], [0, 0, 0, 1, 1, 1], [0], [0]>} : vector<12x8x64xf32>, vector<12x8x64xf32>, vector<12x8x8xf32> -> vector<12x8x8xf32>
    "tpu.trace_stop"() : () -> ()
    %cst_23 = arith.constant 1.250000e-01 : f32
    %52 = vector.broadcast %cst_23 : f32 to vector<12x8x8xf32>
    %53 = arith.mulf %51, %52 : vector<12x8x8xf32>
    %c1 = arith.constant 1 : index
    %c0_24 = arith.constant 0 : index
    %c0_25 = arith.constant 0 : index
    %54 = vector.load %arg1[%c1, %c0_24, %c0_25] : memref<2x8x8xf32, #tpu.memory_space<vmem>>, vector<1x8x8xf32>
    %55 = vector.shape_cast %54 : vector<1x8x8xf32> to vector<8x8xf32>
    %56 = vector.shape_cast %55 : vector<8x8xf32> to vector<1x8x8xf32>
    %57 = vector.broadcast %56 : vector<1x8x8xf32> to vector<12x8x8xf32>
    %58 = arith.addf %53, %57 : vector<12x8x8xf32>
    %cst_26 = arith.constant dense<0xFF800000> : vector<12x8xf32>
    %59 = vector.multi_reduction <maximumf>, %58, %cst_26 [2] : vector<12x8x8xf32> to vector<12x8xf32>
    %60 = vector.shape_cast %59 : vector<12x8xf32> to vector<12x8x1xf32>
    %61 = vector.broadcast %60 : vector<12x8x1xf32> to vector<12x8x8xf32>
    %62 = arith.subf %58, %61 : vector<12x8x8xf32>
    %63 = math.exp %62 : vector<12x8x8xf32>
    %cst_27 = arith.constant dense<0.000000e+00> : vector<12x8xf32>
    %64 = vector.multi_reduction <add>, %63, %cst_27 [2] : vector<12x8x8xf32> to vector<12x8xf32>
    %65 = vector.shape_cast %64 : vector<12x8xf32> to vector<12x8x1xf32>
    %66 = tpu.reciprocal %65 {approx = true} : vector<12x8x1xf32> -> vector<12x8x1xf32>
    %67 = vector.broadcast %66 : vector<12x8x1xf32> to vector<12x8x8xf32>
    %68 = arith.mulf %63, %67 : vector<12x8x8xf32>
    %c1_28 = arith.constant 1 : index
    %c0_29 = arith.constant 0 : index
    %c0_30 = arith.constant 0 : index
    %c0_31 = arith.constant 0 : index
    %69 = vector.load %arg13[%c1_28, %c0_29, %c0_30, %c0_31] : memref<2x12x8x8xf32, #tpu.memory_space<vmem>>, vector<1x12x8x8xf32>
    %70 = vector.shape_cast %69 : vector<1x12x8x8xf32> to vector<12x8x8xf32>
    %71 = vector.shape_cast %68 : vector<12x8x8xf32> to vector<1x12x8x8xf32>
    tpu.vector_store %arg13[%c1_28, %c0_29, %c0_30, %c0_31], %71 {strides = array<i32>} : memref<2x12x8x8xf32, #tpu.memory_space<vmem>>, vector<1x12x8x8xf32>,
    "tpu.trace_start"() <{level = 10 : i32, message = "hqk,hkd->hqd"}> : () -> ()
    %cst_32 = arith.constant dense<0.000000e+00> : vector<12x8x64xf32>
    %72 = tpu.matmul %68, %50, %cst_32 {dimension_numbers = #tpu.dot_dimension_numbers<[2], [1], [1], [2], [0, 0, 0, 1, 1, 2], [0], [0]>} : vector<12x8x8xf32>, vector<12x8x64xf32>, vector<12x8x64xf32> -> vector<12x8x64xf32>
    "tpu.trace_stop"() : () -> ()
    "tpu.trace_start"() <{level = 10 : i32, message = "hqd,hdo->hqo"}> : () -> ()
    %cst_33 = arith.constant dense<0.000000e+00> : vector<12x8x50xf32>
    %73 = tpu.matmul %72, %6, %cst_33 {dimension_numbers = #tpu.dot_dimension_numbers<[2], [1], [1], [2], [0, 0, 0, 1, 1, 2], [0], [0]>} : vector<12x8x64xf32>, vector<12x64x50xf32>, vector<12x8x50xf32> -> vector<12x8x50xf32>
    "tpu.trace_stop"() : () -> ()
    %cst_34 = arith.constant dense<0.000000e+00> : vector<8x50xf32>
    %74 = vector.multi_reduction <add>, %73, %cst_34 [0] : vector<12x8x50xf32> to vector<8x50xf32>
    %75 = tpu.concatenate %40, %74 in 0 : vector<8x50xf32>, vector<8x50xf32> -> vector<16x50xf32>
    %c0_35 = arith.constant 0 : index
    %c0_36 = arith.constant 0 : index
    %76 = vector.load %arg5[%c0_35, %c0_36] : memref<1x50xf32, #tpu.memory_space<vmem>>, vector<1x50xf32>
    %77 = vector.broadcast %76 : vector<1x50xf32> to vector<16x50xf32>
    %78 = arith.addf %75, %77 : vector<16x50xf32>
    %79 = arith.addf %78, %0 : vector<16x50xf32>
    %cst_37 = arith.constant dense<0.000000e+00> : vector<16xf32>
    %80 = vector.multi_reduction <add>, %79, %cst_37 [1] : vector<16x50xf32> to vector<16xf32>
    %81 = vector.shape_cast %80 : vector<16xf32> to vector<16x1xf32>
    %cst_38 = arith.constant 5.000000e+01 : f32
    %82 = vector.broadcast %cst_38 : f32 to vector<16x1xf32>
    %83 = arith.divf %81, %82 : vector<16x1xf32>
    %84 = vector.broadcast %83 : vector<16x1xf32> to vector<16x50xf32>
    %85 = arith.subf %79, %84 : vector<16x50xf32>
    %86 = arith.mulf %85, %85 : vector<16x50xf32>
    %cst_39 = arith.constant dense<0.000000e+00> : vector<16xf32>
    %87 = vector.multi_reduction <add>, %86, %cst_39 [1] : vector<16x50xf32> to vector<16xf32>
    %88 = vector.shape_cast %87 : vector<16xf32> to vector<16x1xf32>
    %cst_40 = arith.constant 5.000000e+01 : f32
    %89 = vector.broadcast %cst_40 : f32 to vector<16x1xf32>
    %90 = arith.divf %88, %89 : vector<16x1xf32>
    %91 = vector.broadcast %83 : vector<16x1xf32> to vector<16x50xf32>
    %92 = arith.subf %79, %91 : vector<16x50xf32>
    %cst_41 = arith.constant 9.99999974E-6 : f32
    %93 = vector.broadcast %cst_41 : f32 to vector<16x1xf32>
    %94 = arith.addf %90, %93 : vector<16x1xf32>
    %95 = math.rsqrt %94 : vector<16x1xf32>
    %96 = vector.broadcast %95 : vector<16x1xf32> to vector<16x50xf32>
    %97 = arith.mulf %92, %96 : vector<16x50xf32>
    %c0_42 = arith.constant 0 : index
    %c0_43 = arith.constant 0 : index
    %98 = vector.load %arg6[%c0_42, %c0_43] : memref<1x50xf32, #tpu.memory_space<vmem>>, vector<1x50xf32>
    %99 = vector.broadcast %98 : vector<1x50xf32> to vector<16x50xf32>
    %100 = arith.mulf %97, %99 : vector<16x50xf32>
    %c0_44 = arith.constant 0 : index
    %c0_45 = arith.constant 0 : index
    %101 = vector.load %arg7[%c0_44, %c0_45] : memref<1x50xf32, #tpu.memory_space<vmem>>, vector<1x50xf32>
    %102 = vector.broadcast %101 : vector<1x50xf32> to vector<16x50xf32>
    %103 = arith.addf %100, %102 : vector<16x50xf32>
    %c0_46 = arith.constant 0 : index
    %c0_47 = arith.constant 0 : index
    %104 = vector.load %arg8[%c0_46, %c0_47] : memref<50x200xf32, #tpu.memory_space<vmem>>, vector<50x200xf32>
    %cst_48 = arith.constant dense<0.000000e+00> : vector<16x200xf32>
    %105 = tpu.matmul %103, %104, %cst_48 {dimension_numbers = #tpu.dot_dimension_numbers<[1], [0], [0], [1], [0, 0, 1, 1], [], []>} : vector<16x50xf32>, vector<50x200xf32>, vector<16x200xf32> -> vector<16x200xf32>
    %c0_49 = arith.constant 0 : index
    %c0_50 = arith.constant 0 : index
    %106 = vector.load %arg9[%c0_49, %c0_50] : memref<1x200xf32, #tpu.memory_space<vmem>>, vector<1x200xf32>
    %107 = vector.broadcast %106 : vector<1x200xf32> to vector<16x200xf32>
    %108 = arith.addf %105, %107 : vector<16x200xf32>
    %cst_51 = arith.constant 5.000000e-01 : f32
    %109 = vector.broadcast %cst_51 : f32 to vector<16x200xf32>
    %110 = arith.mulf %108, %109 : vector<16x200xf32>
    %cst_52 = arith.constant 0.707106769 : f32
    %111 = vector.broadcast %cst_52 : f32 to vector<16x200xf32>
    %112 = arith.mulf %108, %111 : vector<16x200xf32>
    %113 = math.erf %112 : vector<16x200xf32>
    %cst_53 = arith.constant 1.000000e+00 : f32
    %114 = vector.broadcast %cst_53 : f32 to vector<16x200xf32>
    %115 = arith.addf %114, %113 : vector<16x200xf32>
    %116 = arith.mulf %110, %115 : vector<16x200xf32>
    %c0_54 = arith.constant 0 : index
    %c0_55 = arith.constant 0 : index
    %117 = vector.load %arg10[%c0_54, %c0_55] : memref<200x50xf32, #tpu.memory_space<vmem>>, vector<200x50xf32>
    %cst_56 = arith.constant dense<0.000000e+00> : vector<16x50xf32>
    %118 = tpu.matmul %116, %117, %cst_56 {dimension_numbers = #tpu.dot_dimension_numbers<[1], [0], [0], [1], [0, 0, 1, 1], [], []>} : vector<16x200xf32>, vector<200x50xf32>, vector<16x50xf32> -> vector<16x50xf32>
    %c0_57 = arith.constant 0 : index
    %c0_58 = arith.constant 0 : index
    %119 = vector.load %arg11[%c0_57, %c0_58] : memref<1x50xf32, #tpu.memory_space<vmem>>, vector<1x50xf32>
    %120 = vector.broadcast %119 : vector<1x50xf32> to vector<16x50xf32>
    %121 = arith.addf %118, %120 : vector<16x50xf32>
    %c0_59 = arith.constant 0 : index
    %c0_60 = arith.constant 0 : index
    %122 = vector.load %arg12[%c0_59, %c0_60] : memref<16x50xf32, #tpu.memory_space<vmem>>, vector<16x50xf32>
    tpu.vector_store %arg12[%c0_59, %c0_60], %121 {strides = array<i32>} : memref<16x50xf32, #tpu.memory_space<vmem>>, vector<16x50xf32>,
    return
  }
}

</mosaic_0001>

<llo_original>
// kernel: tpu_custom_call.1
$region0: #{tpu_custom_call.1}
  #allocation0 [shape = 'u32[]', space=smem, size = 0x4, offset = 0x4, fixed_abs, tag = 'smem constant byte address 0x4 - core index']
  #allocation1 [shape = 'u32[72,128]{1,0:T(1,128)}', space=vmem, size = 0x9000, scoped, tag = 'internal scratch']
  %s0 = inlined_call_operand.vmem [shape: f32[16,50], index: 0, kind: input, shape index: {}]
  %s1 = inlined_call_operand.vmem [shape: f32[2,8,8], index: 1, kind: input, shape index: {}]
  %s2 = inlined_call_operand.vmem [shape: f32[50,2304], index: 2, kind: input, shape index: {}]
  %s3 = inlined_call_operand.vmem [shape: f32[1,2304], index: 3, kind: input, shape index: {}]
  %s4 = inlined_call_operand.vmem [shape: f32[12,64,50], index: 4, kind: input, shape index: {}]
  %s5 = inlined_call_operand.vmem [shape: f32[1,50], index: 5, kind: input, shape index: {}]
  %s6 = inlined_call_operand.vmem [shape: f32[1,50], index: 6, kind: input, shape index: {}]
  %s7 = inlined_call_operand.vmem [shape: f32[1,50], index: 7, kind: input, shape index: {}]
  %s8 = inlined_call_operand.vmem [shape: f32[50,200], index: 8, kind: input, shape index: {}]
  %s9 = inlined_call_operand.vmem [shape: f32[1,200], index: 9, kind: input, shape index: {}]
  %s10 = inlined_call_operand.vmem [shape: f32[200,50], index: 10, kind: input, shape index: {}]
  %s11 = inlined_call_operand.vmem [shape: f32[1,50], index: 11, kind: input, shape index: {}]
  %s12 = inlined_call_operand.hbm [shape: f32[16,50], index: 12, kind: output, shape index: {0}]
  %s13 = inlined_call_operand.vmem [shape: f32[2,12,8,8], index: 13, kind: output, shape index: {1}]
  %14 = xla_tuple %s12, %s13
  %s15 = sld [smem:[#allocation0]]
  $region66: #{tpu_custom_call.1} parent=0
    _
  %s17 = ssub.s32 1, %s15
  %s18 = scalar_select 0, %s17, %s15
  $region1: #{tpu_custom_call.1} parent=0
    #allocation2 [shape = 'u8[8192]{0}', space=vmem, size = 0x2000, scoped, tag = 'output window, operand 0, single buffered']
    #allocation3 [shape = 's32[1]{0}', space=sflag, size = 0x4, scoped, tag = 'scoped memory for tpu_custom_call.1']
    %19 = vsyncpa [#allocation3], 0
    // Predicated region
    $region2: #{tpu_custom_call.1} parent=1 // pred_check
      _
    $region3: #{tpu_custom_call.1} parent=1 // pred_check_branch
      %21 = sbr.rel (0) target = $region5
    $region4: #{tpu_custom_call.1} parent=1 // pred_region
      _
    $region5: #{tpu_custom_call.1} parent=1 // pred_fallthru
      _
    // Predicated region
    $region6: #{tpu_custom_call.1} parent=1 // pred_check
      _
    $region7: #{tpu_custom_call.1} parent=1 // pred_check_branch
      %23 = sbr.rel (0) target = $region9
    $region8: #{tpu_custom_call.1} parent=1 // pred_region
      _
    $region9: #{tpu_custom_call.1} parent=1 // pred_fallthru
      _
    // Predicated region
    $region10: #{tpu_custom_call.1} parent=1 // pred_check
      _
    $region11: #{tpu_custom_call.1} parent=1 // pred_check_branch
      %25 = sbr.rel (0) target = $region13
    $region12: #{tpu_custom_call.1} parent=1 // pred_region
      _
    $region13: #{tpu_custom_call.1} parent=1 // pred_fallthru
      _
    // Predicated region
    $region14: #{tpu_custom_call.1} parent=1 // pred_check
      _
    $region15: #{tpu_custom_call.1} parent=1 // pred_check_branch
      %27 = sbr.rel (0) target = $region17
    $region16: #{tpu_custom_call.1} parent=1 // pred_region
      _
    $region17: #{tpu_custom_call.1} parent=1 // pred_fallthru
      _
    // Predicated region
    $region18: #{tpu_custom_call.1} parent=1 // pred_check
      _
    $region19: #{tpu_custom_call.1} parent=1 // pred_check_branch
      %29 = sbr.rel (0) target = $region21
    $region20: #{tpu_custom_call.1} parent=1 // pred_region
      _
    $region21: #{tpu_custom_call.1} parent=1 // pred_fallthru
      _
    // Predicated region
    $region22: #{tpu_custom_call.1} parent=1 // pred_check
      _
    $region23: #{tpu_custom_call.1} parent=1 // pred_check_branch
      %31 = sbr.rel (0) target = $region25
    $region24: #{tpu_custom_call.1} parent=1 // pred_region
      _
    $region25: #{tpu_custom_call.1} parent=1 // pred_fallthru
      _
    // Predicated region
    $region26: #{tpu_custom_call.1} parent=1 // pred_check
      _
    $region27: #{tpu_custom_call.1} parent=1 // pred_check_branch
      %33 = sbr.rel (0) target = $region29
    $region28: #{tpu_custom_call.1} parent=1 // pred_region
      _
    $region29: #{tpu_custom_call.1} parent=1 // pred_fallthru
      _
    // Predicated region
    $region30: #{tpu_custom_call.1} parent=1 // pred_check
      _
    $region31: #{tpu_custom_call.1} parent=1 // pred_check_branch
      %35 = sbr.rel (0) target = $region33
    $region32: #{tpu_custom_call.1} parent=1 // pred_region
      _
    $region33: #{tpu_custom_call.1} parent=1 // pred_fallthru
      _
    // Predicated region
    $region34: #{tpu_custom_call.1} parent=1 // pred_check
      _
    $region35: #{tpu_custom_call.1} parent=1 // pred_check_branch
      %37 = sbr.rel (0) target = $region37
    $region36: #{tpu_custom_call.1} parent=1 // pred_region
      _
    $region37: #{tpu_custom_call.1} parent=1 // pred_fallthru
      _
    // Predicated region
    $region38: #{tpu_custom_call.1} parent=1 // pred_check
      _
    $region39: #{tpu_custom_call.1} parent=1 // pred_check_branch
      %39 = sbr.rel (0) target = $region41
    $region40: #{tpu_custom_call.1} parent=1 // pred_region
      _
    $region41: #{tpu_custom_call.1} parent=1 // pred_fallthru
      _
    // Predicated region
    $region42: #{tpu_custom_call.1} parent=1 // pred_check
      _
    $region43: #{tpu_custom_call.1} parent=1 // pred_check_branch
      %41 = sbr.rel (0) target = $region45
    $region44: #{tpu_custom_call.1} parent=1 // pred_region
      _
    $region45: #{tpu_custom_call.1} parent=1 // pred_fallthru
      _
    // Predicated region
    $region46: #{tpu_custom_call.1} parent=1 // pred_check
      _
    $region47: #{tpu_custom_call.1} parent=1 // pred_check_branch
      %43 = sbr.rel (0) target = $region49
    $region48: #{tpu_custom_call.1} parent=1 // pred_region
      _
    $region49: #{tpu_custom_call.1} parent=1 // pred_fallthru
      _
    %v44 = vld [vmem:[%s0] sm:$0xff]
    %v45 = vld [vmem:[%s0 + $0x8] sm:$0xff]
    %v46 = vld [vmem:[%s2] sm:$0xff]
    %v47 = vld [vmem:[%s2 + $0x8] sm:$0xff]
    %v48 = vld [vmem:[%s2 + $0x10] sm:$0xff]
    %v49 = vld [vmem:[%s2 + $0x18] sm:$0xff]
    %v50 = vld [vmem:[%s2 + $0x20] sm:$0xff]
    %v51 = vld [vmem:[%s2 + $0x28] sm:$0xff]
    %v52 = vld [vmem:[%s2 + $0x30] sm:$0xff]
    %v53 = vld [vmem:[%s2 + $0x38] sm:$0xff]
    %v54 = vld [vmem:[%s2 + $0x40] sm:$0xff]
    %v55 = vld [vmem:[%s2 + $0x48] sm:$0xff]
    %v56 = vld [vmem:[%s2 + $0x50] sm:$0xff]
    %v57 = vld [vmem:[%s2 + $0x58] sm:$0xff]
    %v58 = vld [vmem:[%s2 + $0x60] sm:$0xff]
    %v59 = vld [vmem:[%s2 + $0x68] sm:$0xff]
    %v60 = vld [vmem:[%s2 + $0x70] sm:$0xff]
    %v61 = vld [vmem:[%s2 + $0x78] sm:$0xff]
    %v62 = vld [vmem:[%s2 + $0x80] sm:$0xff]
    %v63 = vld [vmem:[%s2 + $0x88] sm:$0xff]
    %v64 = vld [vmem:[%s2 + $0x90] sm:$0xff]
    %v65 = vld [vmem:[%s2 + $0x98] sm:$0xff]
    %v66 = vld [vmem:[%s2 + $0xa0] sm:$0xff]
    %v67 = vld [vmem:[%s2 + $0xa8] sm:$0xff]
    %v68 = vld [vmem:[%s2 + $0xb0] sm:$0xff]
    %v69 = vld [vmem:[%s2 + $0xb8] sm:$0xff]
    %v70 = vld [vmem:[%s2 + $0xc0] sm:$0xff]
    %v71 = vld [vmem:[%s2 + $0xc8] sm:$0xff]
    %v72 = vld [vmem:[%s2 + $0xd0] sm:$0xff]
    %v73 = vld [vmem:[%s2 + $0xd8] sm:$0xff]
    %v74 = vld [vmem:[%s2 + $0xe0] sm:$0xff]
    %v75 = vld [vmem:[%s2 + $0xe8] sm:$0xff]
    %v76 = vld [vmem:[%s2 + $0xf0] sm:$0xff]
    %v77 = vld [vmem:[%s2 + $0xf8] sm:$0xff]
    %v78 = vld [vmem:[%s2 + $0x100] sm:$0xff]
    %v79 = vld [vmem:[%s2 + $0x108] sm:$0xff]
    %v80 = vld [vmem:[%s2 + $0x110] sm:$0xff]
    %v81 = vld [vmem:[%s2 + $0x118] sm:$0xff]
    %v82 = vld [vmem:[%s2 + $0x120] sm:$0xff]
    %v83 = vld [vmem:[%s2 + $0x128] sm:$0xff]
    %v84 = vld [vmem:[%s2 + $0x130] sm:$0xff]
    %v85 = vld [vmem:[%s2 + $0x138] sm:$0xff]
    %v86 = vld [vmem:[%s2 + $0x140] sm:$0xff]
    %v87 = vld [vmem:[%s2 + $0x148] sm:$0xff]
    %v88 = vld [vmem:[%s2 + $0x150] sm:$0xff]
    %v89 = vld [vmem:[%s2 + $0x158] sm:$0xff]
    %v90 = vld [vmem:[%s2 + $0x160] sm:$0xff]
    %v91 = vld [vmem:[%s2 + $0x168] sm:$0xff]
    %v92 = vld [vmem:[%s2 + $0x170] sm:$0xff]
    %v93 = vld [vmem:[%s2 + $0x178] sm:$0xff]
    %v94 = vld [vmem:[%s2 + $0x180] sm:$0xff]
    %v95 = vld [vmem:[%s2 + $0x188] sm:$0xff]
    %v96 = vld [vmem:[%s2 + $0x190] sm:$0xff]
    %v97 = vld [vmem:[%s2 + $0x198] sm:$0xff]
    %v98 = vld [vmem:[%s2 + $0x1a0] sm:$0xff]
    %v99 = vld [vmem:[%s2 + $0x1a8] sm:$0xff]
    %v100 = vld [vmem:[%s2 + $0x1b0] sm:$0xff]
    %v101 = vld [vmem:[%s2 + $0x1b8] sm:$0xff]
    %v102 = vld [vmem:[%s2 + $0x1c0] sm:$0xff]
    %v103 = vld [vmem:[%s2 + $0x1c8] sm:$0xff]
    %v104 = vld [vmem:[%s2 + $0x1d0] sm:$0xff]
    %v105 = vld [vmem:[%s2 + $0x1d8] sm:$0xff]
    %v106 = vld [vmem:[%s2 + $0x1e0] sm:$0xff]
    %v107 = vld [vmem:[%s2 + $0x1e8] sm:$0xff]
    %v108 = vld [vmem:[%s2 + $0x1f0] sm:$0xff]
    %v109 = vld [vmem:[%s2 + $0x1f8] sm:$0xff]
    %v110 = vld [vmem:[%s2 + $0x200] sm:$0xff]
    %v111 = vld [vmem:[%s2 + $0x208] sm:$0xff]
    %v112 = vld [vmem:[%s2 + $0x210] sm:$0xff]
    %v113 = vld [vmem:[%s2 + $0x218] sm:$0xff]
    %v114 = vld [vmem:[%s2 + $0x220] sm:$0xff]
    %v115 = vld [vmem:[%s2 + $0x228] sm:$0xff]
    %v116 = vld [vmem:[%s2 + $0x230] sm:$0xff]
    %v117 = vld [vmem:[%s2 + $0x238] sm:$0xff]
    %v118 = vld [vmem:[%s2 + $0x240] sm:$0xff]
    %v119 = vld [vmem:[%s2 + $0x248] sm:$0xff]
    %v120 = vld [vmem:[%s2 + $0x250] sm:$0xff]
    %v121 = vld [vmem:[%s2 + $0x258] sm:$0xff]
    %v122 = vld [vmem:[%s2 + $0x260] sm:$0xff]
    %v123 = vld [vmem:[%s2 + $0x268] sm:$0xff]
    %v124 = vld [vmem:[%s2 + $0x270] sm:$0xff]
    %v125 = vld [vmem:[%s2 + $0x278] sm:$0xff]
    %v126 = vld [vmem:[%s2 + $0x280] sm:$0xff]
    %v127 = vld [vmem:[%s2 + $0x288] sm:$0xff]
    %v128 = vld [vmem:[%s2 + $0x290] sm:$0xff]
    %v129 = vld [vmem:[%s2 + $0x298] sm:$0xff]
    %v130 = vld [vmem:[%s2 + $0x2a0] sm:$0xff]
    %v131 = vld [vmem:[%s2 + $0x2a8] sm:$0xff]
    %v132 = vld [vmem:[%s2 + $0x2b0] sm:$0xff]
    %v133 = vld [vmem:[%s2 + $0x2b8] sm:$0xff]
    %v134 = vld [vmem:[%s2 + $0x2c0] sm:$0xff]
    %v135 = vld [vmem:[%s2 + $0x2c8] sm:$0xff]
    %v136 = vld [vmem:[%s2 + $0x2d0] sm:$0xff]
    %v137 = vld [vmem:[%s2 + $0x2d8] sm:$0xff]
    %v138 = vld [vmem:[%s2 + $0x2e0] sm:$0xff]
    %v139 = vld [vmem:[%s2 + $0x2e8] sm:$0xff]
    %v140 = vld [vmem:[%s2 + $0x2f0] sm:$0xff]
    %v141 = vld [vmem:[%s2 + $0x2f8] sm:$0xff]
    %v142 = vld [vmem:[%s2 + $0x300] sm:$0xff]
    %v143 = vld [vmem:[%s2 + $0x308] sm:$0xff]
    %v144 = vld [vmem:[%s2 + $0x310] sm:$0xff]
    %v145 = vld [vmem:[%s2 + $0x318] sm:$0xff]
    %v146 = vld [vmem:[%s2 + $0x320] sm:$0xff]
    %v147 = vld [vmem:[%s2 + $0x328] sm:$0xff]
    %v148 = vld [vmem:[%s2 + $0x330] sm:$0xff]
    %v149 = vld [vmem:[%s2 + $0x338] sm:$0xff]
    %v150 = vld [vmem:[%s2 + $0x340] sm:$0xff]
    %v151 = vld [vmem:[%s2 + $0x348] sm:$0xff]
    %v152 = vld [vmem:[%s2 + $0x350] sm:$0xff]
    %v153 = vld [vmem:[%s2 + $0x358] sm:$0xff]
    %v154 = vld [vmem:[%s2 + $0x360] sm:$0x3]
    %v155 = vld [vmem:[%s2 + $0x368] sm:$0x3]
    %v156 = vld [vmem:[%s2 + $0x370] sm:$0x3]
    %v157 = vld [vmem:[%s2 + $0x378] sm:$0x3]
    %v158 = vld [vmem:[%s2 + $0x380] sm:$0x3]
    %v159 = vld [vmem:[%s2 + $0x388] sm:$0x3]
    %v160 = vld [vmem:[%s2 + $0x390] sm:$0x3]
    %v161 = vld [vmem:[%s2 + $0x398] sm:$0x3]
    %v162 = vld [vmem:[%s2 + $0x3a0] sm:$0x3]
    %v163 = vld [vmem:[%s2 + $0x3a8] sm:$0x3]
    %v164 = vld [vmem:[%s2 + $0x3b0] sm:$0x3]
    %v165 = vld [vmem:[%s2 + $0x3b8] sm:$0x3]
    %v166 = vld [vmem:[%s2 + $0x3c0] sm:$0x3]
    %v167 = vld [vmem:[%s2 + $0x3c8] sm:$0x3]
    %v168 = vld [vmem:[%s2 + $0x3d0] sm:$0x3]
    %v169 = vld [vmem:[%s2 + $0x3d8] sm:$0x3]
    %v170 = vld [vmem:[%s2 + $0x3e0] sm:$0x3]
    %v171 = vld [vmem:[%s2 + $0x3e8] sm:$0x3]
    %v172 = vld [vmem:[%s3] sm:$0xff]
    %v173 = vld [vmem:[%s3 + $0x8] sm:$0xff]
    %v174 = vld [vmem:[%s3 + $0x10] sm:$0x3]
    %v178 = vperm.slane %v172, 0
    %v179 = vperm.slane %v172, 1
    %v180 = vperm.slane %v172, 2
    %v181 = vperm.slane %v172, 3
    %v182 = vperm.slane %v172, 4
    %v183 = vperm.slane %v172, 5
    %v184 = vperm.slane %v172, 6
    %v185 = vperm.slane %v172, 7
    %v186 = vperm.slane %v173, 0
    %v187 = vperm.slane %v173, 1
    %v188 = vperm.slane %v173, 2
    %v189 = vperm.slane %v173, 3
    %v190 = vperm.slane %v173, 4
    %v191 = vperm.slane %v173, 5
    %v192 = vperm.slane %v173, 6
    %v193 = vperm.slane %v173, 7
    %v194 = vperm.slane %v174, 0
    %v195 = vperm.slane %v174, 1
    %vm214 = vcmask 408576
    %v216 = vsel %vm214, %v44, 0
    %v219 = vsel %vm214, %v45, 0
    %vm221 = vcmask 1041408
    %v223 = vsel %vm221, %v154, 0
    %v226 = vsel %vm221, %v155, 0
    %v229 = vsel %vm221, %v156, 0
    %v232 = vsel %vm221, %v157, 0
    %v235 = vsel %vm221, %v158, 0
    %v238 = vsel %vm221, %v159, 0
    %v241 = vsel %vm221, %v160, 0
    %v244 = vsel %vm221, %v161, 0
    %v247 = vsel %vm221, %v162, 0
    %v250 = vsel %vm221, %v163, 0
    %v253 = vsel %vm221, %v164, 0
    %v256 = vsel %vm221, %v165, 0
    %v259 = vsel %vm221, %v166, 0
    %v262 = vsel %vm221, %v167, 0
    %v265 = vsel %vm221, %v168, 0
    %v268 = vsel %vm221, %v169, 0
    %v271 = vsel %vm221, %v170, 0
    %v274 = vsel %vm221, %v171, 0
    %276 = vmatpush.msra.mxu0 0.0
    %277 = vmatpush.msra.mxu0 0.0
    %278 = vmatpush.msra.mxu0 0.0
    %279 = vmatpush.msra.mxu0 0.0
    %280 = vmatpush.msra.mxu0 0.0
    %281 = vmatpush.msra.mxu0 0.0
    %282 = vmatpush.msra.mxu0 0.0
    %283 = vmatpush.msra.mxu0 0.0
    %284 = vmatpush.msra.mxu0 0.0
    %285 = vmatpush.msra.mxu0 %v223
    %286 = vmatpush.msra.mxu0 %v136
    %287 = vmatpush.msra.mxu0 %v118
    %288 = vmatpush.msra.mxu0 %v100
    %289 = vmatpush.msra.mxu0 %v82
    %290 = vmatpush.msra.mxu0 %v64
    %291 = vmatpush.msra.mxu0 %v46
    %292 = vmatmul.f32.gmra.mxu0 %v216
    %v293 = vpop.f32.mrf.mxu0
    %v294 = vadd.f32 %v178, %v293
    %295 = vmatmul.f32.gmra.mxu0 %v219
    %v296 = vpop.f32.mrf.mxu0
    %v297 = vadd.f32 %v178, %v296
    %298 = vdwg.mxu0
    %299 = vmatpush.msra.mxu0 0.0
    %300 = vmatpush.msra.mxu0 0.0
    %301 = vmatpush.msra.mxu0 0.0
    %302 = vmatpush.msra.mxu0 0.0
    %303 = vmatpush.msra.mxu0 0.0
    %304 = vmatpush.msra.mxu0 0.0
    %305 = vmatpush.msra.mxu0 0.0
    %306 = vmatpush.msra.mxu0 0.0
    %307 = vmatpush.msra.mxu0 0.0
    %308 = vmatpush.msra.mxu0 %v226
    %309 = vmatpush.msra.mxu0 %v137
    %310 = vmatpush.msra.mxu0 %v119
    %311 = vmatpush.msra.mxu0 %v101
    %312 = vmatpush.msra.mxu0 %v83
    %313 = vmatpush.msra.mxu0 %v65
    %314 = vmatpush.msra.mxu0 %v47
    %315 = vmatmul.f32.gmra.mxu0 %v216
    %v316 = vpop.f32.mrf.mxu0
    %v317 = vadd.f32 %v179, %v316
    %318 = vmatmul.f32.gmra.mxu0 %v219
    %v319 = vpop.f32.mrf.mxu0
    %v320 = vadd.f32 %v179, %v319
    %321 = vdwg.mxu0
    %322 = vmatpush.msra.mxu0 0.0
    %323 = vmatpush.msra.mxu0 0.0
    %324 = vmatpush.msra.mxu0 0.0
    %325 = vmatpush.msra.mxu0 0.0
    %326 = vmatpush.msra.mxu0 0.0
    %327 = vmatpush.msra.mxu0 0.0
    %328 = vmatpush.msra.mxu0 0.0
    %329 = vmatpush.msra.mxu0 0.0
    %330 = vmatpush.msra.mxu0 0.0
    %331 = vmatpush.msra.mxu0 %v229
    %332 = vmatpush.msra.mxu0 %v138
    %333 = vmatpush.msra.mxu0 %v120
    %334 = vmatpush.msra.mxu0 %v102
    %335 = vmatpush.msra.mxu0 %v84
    %336 = vmatpush.msra.mxu0 %v66
    %337 = vmatpush.msra.mxu0 %v48
    %338 = vmatmul.f32.gmra.mxu0 %v216
    %v339 = vpop.f32.mrf.mxu0
    %v340 = vadd.f32 %v180, %v339
    %341 = vmatmul.f32.gmra.mxu0 %v219
    %v342 = vpop.f32.mrf.mxu0
    %v343 = vadd.f32 %v180, %v342
    %344 = vdwg.mxu0
    %345 = vmatpush.msra.mxu0 0.0
    %346 = vmatpush.msra.mxu0 0.0
    %347 = vmatpush.msra.mxu0 0.0
    %348 = vmatpush.msra.mxu0 0.0
    %349 = vmatpush.msra.mxu0 0.0
    %350 = vmatpush.msra.mxu0 0.0
    %351 = vmatpush.msra.mxu0 0.0
    %352 = vmatpush.msra.mxu0 0.0
    %353 = vmatpush.msra.mxu0 0.0
    %354 = vmatpush.msra.mxu0 %v232
    %355 = vmatpush.msra.mxu0 %v139
    %356 = vmatpush.msra.mxu0 %v121
    %357 = vmatpush.msra.mxu0 %v103
    %358 = vmatpush.msra.mxu0 %v85
    %359 = vmatpush.msra.mxu0 %v67
    %360 = vmatpush.msra.mxu0 %v49
    %361 = vmatmul.f32.gmra.mxu0 %v216
    %v362 = vpop.f32.mrf.mxu0
    %v363 = vadd.f32 %v181, %v362
    %364 = vmatmul.f32.gmra.mxu0 %v219
    %v365 = vpop.f32.mrf.mxu0
    %v366 = vadd.f32 %v181, %v365
    %367 = vdwg.mxu0
    %368 = vmatpush.msra.mxu0 0.0
    %369 = vmatpush.msra.mxu0 0.0
    %370 = vmatpush.msra.mxu0 0.0
    %371 = vmatpush.msra.mxu0 0.0
    %372 = vmatpush.msra.mxu0 0.0
    %373 = vmatpush.msra.mxu0 0.0
    %374 = vmatpush.msra.mxu0 0.0
    %375 = vmatpush.msra.mxu0 0.0
    %376 = vmatpush.msra.mxu0 0.0
    %377 = vmatpush.msra.mxu0 %v235
    %378 = vmatpush.msra.mxu0 %v140
    %379 = vmatpush.msra.mxu0 %v122
    %380 = vmatpush.msra.mxu0 %v104
    %381 = vmatpush.msra.mxu0 %v86
    %382 = vmatpush.msra.mxu0 %v68
    %383 = vmatpush.msra.mxu0 %v50
    %384 = vmatmul.f32.gmra.mxu0 %v216
    %v385 = vpop.f32.mrf.mxu0
    %v386 = vadd.f32 %v182, %v385
    %387 = vmatmul.f32.gmra.mxu0 %v219
    %v388 = vpop.f32.mrf.mxu0
    %v389 = vadd.f32 %v182, %v388
    %390 = vdwg.mxu0
    %391 = vmatpush.msra.mxu0 0.0
    %392 = vmatpush.msra.mxu0 0.0
    %393 = vmatpush.msra.mxu0 0.0
    %394 = vmatpush.msra.mxu0 0.0
    %395 = vmatpush.msra.mxu0 0.0
    %396 = vmatpush.msra.mxu0 0.0
    %397 = vmatpush.msra.mxu0 0.0
    %398 = vmatpush.msra.mxu0 0.0
    %399 = vmatpush.msra.mxu0 0.0
    %400 = vmatpush.msra.mxu0 %v238
    %401 = vmatpush.msra.mxu0 %v141
    %402 = vmatpush.msra.mxu0 %v123
    %403 = vmatpush.msra.mxu0 %v105
    %404 = vmatpush.msra.mxu0 %v87
    %405 = vmatpush.msra.mxu0 %v69
    %406 = vmatpush.msra.mxu0 %v51
    %407 = vmatmul.f32.gmra.mxu0 %v216
    %v408 = vpop.f32.mrf.mxu0
    %v409 = vadd.f32 %v183, %v408
    %410 = vmatmul.f32.gmra.mxu0 %v219
    %v411 = vpop.f32.mrf.mxu0
    %v412 = vadd.f32 %v183, %v411
    %413 = vdwg.mxu0
    %414 = vmatpush.msra.mxu0 0.0
    %415 = vmatpush.msra.mxu0 0.0
    %416 = vmatpush.msra.mxu0 0.0
    %417 = vmatpush.msra.mxu0 0.0
    %418 = vmatpush.msra.mxu0 0.0
    %419 = vmatpush.msra.mxu0 0.0
    %420 = vmatpush.msra.mxu0 0.0
    %421 = vmatpush.msra.mxu0 0.0
    %422 = vmatpush.msra.mxu0 0.0
    %423 = vmatpush.msra.mxu0 %v241
    %424 = vmatpush.msra.mxu0 %v142
    %425 = vmatpush.msra.mxu0 %v124
    %426 = vmatpush.msra.mxu0 %v106
    %427 = vmatpush.msra.mxu0 %v88
    %428 = vmatpush.msra.mxu0 %v70
    %429 = vmatpush.msra.mxu0 %v52
    %430 = vmatmul.f32.gmra.mxu0 %v216
    %v431 = vpop.f32.mrf.mxu0
    %v432 = vadd.f32 %v184, %v431
    %433 = vmatmul.f32.gmra.mxu0 %v219
    %v434 = vpop.f32.mrf.mxu0
    %v435 = vadd.f32 %v184, %v434
    %436 = vdwg.mxu0
    %437 = vmatpush.msra.mxu0 0.0
    %438 = vmatpush.msra.mxu0 0.0
    %439 = vmatpush.msra.mxu0 0.0
    %440 = vmatpush.msra.mxu0 0.0
    %441 = vmatpush.msra.mxu0 0.0
    %442 = vmatpush.msra.mxu0 0.0
    %443 = vmatpush.msra.mxu0 0.0
    %444 = vmatpush.msra.mxu0 0.0
    %445 = vmatpush.msra.mxu0 0.0
    %446 = vmatpush.msra.mxu0 %v244
    %447 = vmatpush.msra.mxu0 %v143
    %448 = vmatpush.msra.mxu0 %v125
    %449 = vmatpush.msra.mxu0 %v107
    %450 = vmatpush.msra.mxu0 %v89
    %451 = vmatpush.msra.mxu0 %v71
    %452 = vmatpush.msra.mxu0 %v53
    %453 = vmatmul.f32.gmra.mxu0 %v216
    %v454 = vpop.f32.mrf.mxu0
    %v455 = vadd.f32 %v185, %v454
    %456 = vmatmul.f32.gmra.mxu0 %v219
    %v457 = vpop.f32.mrf.mxu0
    %v458 = vadd.f32 %v185, %v457
    %459 = vdwg.mxu0
    %460 = vmatpush.msra.mxu0 0.0
    %461 = vmatpush.msra.mxu0 0.0
    %462 = vmatpush.msra.mxu0 0.0
    %463 = vmatpush.msra.mxu0 0.0
    %464 = vmatpush.msra.mxu0 0.0
    %465 = vmatpush.msra.mxu0 0.0
    %466 = vmatpush.msra.mxu0 0.0
    %467 = vmatpush.msra.mxu0 0.0
    %468 = vmatpush.msra.mxu0 0.0
    %469 = vmatpush.msra.mxu0 %v247
    %470 = vmatpush.msra.mxu0 %v144
    %471 = vmatpush.msra.mxu0 %v126
    %472 = vmatpush.msra.mxu0 %v108
    %473 = vmatpush.msra.mxu0 %v90
    %474 = vmatpush.msra.mxu0 %v72
    %475 = vmatpush.msra.mxu0 %v54
    %476 = vmatmul.f32.gmra.mxu0 %v216
    %v477 = vpop.f32.mrf.mxu0
    %v478 = vadd.f32 %v186, %v477
    %479 = vmatmul.f32.gmra.mxu0 %v219
    %v480 = vpop.f32.mrf.mxu0
    %v481 = vadd.f32 %v186, %v480
    %482 = vdwg.mxu0
    %483 = vmatpush.msra.mxu0 0.0
    %484 = vmatpush.msra.mxu0 0.0
    %485 = vmatpush.msra.mxu0 0.0
    %486 = vmatpush.msra.mxu0 0.0
    %487 = vmatpush.msra.mxu0 0.0
    %488 = vmatpush.msra.mxu0 0.0
    %489 = vmatpush.msra.mxu0 0.0
    %490 = vmatpush.msra.mxu0 0.0
    %491 = vmatpush.msra.mxu0 0.0
    %492 = vmatpush.msra.mxu0 %v250
    %493 = vmatpush.msra.mxu0 %v145
    %494 = vmatpush.msra.mxu0 %v127
    %495 = vmatpush.msra.mxu0 %v109
    %496 = vmatpush.msra.mxu0 %v91
    %497 = vmatpush.msra.mxu0 %v73
    %498 = vmatpush.msra.mxu0 %v55
    %499 = vmatmul.f32.gmra.mxu0 %v216
    %v500 = vpop.f32.mrf.mxu0
    %v501 = vadd.f32 %v187, %v500
    %502 = vmatmul.f32.gmra.mxu0 %v219
    %v503 = vpop.f32.mrf.mxu0
    %v504 = vadd.f32 %v187, %v503
    %505 = vdwg.mxu0
    %506 = vmatpush.msra.mxu0 0.0
    %507 = vmatpush.msra.mxu0 0.0
    %508 = vmatpush.msra.mxu0 0.0
    %509 = vmatpush.msra.mxu0 0.0
    %510 = vmatpush.msra.mxu0 0.0
    %511 = vmatpush.msra.mxu0 0.0
    %512 = vmatpush.msra.mxu0 0.0
    %513 = vmatpush.msra.mxu0 0.0
    %514 = vmatpush.msra.mxu0 0.0
    %515 = vmatpush.msra.mxu0 %v253
    %516 = vmatpush.msra.mxu0 %v146
    %517 = vmatpush.msra.mxu0 %v128
    %518 = vmatpush.msra.mxu0 %v110
    %519 = vmatpush.msra.mxu0 %v92
    %520 = vmatpush.msra.mxu0 %v74
    %521 = vmatpush.msra.mxu0 %v56
    %522 = vmatmul.f32.gmra.mxu0 %v216
    %v523 = vpop.f32.mrf.mxu0
    %v524 = vadd.f32 %v188, %v523
    %525 = vmatmul.f32.gmra.mxu0 %v219
    %v526 = vpop.f32.mrf.mxu0
    %v527 = vadd.f32 %v188, %v526
    %528 = vdwg.mxu0
    %529 = vmatpush.msra.mxu0 0.0
    %530 = vmatpush.msra.mxu0 0.0
    %531 = vmatpush.msra.mxu0 0.0
    %532 = vmatpush.msra.mxu0 0.0
    %533 = vmatpush.msra.mxu0 0.0
    %534 = vmatpush.msra.mxu0 0.0
    %535 = vmatpush.msra.mxu0 0.0
    %536 = vmatpush.msra.mxu0 0.0
    %537 = vmatpush.msra.mxu0 0.0
    %538 = vmatpush.msra.mxu0 %v256
    %539 = vmatpush.msra.mxu0 %v147
    %540 = vmatpush.msra.mxu0 %v129
    %541 = vmatpush.msra.mxu0 %v111
    %542 = vmatpush.msra.mxu0 %v93
    %543 = vmatpush.msra.mxu0 %v75
    %544 = vmatpush.msra.mxu0 %v57
    %545 = vmatmul.f32.gmra.mxu0 %v216
    %v546 = vpop.f32.mrf.mxu0
    %v547 = vadd.f32 %v189, %v546
    %548 = vmatmul.f32.gmra.mxu0 %v219
    %v549 = vpop.f32.mrf.mxu0
    %v550 = vadd.f32 %v189, %v549
    %551 = vdwg.mxu0
    %552 = vmatpush.msra.mxu0 0.0
    %553 = vmatpush.msra.mxu0 0.0
    %554 = vmatpush.msra.mxu0 0.0
    %555 = vmatpush.msra.mxu0 0.0
    %556 = vmatpush.msra.mxu0 0.0
    %557 = vmatpush.msra.mxu0 0.0
    %558 = vmatpush.msra.mxu0 0.0
    %559 = vmatpush.msra.mxu0 0.0
    %560 = vmatpush.msra.mxu0 0.0
    %561 = vmatpush.msra.mxu0 %v259
    %562 = vmatpush.msra.mxu0 %v148
    %563 = vmatpush.msra.mxu0 %v130
    %564 = vmatpush.msra.mxu0 %v112
    %565 = vmatpush.msra.mxu0 %v94
    %566 = vmatpush.msra.mxu0 %v76
    %567 = vmatpush.msra.mxu0 %v58
    %568 = vmatmul.f32.gmra.mxu0 %v216
    %v569 = vpop.f32.mrf.mxu0
    %v570 = vadd.f32 %v190, %v569
    %571 = vmatmul.f32.gmra.mxu0 %v219
    %v572 = vpop.f32.mrf.mxu0
    %v573 = vadd.f32 %v190, %v572
    %574 = vdwg.mxu0
    %575 = vmatpush.msra.mxu0 0.0
    %576 = vmatpush.msra.mxu0 0.0
    %577 = vmatpush.msra.mxu0 0.0
    %578 = vmatpush.msra.mxu0 0.0
    %579 = vmatpush.msra.mxu0 0.0
    %580 = vmatpush.msra.mxu0 0.0
    %581 = vmatpush.msra.mxu0 0.0
    %582 = vmatpush.msra.mxu0 0.0
    %583 = vmatpush.msra.mxu0 0.0
    %584 = vmatpush.msra.mxu0 %v262
    %585 = vmatpush.msra.mxu0 %v149
    %586 = vmatpush.msra.mxu0 %v131
    %587 = vmatpush.msra.mxu0 %v113
    %588 = vmatpush.msra.mxu0 %v95
    %589 = vmatpush.msra.mxu0 %v77
    %590 = vmatpush.msra.mxu0 %v59
    %591 = vmatmul.f32.gmra.mxu0 %v216
    %v592 = vpop.f32.mrf.mxu0
    %v593 = vadd.f32 %v191, %v592
    %594 = vmatmul.f32.gmra.mxu0 %v219
    %v595 = vpop.f32.mrf.mxu0
    %v596 = vadd.f32 %v191, %v595
    %597 = vdwg.mxu0
    %598 = vmatpush.msra.mxu0 0.0
    %599 = vmatpush.msra.mxu0 0.0
    %600 = vmatpush.msra.mxu0 0.0
    %601 = vmatpush.msra.mxu0 0.0
    %602 = vmatpush.msra.mxu0 0.0
    %603 = vmatpush.msra.mxu0 0.0
    %604 = vmatpush.msra.mxu0 0.0
    %605 = vmatpush.msra.mxu0 0.0
    %606 = vmatpush.msra.mxu0 0.0
    %607 = vmatpush.msra.mxu0 %v265
    %608 = vmatpush.msra.mxu0 %v150
    %609 = vmatpush.msra.mxu0 %v132
    %610 = vmatpush.msra.mxu0 %v114
    %611 = vmatpush.msra.mxu0 %v96
    %612 = vmatpush.msra.mxu0 %v78
    %613 = vmatpush.msra.mxu0 %v60
    %614 = vmatmul.f32.gmra.mxu0 %v216
    %v615 = vpop.f32.mrf.mxu0
    %v616 = vadd.f32 %v192, %v615
    %617 = vmatmul.f32.gmra.mxu0 %v219
    %v618 = vpop.f32.mrf.mxu0
    %v619 = vadd.f32 %v192, %v618
    %620 = vdwg.mxu0
    %621 = vmatpush.msra.mxu0 0.0
    %622 = vmatpush.msra.mxu0 0.0
    %623 = vmatpush.msra.mxu0 0.0
    %624 = vmatpush.msra.mxu0 0.0
    %625 = vmatpush.msra.mxu0 0.0
    %626 = vmatpush.msra.mxu0 0.0
    %627 = vmatpush.msra.mxu0 0.0
    %628 = vmatpush.msra.mxu0 0.0
    %629 = vmatpush.msra.mxu0 0.0
    %630 = vmatpush.msra.mxu0 %v268
    %631 = vmatpush.msra.mxu0 %v151
    %632 = vmatpush.msra.mxu0 %v133
    %633 = vmatpush.msra.mxu0 %v115
    %634 = vmatpush.msra.mxu0 %v97
    %635 = vmatpush.msra.mxu0 %v79
    %636 = vmatpush.msra.mxu0 %v61
    %637 = vmatmul.f32.gmra.mxu0 %v216
    %v638 = vpop.f32.mrf.mxu0
    %v639 = vadd.f32 %v193, %v638
    %640 = vmatmul.f32.gmra.mxu0 %v219
    %v641 = vpop.f32.mrf.mxu0
    %v642 = vadd.f32 %v193, %v641
    %643 = vdwg.mxu0
    %644 = vmatpush.msra.mxu0 0.0
    %645 = vmatpush.msra.mxu0 0.0
    %646 = vmatpush.msra.mxu0 0.0
    %647 = vmatpush.msra.mxu0 0.0
    %648 = vmatpush.msra.mxu0 0.0
    %649 = vmatpush.msra.mxu0 0.0
    %650 = vmatpush.msra.mxu0 0.0
    %651 = vmatpush.msra.mxu0 0.0
    %652 = vmatpush.msra.mxu0 0.0
    %653 = vmatpush.msra.mxu0 %v271
    %654 = vmatpush.msra.mxu0 %v152
    %655 = vmatpush.msra.mxu0 %v134
    %656 = vmatpush.msra.mxu0 %v116
    %657 = vmatpush.msra.mxu0 %v98
    %658 = vmatpush.msra.mxu0 %v80
    %659 = vmatpush.msra.mxu0 %v62
    %660 = vmatmul.f32.gmra.mxu0 %v216
    %v661 = vpop.f32.mrf.mxu0
    %v662 = vadd.f32 %v194, %v661
    %663 = vmatmul.f32.gmra.mxu0 %v219
    %v664 = vpop.f32.mrf.mxu0
    %v665 = vadd.f32 %v194, %v664
    %666 = vdwg.mxu0
    %667 = vmatpush.msra.mxu0 0.0
    %668 = vmatpush.msra.mxu0 0.0
    %669 = vmatpush.msra.mxu0 0.0
    %670 = vmatpush.msra.mxu0 0.0
    %671 = vmatpush.msra.mxu0 0.0
    %672 = vmatpush.msra.mxu0 0.0
    %673 = vmatpush.msra.mxu0 0.0
    %674 = vmatpush.msra.mxu0 0.0
    %675 = vmatpush.msra.mxu0 0.0
    %676 = vmatpush.msra.mxu0 %v274
    %677 = vmatpush.msra.mxu0 %v153
    %678 = vmatpush.msra.mxu0 %v135
    %679 = vmatpush.msra.mxu0 %v117
    %680 = vmatpush.msra.mxu0 %v99
    %681 = vmatpush.msra.mxu0 %v81
    %682 = vmatpush.msra.mxu0 %v63
    %683 = vmatmul.f32.gmra.mxu0 %v216
    %v684 = vpop.f32.mrf.mxu0
    %v685 = vadd.f32 %v195, %v684
    %686 = vmatmul.f32.gmra.mxu0 %v219
    %v687 = vpop.f32.mrf.mxu0
    %v688 = vadd.f32 %v195, %v687
    %689 = vdwg.mxu0
    %v690 = vld [vmem:[%s4] sm:$0xff]
    %v691 = vld [vmem:[%s4 + $0x8] sm:$0xff]
    %v692 = vld [vmem:[%s4 + $0x10] sm:$0xff]
    %v693 = vld [vmem:[%s4 + $0x18] sm:$0xff]
    %v694 = vld [vmem:[%s4 + $0x20] sm:$0xff]
    %v695 = vld [vmem:[%s4 + $0x28] sm:$0xff]
    %v696 = vld [vmem:[%s4 + $0x30] sm:$0xff]
    %v697 = vld [vmem:[%s4 + $0x38] sm:$0xff]
    %v698 = vld [vmem:[%s4 + $0x40] sm:$0xff]
    %v699 = vld [vmem:[%s4 + $0x48] sm:$0xff]
    %v700 = vld [vmem:[%s4 + $0x50] sm:$0xff]
    %v701 = vld [vmem:[%s4 + $0x58] sm:$0xff]
    %v702 = vld [vmem:[%s4 + $0x60] sm:$0xff]
    %v703 = vld [vmem:[%s4 + $0x68] sm:$0xff]
    %v704 = vld [vmem:[%s4 + $0x70] sm:$0xff]
    %v705 = vld [vmem:[%s4 + $0x78] sm:$0xff]
    %v706 = vld [vmem:[%s4 + $0x80] sm:$0xff]
    %v707 = vld [vmem:[%s4 + $0x88] sm:$0xff]
    %v708 = vld [vmem:[%s4 + $0x90] sm:$0xff]
    %v709 = vld [vmem:[%s4 + $0x98] sm:$0xff]
    %v710 = vld [vmem:[%s4 + $0xa0] sm:$0xff]
    %v711 = vld [vmem:[%s4 + $0xa8] sm:$0xff]
    %v712 = vld [vmem:[%s4 + $0xb0] sm:$0xff]
    %v713 = vld [vmem:[%s4 + $0xb8] sm:$0xff]
    %v714 = vld [vmem:[%s4 + $0xc0] sm:$0xff]
    %v715 = vld [vmem:[%s4 + $0xc8] sm:$0xff]
    %v716 = vld [vmem:[%s4 + $0xd0] sm:$0xff]
    %v717 = vld [vmem:[%s4 + $0xd8] sm:$0xff]
    %v718 = vld [vmem:[%s4 + $0xe0] sm:$0xff]
    %v719 = vld [vmem:[%s4 + $0xe8] sm:$0xff]
    %v720 = vld [vmem:[%s4 + $0xf0] sm:$0xff]
    %v721 = vld [vmem:[%s4 + $0xf8] sm:$0xff]
    %v722 = vld [vmem:[%s4 + $0x100] sm:$0xff]
    %v723 = vld [vmem:[%s4 + $0x108] sm:$0xff]
    %v724 = vld [vmem:[%s4 + $0x110] sm:$0xff]
    %v725 = vld [vmem:[%s4 + $0x118] sm:$0xff]
    %v726 = vld [vmem:[%s4 + $0x120] sm:$0xff]
    %v727 = vld [vmem:[%s4 + $0x128] sm:$0xff]
    %v728 = vld [vmem:[%s4 + $0x130] sm:$0xff]
    %v729 = vld [vmem:[%s4 + $0x138] sm:$0xff]
    %v730 = vld [vmem:[%s4 + $0x140] sm:$0xff]
    %v731 = vld [vmem:[%s4 + $0x148] sm:$0xff]
    %v732 = vld [vmem:[%s4 + $0x150] sm:$0xff]
    %v733 = vld [vmem:[%s4 + $0x158] sm:$0xff]
    %v734 = vld [vmem:[%s4 + $0x160] sm:$0xff]
    %v735 = vld [vmem:[%s4 + $0x168] sm:$0xff]
    %v736 = vld [vmem:[%s4 + $0x170] sm:$0xff]
    %v737 = vld [vmem:[%s4 + $0x178] sm:$0xff]
    %v738 = vld [vmem:[%s4 + $0x180] sm:$0xff]
    %v739 = vld [vmem:[%s4 + $0x188] sm:$0xff]
    %v740 = vld [vmem:[%s4 + $0x190] sm:$0xff]
    %v741 = vld [vmem:[%s4 + $0x198] sm:$0xff]
    %v742 = vld [vmem:[%s4 + $0x1a0] sm:$0xff]
    %v743 = vld [vmem:[%s4 + $0x1a8] sm:$0xff]
    %v744 = vld [vmem:[%s4 + $0x1b0] sm:$0xff]
    %v745 = vld [vmem:[%s4 + $0x1b8] sm:$0xff]
    %v746 = vld [vmem:[%s4 + $0x1c0] sm:$0xff]
    %v747 = vld [vmem:[%s4 + $0x1c8] sm:$0xff]
    %v748 = vld [vmem:[%s4 + $0x1d0] sm:$0xff]
    %v749 = vld [vmem:[%s4 + $0x1d8] sm:$0xff]
    %v750 = vld [vmem:[%s4 + $0x1e0] sm:$0xff]
    %v751 = vld [vmem:[%s4 + $0x1e8] sm:$0xff]
    %v752 = vld [vmem:[%s4 + $0x1f0] sm:$0xff]
    %v753 = vld [vmem:[%s4 + $0x1f8] sm:$0xff]
    %v754 = vld [vmem:[%s4 + $0x200] sm:$0xff]
    %v755 = vld [vmem:[%s4 + $0x208] sm:$0xff]
    %v756 = vld [vmem:[%s4 + $0x210] sm:$0xff]
    %v757 = vld [vmem:[%s4 + $0x218] sm:$0xff]
    %v758 = vld [vmem:[%s4 + $0x220] sm:$0xff]
    %v759 = vld [vmem:[%s4 + $0x228] sm:$0xff]
    %v760 = vld [vmem:[%s4 + $0x230] sm:$0xff]
    %v761 = vld [vmem:[%s4 + $0x238] sm:$0xff]
    %v762 = vld [vmem:[%s4 + $0x240] sm:$0xff]
    %v763 = vld [vmem:[%s4 + $0x248] sm:$0xff]
    %v764 = vld [vmem:[%s4 + $0x250] sm:$0xff]
    %v765 = vld [vmem:[%s4 + $0x258] sm:$0xff]
    %v766 = vld [vmem:[%s4 + $0x260] sm:$0xff]
    %v767 = vld [vmem:[%s4 + $0x268] sm:$0xff]
    %v768 = vld [vmem:[%s4 + $0x270] sm:$0xff]
    %v769 = vld [vmem:[%s4 + $0x278] sm:$0xff]
    %v770 = vld [vmem:[%s4 + $0x280] sm:$0xff]
    %v771 = vld [vmem:[%s4 + $0x288] sm:$0xff]
    %v772 = vld [vmem:[%s4 + $0x290] sm:$0xff]
    %v773 = vld [vmem:[%s4 + $0x298] sm:$0xff]
    %v774 = vld [vmem:[%s4 + $0x2a0] sm:$0xff]
    %v775 = vld [vmem:[%s4 + $0x2a8] sm:$0xff]
    %v776 = vld [vmem:[%s4 + $0x2b0] sm:$0xff]
    %v777 = vld [vmem:[%s4 + $0x2b8] sm:$0xff]
    %v778 = vld [vmem:[%s4 + $0x2c0] sm:$0xff]
    %v779 = vld [vmem:[%s4 + $0x2c8] sm:$0xff]
    %v780 = vld [vmem:[%s4 + $0x2d0] sm:$0xff]
    %v781 = vld [vmem:[%s4 + $0x2d8] sm:$0xff]
    %v782 = vld [vmem:[%s4 + $0x2e0] sm:$0xff]
    %v783 = vld [vmem:[%s4 + $0x2e8] sm:$0xff]
    %v784 = vld [vmem:[%s4 + $0x2f0] sm:$0xff]
    %v785 = vld [vmem:[%s4 + $0x2f8] sm:$0xff]
    %787 = vrot.lane.b32.xlu0 %v294, 64
    %v788 = vpop.permute.xlu0 %787
    %791 = vrot.lane.b32.xlu0 %v317, 64
    %v792 = vpop.permute.xlu0 %791
    %795 = vrot.lane.b32.xlu0 %v340, 64
    %v796 = vpop.permute.xlu0 %795
    %799 = vrot.lane.b32.xlu0 %v363, 64
    %v800 = vpop.permute.xlu0 %799
    %803 = vrot.lane.b32.xlu0 %v386, 64
    %v804 = vpop.permute.xlu0 %803
    %807 = vrot.lane.b32.xlu0 %v409, 64
    %v808 = vpop.permute.xlu0 %807
    %v810 = vrot.slane %v317, 4
    %vm811 = vcmask 1047556
    %v812 = vsel %vm811, %v810, %v294
    %v813 = vrot.slane %v294, 4
    %v814 = vsel %vm811, %v317, %v813
    %v816 = vunpack.c.l.s4 1983009808
    %v817 = vunpack.c.0.s8 %v816
    %v818 = vperm.slane %v812, %v817
    %v820 = vunpack.c.l.s4 1983009808
    %v821 = vunpack.c.0.s8 %v820
    %v822 = vperm.slane %v814, %v821
    %v823 = vrot.slane %v792, 4
    %v824 = vsel %vm811, %v823, %v788
    %v825 = vrot.slane %v788, 4
    %v826 = vsel %vm811, %v792, %v825
    %v828 = vunpack.c.l.s4 1983009808
    %v829 = vunpack.c.0.s8 %v828
    %v830 = vperm.slane %v824, %v829
    %v832 = vunpack.c.l.s4 1983009808
    %v833 = vunpack.c.0.s8 %v832
    %v834 = vperm.slane %v826, %v833
    %v835 = vrot.slane %v363, 4
    %v836 = vsel %vm811, %v835, %v340
    %v837 = vrot.slane %v340, 4
    %v838 = vsel %vm811, %v363, %v837
    %v840 = vunpack.c.l.s4 1983009808
    %v841 = vunpack.c.0.s8 %v840
    %v842 = vperm.slane %v836, %v841
    %v844 = vunpack.c.l.s4 1983009808
    %v845 = vunpack.c.0.s8 %v844
    %v846 = vperm.slane %v838, %v845
    %v847 = vrot.slane %v800, 4
    %v848 = vsel %vm811, %v847, %v796
    %v849 = vrot.slane %v796, 4
    %v850 = vsel %vm811, %v800, %v849
    %v852 = vunpack.c.l.s4 1983009808
    %v853 = vunpack.c.0.s8 %v852
    %v854 = vperm.slane %v848, %v853
    %v856 = vunpack.c.l.s4 1983009808
    %v857 = vunpack.c.0.s8 %v856
    %v858 = vperm.slane %v850, %v857
    %v859 = vrot.slane %v830, 4
    %v860 = vsel %vm811, %v859, %v818
    %v861 = vrot.slane %v818, 4
    %v862 = vsel %vm811, %v830, %v861
    %v864 = vunpack.c.l.s4 1934713408
    %v865 = vunpack.c.0.s8 %v864
    %v866 = vperm.slane %v860, %v865
    %v868 = vunpack.c.l.s4 1934713408
    %v869 = vunpack.c.0.s8 %v868
    %v870 = vperm.slane %v862, %v869
    %v871 = vrot.slane %v834, 4
    %v872 = vsel %vm811, %v871, %v822
    %v873 = vrot.slane %v822, 4
    %v874 = vsel %vm811, %v834, %v873
    %v876 = vunpack.c.l.s4 1934713408
    %v877 = vunpack.c.0.s8 %v876
    %v878 = vperm.slane %v872, %v877
    %v880 = vunpack.c.l.s4 1934713408
    %v881 = vunpack.c.0.s8 %v880
    %v882 = vperm.slane %v874, %v881
    %v883 = vrot.slane %v854, 4
    %v884 = vsel %vm811, %v883, %v842
    %v885 = vrot.slane %v842, 4
    %v886 = vsel %vm811, %v854, %v885
    %v888 = vunpack.c.l.s4 1934713408
    %v889 = vunpack.c.0.s8 %v888
    %v890 = vperm.slane %v884, %v889
    %v892 = vunpack.c.l.s4 1934713408
    %v893 = vunpack.c.0.s8 %v892
    %v894 = vperm.slane %v886, %v893
    %v895 = vrot.slane %v858, 4
    %v896 = vsel %vm811, %v895, %v846
    %v897 = vrot.slane %v846, 4
    %v898 = vsel %vm811, %v858, %v897
    %v900 = vunpack.c.l.s4 1934713408
    %v901 = vunpack.c.0.s8 %v900
    %v902 = vperm.slane %v896, %v901
    %v904 = vunpack.c.l.s4 1934713408
    %v905 = vunpack.c.0.s8 %v904
    %v906 = vperm.slane %v898, %v905
    %v907 = vrot.slane %v890, 4
    %v908 = vsel %vm811, %v907, %v866
    %v909 = vrot.slane %v866, 4
    %v910 = vsel %vm811, %v890, %v909
    %v911 = vrot.slane %v894, 4
    %v912 = vsel %vm811, %v911, %v870
    %v913 = vrot.slane %v870, 4
    %v914 = vsel %vm811, %v894, %v913
    %v915 = vrot.slane %v902, 4
    %v916 = vsel %vm811, %v915, %v878
    %v917 = vrot.slane %v878, 4
    %v918 = vsel %vm811, %v902, %v917
    %v919 = vrot.slane %v906, 4
    %v920 = vsel %vm811, %v919, %v882
    %v921 = vrot.slane %v882, 4
    %v922 = vsel %vm811, %v906, %v921
    %v923 = vrot.slane %v409, 4
    %v924 = vsel %vm811, %v923, %v386
    %v925 = vrot.slane %v386, 4
    %v926 = vsel %vm811, %v409, %v925
    %v928 = vunpack.c.l.s4 1983009808
    %v929 = vunpack.c.0.s8 %v928
    %v930 = vperm.slane %v924, %v929
    %v932 = vunpack.c.l.s4 1983009808
    %v933 = vunpack.c.0.s8 %v932
    %v934 = vperm.slane %v926, %v933
    %v935 = vrot.slane %v808, 4
    %v936 = vsel %vm811, %v935, %v804
    %v937 = vrot.slane %v804, 4
    %v938 = vsel %vm811, %v808, %v937
    %v940 = vunpack.c.l.s4 1983009808
    %v941 = vunpack.c.0.s8 %v940
    %v942 = vperm.slane %v936, %v941
    %v944 = vunpack.c.l.s4 1983009808
    %v945 = vunpack.c.0.s8 %v944
    %v946 = vperm.slane %v938, %v945
    %v947 = vrot.slane %v942, 4
    %v948 = vsel %vm811, %v947, %v930
    %v949 = vrot.slane %v930, 4
    %v950 = vsel %vm811, %v942, %v949
    %v952 = vunpack.c.l.s4 1934713408
    %v953 = vunpack.c.0.s8 %v952
    %v954 = vperm.slane %v948, %v953
    %v956 = vunpack.c.l.s4 1934713408
    %v957 = vunpack.c.0.s8 %v956
    %v958 = vperm.slane %v950, %v957
    %v959 = vrot.slane %v946, 4
    %v960 = vsel %vm811, %v959, %v934
    %v961 = vrot.slane %v934, 4
    %v962 = vsel %vm811, %v946, %v961
    %v964 = vunpack.c.l.s4 1934713408
    %v965 = vunpack.c.0.s8 %v964
    %v966 = vperm.slane %v960, %v965
    %v968 = vunpack.c.l.s4 1934713408
    %v969 = vunpack.c.0.s8 %v968
    %v970 = vperm.slane %v962, %v969
    %v971 = vrot.slane %v954, 4
    %v972 = vsel %vm811, 0.0, %v971
    %v973 = vrot.slane %v958, 4
    %v974 = vsel %vm811, 0.0, %v973
    %v975 = vrot.slane %v966, 4
    %v976 = vsel %vm811, 0.0, %v975
    %v977 = vrot.slane %v970, 4
    %v978 = vsel %vm811, 0.0, %v977
    %980 = vrot.lane.b32.xlu0 %v432, 64
    %v981 = vpop.permute.xlu0 %980
    %984 = vrot.lane.b32.xlu0 %v455, 64
    %v985 = vpop.permute.xlu0 %984
    %988 = vrot.lane.b32.xlu0 %v478, 64
    %v989 = vpop.permute.xlu0 %988
    %992 = vrot.lane.b32.xlu0 %v501, 64
    %v993 = vpop.permute.xlu0 %992
    %996 = vrot.lane.b32.xlu0 %v524, 64
    %v997 = vpop.permute.xlu0 %996
    %1000 = vrot.lane.b32.xlu0 %v547, 64
    %v1001 = vpop.permute.xlu0 %1000
    %v1003 = vrot.slane %v455, 4
    %v1004 = vsel %vm811, %v1003, %v432
    %v1005 = vrot.slane %v432, 4
    %v1006 = vsel %vm811, %v455, %v1005
    %v1008 = vunpack.c.l.s4 1983009808
    %v1009 = vunpack.c.0.s8 %v1008
    %v1010 = vperm.slane %v1004, %v1009
    %v1012 = vunpack.c.l.s4 1983009808
    %v1013 = vunpack.c.0.s8 %v1012
    %v1014 = vperm.slane %v1006, %v1013
    %v1015 = vrot.slane %v985, 4
    %v1016 = vsel %vm811, %v1015, %v981
    %v1017 = vrot.slane %v981, 4
    %v1018 = vsel %vm811, %v985, %v1017
    %v1020 = vunpack.c.l.s4 1983009808
    %v1021 = vunpack.c.0.s8 %v1020
    %v1022 = vperm.slane %v1016, %v1021
    %v1024 = vunpack.c.l.s4 1983009808
    %v1025 = vunpack.c.0.s8 %v1024
    %v1026 = vperm.slane %v1018, %v1025
    %v1027 = vrot.slane %v501, 4
    %v1028 = vsel %vm811, %v1027, %v478
    %v1029 = vrot.slane %v478, 4
    %v1030 = vsel %vm811, %v501, %v1029
    %v1032 = vunpack.c.l.s4 1983009808
    %v1033 = vunpack.c.0.s8 %v1032
    %v1034 = vperm.slane %v1028, %v1033
    %v1036 = vunpack.c.l.s4 1983009808
    %v1037 = vunpack.c.0.s8 %v1036
    %v1038 = vperm.slane %v1030, %v1037
    %v1039 = vrot.slane %v993, 4
    %v1040 = vsel %vm811, %v1039, %v989
    %v1041 = vrot.slane %v989, 4
    %v1042 = vsel %vm811, %v993, %v1041
    %v1044 = vunpack.c.l.s4 1983009808
    %v1045 = vunpack.c.0.s8 %v1044
    %v1046 = vperm.slane %v1040, %v1045
    %v1048 = vunpack.c.l.s4 1983009808
    %v1049 = vunpack.c.0.s8 %v1048
    %v1050 = vperm.slane %v1042, %v1049
    %v1051 = vrot.slane %v1022, 4
    %v1052 = vsel %vm811, %v1051, %v1010
    %v1053 = vrot.slane %v1010, 4
    %v1054 = vsel %vm811, %v1022, %v1053
    %v1056 = vunpack.c.l.s4 1934713408
    %v1057 = vunpack.c.0.s8 %v1056
    %v1058 = vperm.slane %v1052, %v1057
    %v1060 = vunpack.c.l.s4 1934713408
    %v1061 = vunpack.c.0.s8 %v1060
    %v1062 = vperm.slane %v1054, %v1061
    %v1063 = vrot.slane %v1026, 4
    %v1064 = vsel %vm811, %v1063, %v1014
    %v1065 = vrot.slane %v1014, 4
    %v1066 = vsel %vm811, %v1026, %v1065
    %v1068 = vunpack.c.l.s4 1934713408
    %v1069 = vunpack.c.0.s8 %v1068
    %v1070 = vperm.slane %v1064, %v1069
    %v1072 = vunpack.c.l.s4 1934713408
    %v1073 = vunpack.c.0.s8 %v1072
    %v1074 = vperm.slane %v1066, %v1073
    %v1075 = vrot.slane %v1046, 4
    %v1076 = vsel %vm811, %v1075, %v1034
    %v1077 = vrot.slane %v1034, 4
    %v1078 = vsel %vm811, %v1046, %v1077
    %v1080 = vunpack.c.l.s4 1934713408
    %v1081 = vunpack.c.0.s8 %v1080
    %v1082 = vperm.slane %v1076, %v1081
    %v1084 = vunpack.c.l.s4 1934713408
    %v1085 = vunpack.c.0.s8 %v1084
    %v1086 = vperm.slane %v1078, %v1085
    %v1087 = vrot.slane %v1050, 4
    %v1088 = vsel %vm811, %v1087, %v1038
    %v1089 = vrot.slane %v1038, 4
    %v1090 = vsel %vm811, %v1050, %v1089
    %v1092 = vunpack.c.l.s4 1934713408
    %v1093 = vunpack.c.0.s8 %v1092
    %v1094 = vperm.slane %v1088, %v1093
    %v1096 = vunpack.c.l.s4 1934713408
    %v1097 = vunpack.c.0.s8 %v1096
    %v1098 = vperm.slane %v1090, %v1097
    %v1099 = vrot.slane %v1082, 4
    %v1100 = vsel %vm811, %v1099, %v1058
    %v1101 = vrot.slane %v1058, 4
    %v1102 = vsel %vm811, %v1082, %v1101
    %v1103 = vrot.slane %v1086, 4
    %v1104 = vsel %vm811, %v1103, %v1062
    %v1105 = vrot.slane %v1062, 4
    %v1106 = vsel %vm811, %v1086, %v1105
    %v1107 = vrot.slane %v1094, 4
    %v1108 = vsel %vm811, %v1107, %v1070
    %v1109 = vrot.slane %v1070, 4
    %v1110 = vsel %vm811, %v1094, %v1109
    %v1111 = vrot.slane %v1098, 4
    %v1112 = vsel %vm811, %v1111, %v1074
    %v1113 = vrot.slane %v1074, 4
    %v1114 = vsel %vm811, %v1098, %v1113
    %v1115 = vrot.slane %v547, 4
    %v1116 = vsel %vm811, %v1115, %v524
    %v1117 = vrot.slane %v524, 4
    %v1118 = vsel %vm811, %v547, %v1117
    %v1120 = vunpack.c.l.s4 1983009808
    %v1121 = vunpack.c.0.s8 %v1120
    %v1122 = vperm.slane %v1116, %v1121
    %v1124 = vunpack.c.l.s4 1983009808
    %v1125 = vunpack.c.0.s8 %v1124
    %v1126 = vperm.slane %v1118, %v1125
    %v1127 = vrot.slane %v1001, 4
    %v1128 = vsel %vm811, %v1127, %v997
    %v1129 = vrot.slane %v997, 4
    %v1130 = vsel %vm811, %v1001, %v1129
    %v1132 = vunpack.c.l.s4 1983009808
    %v1133 = vunpack.c.0.s8 %v1132
    %v1134 = vperm.slane %v1128, %v1133
    %v1136 = vunpack.c.l.s4 1983009808
    %v1137 = vunpack.c.0.s8 %v1136
    %v1138 = vperm.slane %v1130, %v1137
    %v1139 = vrot.slane %v1134, 4
    %v1140 = vsel %vm811, %v1139, %v1122
    %v1141 = vrot.slane %v1122, 4
    %v1142 = vsel %vm811, %v1134, %v1141
    %v1144 = vunpack.c.l.s4 1934713408
    %v1145 = vunpack.c.0.s8 %v1144
    %v1146 = vperm.slane %v1140, %v1145
    %v1148 = vunpack.c.l.s4 1934713408
    %v1149 = vunpack.c.0.s8 %v1148
    %v1150 = vperm.slane %v1142, %v1149
    %v1151 = vrot.slane %v1138, 4
    %v1152 = vsel %vm811, %v1151, %v1126
    %v1153 = vrot.slane %v1126, 4
    %v1154 = vsel %vm811, %v1138, %v1153
    %v1156 = vunpack.c.l.s4 1934713408
    %v1157 = vunpack.c.0.s8 %v1156
    %v1158 = vperm.slane %v1152, %v1157
    %v1160 = vunpack.c.l.s4 1934713408
    %v1161 = vunpack.c.0.s8 %v1160
    %v1162 = vperm.slane %v1154, %v1161
    %v1163 = vrot.slane %v1146, 4
    %v1164 = vsel %vm811, 0.0, %v1163
    %v1165 = vrot.slane %v1150, 4
    %v1166 = vsel %vm811, 0.0, %v1165
    %v1167 = vrot.slane %v1158, 4
    %v1168 = vsel %vm811, 0.0, %v1167
    %v1169 = vrot.slane %v1162, 4
    %v1170 = vsel %vm811, 0.0, %v1169
    %1172 = vrot.lane.b32.xlu0 %v570, 64
    %v1173 = vpop.permute.xlu0 %1172
    %1176 = vrot.lane.b32.xlu0 %v593, 64
    %v1177 = vpop.permute.xlu0 %1176
    %1180 = vrot.lane.b32.xlu0 %v616, 64
    %v1181 = vpop.permute.xlu0 %1180
    %1184 = vrot.lane.b32.xlu0 %v639, 64
    %v1185 = vpop.permute.xlu0 %1184
    %1188 = vrot.lane.b32.xlu0 %v662, 64
    %v1189 = vpop.permute.xlu0 %1188
    %1192 = vrot.lane.b32.xlu0 %v685, 64
    %v1193 = vpop.permute.xlu0 %1192
    %v1195 = vrot.slane %v593, 4
    %v1196 = vsel %vm811, %v1195, %v570
    %v1197 = vrot.slane %v570, 4
    %v1198 = vsel %vm811, %v593, %v1197
    %v1200 = vunpack.c.l.s4 1983009808
    %v1201 = vunpack.c.0.s8 %v1200
    %v1202 = vperm.slane %v1196, %v1201
    %v1204 = vunpack.c.l.s4 1983009808
    %v1205 = vunpack.c.0.s8 %v1204
    %v1206 = vperm.slane %v1198, %v1205
    %v1207 = vrot.slane %v1177, 4
    %v1208 = vsel %vm811, %v1207, %v1173
    %v1209 = vrot.slane %v1173, 4
    %v1210 = vsel %vm811, %v1177, %v1209
    %v1212 = vunpack.c.l.s4 1983009808
    %v1213 = vunpack.c.0.s8 %v1212
    %v1214 = vperm.slane %v1208, %v1213
    %v1216 = vunpack.c.l.s4 1983009808
    %v1217 = vunpack.c.0.s8 %v1216
    %v1218 = vperm.slane %v1210, %v1217
    %v1219 = vrot.slane %v639, 4
    %v1220 = vsel %vm811, %v1219, %v616
    %v1221 = vrot.slane %v616, 4
    %v1222 = vsel %vm811, %v639, %v1221
    %v1224 = vunpack.c.l.s4 1983009808
    %v1225 = vunpack.c.0.s8 %v1224
    %v1226 = vperm.slane %v1220, %v1225
    %v1228 = vunpack.c.l.s4 1983009808
    %v1229 = vunpack.c.0.s8 %v1228
    %v1230 = vperm.slane %v1222, %v1229
    %v1231 = vrot.slane %v1185, 4
    %v1232 = vsel %vm811, %v1231, %v1181
    %v1233 = vrot.slane %v1181, 4
    %v1234 = vsel %vm811, %v1185, %v1233
    %v1236 = vunpack.c.l.s4 1983009808
    %v1237 = vunpack.c.0.s8 %v1236
    %v1238 = vperm.slane %v1232, %v1237
    %v1240 = vunpack.c.l.s4 1983009808
    %v1241 = vunpack.c.0.s8 %v1240
    %v1242 = vperm.slane %v1234, %v1241
    %v1243 = vrot.slane %v1214, 4
    %v1244 = vsel %vm811, %v1243, %v1202
    %v1245 = vrot.slane %v1202, 4
    %v1246 = vsel %vm811, %v1214, %v1245
    %v1248 = vunpack.c.l.s4 1934713408
    %v1249 = vunpack.c.0.s8 %v1248
    %v1250 = vperm.slane %v1244, %v1249
    %v1252 = vunpack.c.l.s4 1934713408
    %v1253 = vunpack.c.0.s8 %v1252
    %v1254 = vperm.slane %v1246, %v1253
    %v1255 = vrot.slane %v1218, 4
    %v1256 = vsel %vm811, %v1255, %v1206
    %v1257 = vrot.slane %v1206, 4
    %v1258 = vsel %vm811, %v1218, %v1257
    %v1260 = vunpack.c.l.s4 1934713408
    %v1261 = vunpack.c.0.s8 %v1260
    %v1262 = vperm.slane %v1256, %v1261
    %v1264 = vunpack.c.l.s4 1934713408
    %v1265 = vunpack.c.0.s8 %v1264
    %v1266 = vperm.slane %v1258, %v1265
    %v1267 = vrot.slane %v1238, 4
    %v1268 = vsel %vm811, %v1267, %v1226
    %v1269 = vrot.slane %v1226, 4
    %v1270 = vsel %vm811, %v1238, %v1269
    %v1272 = vunpack.c.l.s4 1934713408
    %v1273 = vunpack.c.0.s8 %v1272
    %v1274 = vperm.slane %v1268, %v1273
    %v1276 = vunpack.c.l.s4 1934713408
    %v1277 = vunpack.c.0.s8 %v1276
    %v1278 = vperm.slane %v1270, %v1277
    %v1279 = vrot.slane %v1242, 4
    %v1280 = vsel %vm811, %v1279, %v1230
    %v1281 = vrot.slane %v1230, 4
    %v1282 = vsel %vm811, %v1242, %v1281
    %v1284 = vunpack.c.l.s4 1934713408
    %v1285 = vunpack.c.0.s8 %v1284
    %v1286 = vperm.slane %v1280, %v1285
    %v1288 = vunpack.c.l.s4 1934713408
    %v1289 = vunpack.c.0.s8 %v1288
    %v1290 = vperm.slane %v1282, %v1289
    %v1291 = vrot.slane %v1274, 4
    %v1292 = vsel %vm811, %v1291, %v1250
    %v1293 = vrot.slane %v1250, 4
    %v1294 = vsel %vm811, %v1274, %v1293
    %v1295 = vrot.slane %v1278, 4
    %v1296 = vsel %vm811, %v1295, %v1254
    %v1297 = vrot.slane %v1254, 4
    %v1298 = vsel %vm811, %v1278, %v1297
    %v1299 = vrot.slane %v1286, 4
    %v1300 = vsel %vm811, %v1299, %v1262
    %v1301 = vrot.slane %v1262, 4
    %v1302 = vsel %vm811, %v1286, %v1301
    %v1303 = vrot.slane %v1290, 4
    %v1304 = vsel %vm811, %v1303, %v1266
    %v1305 = vrot.slane %v1266, 4
    %v1306 = vsel %vm811, %v1290, %v1305
    %v1307 = vrot.slane %v685, 4
    %v1308 = vsel %vm811, %v1307, %v662
    %v1309 = vrot.slane %v662, 4
    %v1310 = vsel %vm811, %v685, %v1309
    %v1312 = vunpack.c.l.s4 1983009808
    %v1313 = vunpack.c.0.s8 %v1312
    %v1314 = vperm.slane %v1308, %v1313
    %v1316 = vunpack.c.l.s4 1983009808
    %v1317 = vunpack.c.0.s8 %v1316
    %v1318 = vperm.slane %v1310, %v1317
    %v1319 = vrot.slane %v1193, 4
    %v1320 = vsel %vm811, %v1319, %v1189
    %v1321 = vrot.slane %v1189, 4
    %v1322 = vsel %vm811, %v1193, %v1321
    %v1324 = vunpack.c.l.s4 1983009808
    %v1325 = vunpack.c.0.s8 %v1324
    %v1326 = vperm.slane %v1320, %v1325
    %v1328 = vunpack.c.l.s4 1983009808
    %v1329 = vunpack.c.0.s8 %v1328
    %v1330 = vperm.slane %v1322, %v1329
    %v1331 = vrot.slane %v1326, 4
    %v1332 = vsel %vm811, %v1331, %v1314
    %v1333 = vrot.slane %v1314, 4
    %v1334 = vsel %vm811, %v1326, %v1333
    %v1336 = vunpack.c.l.s4 1934713408
    %v1337 = vunpack.c.0.s8 %v1336
    %v1338 = vperm.slane %v1332, %v1337
    %v1340 = vunpack.c.l.s4 1934713408
    %v1341 = vunpack.c.0.s8 %v1340
    %v1342 = vperm.slane %v1334, %v1341
    %v1343 = vrot.slane %v1330, 4
    %v1344 = vsel %vm811, %v1343, %v1318
    %v1345 = vrot.slane %v1318, 4
    %v1346 = vsel %vm811, %v1330, %v1345
    %v1348 = vunpack.c.l.s4 1934713408
    %v1349 = vunpack.c.0.s8 %v1348
    %v1350 = vperm.slane %v1344, %v1349
    %v1352 = vunpack.c.l.s4 1934713408
    %v1353 = vunpack.c.0.s8 %v1352
    %v1354 = vperm.slane %v1346, %v1353
    %v1355 = vrot.slane %v1338, 4
    %v1356 = vsel %vm811, 0.0, %v1355
    %v1357 = vrot.slane %v1342, 4
    %v1358 = vsel %vm811, 0.0, %v1357
    %v1359 = vrot.slane %v1350, 4
    %v1360 = vsel %vm811, 0.0, %v1359
    %v1361 = vrot.slane %v1354, 4
    %v1362 = vsel %vm811, 0.0, %v1361
    %v1363 = vrot.slane %v912, 4
    %v1364 = vsel %vm811, %v1363, %v908
    %v1365 = vrot.slane %v908, 4
    %v1366 = vsel %vm811, %v912, %v1365
    %v1368 = vunpack.c.l.s4 1983009808
    %v1369 = vunpack.c.0.s8 %v1368
    %v1370 = vperm.slane %v1364, %v1369
    %v1372 = vunpack.c.l.s4 1983009808
    %v1373 = vunpack.c.0.s8 %v1372
    %v1374 = vperm.slane %v1366, %v1373
    %v1375 = vrot.slane %v914, 4
    %v1376 = vsel %vm811, %v1375, %v910
    %v1377 = vrot.slane %v910, 4
    %v1378 = vsel %vm811, %v914, %v1377
    %v1380 = vunpack.c.l.s4 1983009808
    %v1381 = vunpack.c.0.s8 %v1380
    %v1382 = vperm.slane %v1376, %v1381
    %v1384 = vunpack.c.l.s4 1983009808
    %v1385 = vunpack.c.0.s8 %v1384
    %v1386 = vperm.slane %v1378, %v1385
    %v1387 = vrot.slane %v920, 4
    %v1388 = vsel %vm811, %v1387, %v916
    %v1389 = vrot.slane %v916, 4
    %v1390 = vsel %vm811, %v920, %v1389
    %v1392 = vunpack.c.l.s4 1983009808
    %v1393 = vunpack.c.0.s8 %v1392
    %v1394 = vperm.slane %v1388, %v1393
    %v1396 = vunpack.c.l.s4 1983009808
    %v1397 = vunpack.c.0.s8 %v1396
    %v1398 = vperm.slane %v1390, %v1397
    %v1399 = vrot.slane %v922, 4
    %v1400 = vsel %vm811, %v1399, %v918
    %v1401 = vrot.slane %v918, 4
    %v1402 = vsel %vm811, %v922, %v1401
    %v1404 = vunpack.c.l.s4 1983009808
    %v1405 = vunpack.c.0.s8 %v1404
    %v1406 = vperm.slane %v1400, %v1405
    %v1408 = vunpack.c.l.s4 1983009808
    %v1409 = vunpack.c.0.s8 %v1408
    %v1410 = vperm.slane %v1402, %v1409
    %v1411 = vrot.slane %v1382, 4
    %v1412 = vsel %vm811, %v1411, %v1370
    %v1413 = vrot.slane %v1370, 4
    %v1414 = vsel %vm811, %v1382, %v1413
    %v1416 = vunpack.c.l.s4 1934713408
    %v1417 = vunpack.c.0.s8 %v1416
    %v1418 = vperm.slane %v1412, %v1417
    %v1420 = vunpack.c.l.s4 1934713408
    %v1421 = vunpack.c.0.s8 %v1420
    %v1422 = vperm.slane %v1414, %v1421
    %v1423 = vrot.slane %v1386, 4
    %v1424 = vsel %vm811, %v1423, %v1374
    %v1425 = vrot.slane %v1374, 4
    %v1426 = vsel %vm811, %v1386, %v1425
    %v1428 = vunpack.c.l.s4 1934713408
    %v1429 = vunpack.c.0.s8 %v1428
    %v1430 = vperm.slane %v1424, %v1429
    %v1432 = vunpack.c.l.s4 1934713408
    %v1433 = vunpack.c.0.s8 %v1432
    %v1434 = vperm.slane %v1426, %v1433
    %v1435 = vrot.slane %v1406, 4
    %v1436 = vsel %vm811, %v1435, %v1394
    %v1437 = vrot.slane %v1394, 4
    %v1438 = vsel %vm811, %v1406, %v1437
    %v1440 = vunpack.c.l.s4 1934713408
    %v1441 = vunpack.c.0.s8 %v1440
    %v1442 = vperm.slane %v1436, %v1441
    %v1444 = vunpack.c.l.s4 1934713408
    %v1445 = vunpack.c.0.s8 %v1444
    %v1446 = vperm.slane %v1438, %v1445
    %v1447 = vrot.slane %v1410, 4
    %v1448 = vsel %vm811, %v1447, %v1398
    %v1449 = vrot.slane %v1398, 4
    %v1450 = vsel %vm811, %v1410, %v1449
    %v1452 = vunpack.c.l.s4 1934713408
    %v1453 = vunpack.c.0.s8 %v1452
    %v1454 = vperm.slane %v1448, %v1453
    %v1456 = vunpack.c.l.s4 1934713408
    %v1457 = vunpack.c.0.s8 %v1456
    %v1458 = vperm.slane %v1450, %v1457
    %v1459 = vrot.slane %v1442, 4
    %v1460 = vsel %vm811, %v1459, %v1418
    %v1461 = vrot.slane %v1418, 4
    %v1462 = vsel %vm811, %v1442, %v1461
    %v1463 = vrot.slane %v1446, 4
    %v1464 = vsel %vm811, %v1463, %v1422
    %v1465 = vrot.slane %v1422, 4
    %v1466 = vsel %vm811, %v1446, %v1465
    %v1467 = vrot.slane %v1454, 4
    %v1468 = vsel %vm811, %v1467, %v1430
    %v1469 = vrot.slane %v1430, 4
    %v1470 = vsel %vm811, %v1454, %v1469
    %v1471 = vrot.slane %v1458, 4
    %v1472 = vsel %vm811, %v1471, %v1434
    %v1473 = vrot.slane %v1434, 4
    %v1474 = vsel %vm811, %v1458, %v1473
    %v1475 = vsel %vm811, %v973, %v954
    %v1477 = vunpack.c.l.s4 1983009808
    %v1478 = vunpack.c.0.s8 %v1477
    %v1479 = vperm.slane %v1475, %v1478
    %v1480 = vrot.slane %v974, 4
    %v1481 = vsel %vm811, %v1480, %v972
    %v1483 = vunpack.c.l.s4 1983009808
    %v1484 = vunpack.c.0.s8 %v1483
    %v1485 = vperm.slane %v1481, %v1484
    %v1486 = vsel %vm811, %v977, %v966
    %v1488 = vunpack.c.l.s4 1983009808
    %v1489 = vunpack.c.0.s8 %v1488
    %v1490 = vperm.slane %v1486, %v1489
    %v1491 = vrot.slane %v978, 4
    %v1492 = vsel %vm811, %v1491, %v976
    %v1494 = vunpack.c.l.s4 1983009808
    %v1495 = vunpack.c.0.s8 %v1494
    %v1496 = vperm.slane %v1492, %v1495
    %v1497 = vrot.slane %v1485, 4
    %v1498 = vsel %vm811, %v1497, %v1479
    %v1499 = vrot.slane %v1479, 4
    %v1500 = vsel %vm811, %v1485, %v1499
    %v1502 = vunpack.c.l.s4 1934713408
    %v1503 = vunpack.c.0.s8 %v1502
    %v1504 = vperm.slane %v1498, %v1503
    %v1506 = vunpack.c.l.s4 1934713408
    %v1507 = vunpack.c.0.s8 %v1506
    %v1508 = vperm.slane %v1500, %v1507
    %v1509 = vrot.slane %v1496, 4
    %v1510 = vsel %vm811, %v1509, %v1490
    %v1511 = vrot.slane %v1490, 4
    %v1512 = vsel %vm811, %v1496, %v1511
    %v1514 = vunpack.c.l.s4 1934713408
    %v1515 = vunpack.c.0.s8 %v1514
    %v1516 = vperm.slane %v1510, %v1515
    %v1518 = vunpack.c.l.s4 1934713408
    %v1519 = vunpack.c.0.s8 %v1518
    %v1520 = vperm.slane %v1512, %v1519
    %v1521 = vrot.slane %v1516, 4
    %v1522 = vsel %vm811, %v1521, %v1504
    %v1523 = vrot.slane %v1504, 4
    %v1524 = vsel %vm811, %v1516, %v1523
    %v1525 = vrot.slane %v1520, 4
    %v1526 = vsel %vm811, %v1525, %v1508
    %v1527 = vrot.slane %v1508, 4
    %v1528 = vsel %vm811, %v1520, %v1527
    %v1529 = vrot.slane %v1104, 4
    %v1530 = vsel %vm811, %v1529, %v1100
    %v1531 = vrot.slane %v1100, 4
    %v1532 = vsel %vm811, %v1104, %v1531
    %v1534 = vunpack.c.l.s4 1983009808
    %v1535 = vunpack.c.0.s8 %v1534
    %v1536 = vperm.slane %v1530, %v1535
    %v1538 = vunpack.c.l.s4 1983009808
    %v1539 = vunpack.c.0.s8 %v1538
    %v1540 = vperm.slane %v1532, %v1539
    %v1541 = vrot.slane %v1106, 4
    %v1542 = vsel %vm811, %v1541, %v1102
    %v1543 = vrot.slane %v1102, 4
    %v1544 = vsel %vm811, %v1106, %v1543
    %v1546 = vunpack.c.l.s4 1983009808
    %v1547 = vunpack.c.0.s8 %v1546
    %v1548 = vperm.slane %v1542, %v1547
    %v1550 = vunpack.c.l.s4 1983009808
    %v1551 = vunpack.c.0.s8 %v1550
    %v1552 = vperm.slane %v1544, %v1551
    %v1553 = vrot.slane %v1112, 4
    %v1554 = vsel %vm811, %v1553, %v1108
    %v1555 = vrot.slane %v1108, 4
    %v1556 = vsel %vm811, %v1112, %v1555
    %v1558 = vunpack.c.l.s4 1983009808
    %v1559 = vunpack.c.0.s8 %v1558
    %v1560 = vperm.slane %v1554, %v1559
    %v1562 = vunpack.c.l.s4 1983009808
    %v1563 = vunpack.c.0.s8 %v1562
    %v1564 = vperm.slane %v1556, %v1563
    %v1565 = vrot.slane %v1114, 4
    %v1566 = vsel %vm811, %v1565, %v1110
    %v1567 = vrot.slane %v1110, 4
    %v1568 = vsel %vm811, %v1114, %v1567
    %v1570 = vunpack.c.l.s4 1983009808
    %v1571 = vunpack.c.0.s8 %v1570
    %v1572 = vperm.slane %v1566, %v1571
    %v1574 = vunpack.c.l.s4 1983009808
    %v1575 = vunpack.c.0.s8 %v1574
    %v1576 = vperm.slane %v1568, %v1575
    %v1577 = vrot.slane %v1548, 4
    %v1578 = vsel %vm811, %v1577, %v1536
    %v1579 = vrot.slane %v1536, 4
    %v1580 = vsel %vm811, %v1548, %v1579
    %v1582 = vunpack.c.l.s4 1934713408
    %v1583 = vunpack.c.0.s8 %v1582
    %v1584 = vperm.slane %v1578, %v1583
    %v1586 = vunpack.c.l.s4 1934713408
    %v1587 = vunpack.c.0.s8 %v1586
    %v1588 = vperm.slane %v1580, %v1587
    %v1589 = vrot.slane %v1552, 4
    %v1590 = vsel %vm811, %v1589, %v1540
    %v1591 = vrot.slane %v1540, 4
    %v1592 = vsel %vm811, %v1552, %v1591
    %v1594 = vunpack.c.l.s4 1934713408
    %v1595 = vunpack.c.0.s8 %v1594
    %v1596 = vperm.slane %v1590, %v1595
    %v1598 = vunpack.c.l.s4 1934713408
    %v1599 = vunpack.c.0.s8 %v1598
    %v1600 = vperm.slane %v1592, %v1599
    %v1601 = vrot.slane %v1572, 4
    %v1602 = vsel %vm811, %v1601, %v1560
    %v1603 = vrot.slane %v1560, 4
    %v1604 = vsel %vm811, %v1572, %v1603
    %v1606 = vunpack.c.l.s4 1934713408
    %v1607 = vunpack.c.0.s8 %v1606
    %v1608 = vperm.slane %v1602, %v1607
    %v1610 = vunpack.c.l.s4 1934713408
    %v1611 = vunpack.c.0.s8 %v1610
    %v1612 = vperm.slane %v1604, %v1611
    %v1613 = vrot.slane %v1576, 4
    %v1614 = vsel %vm811, %v1613, %v1564
    %v1615 = vrot.slane %v1564, 4
    %v1616 = vsel %vm811, %v1576, %v1615
    %v1618 = vunpack.c.l.s4 1934713408
    %v1619 = vunpack.c.0.s8 %v1618
    %v1620 = vperm.slane %v1614, %v1619
    %v1622 = vunpack.c.l.s4 1934713408
    %v1623 = vunpack.c.0.s8 %v1622
    %v1624 = vperm.slane %v1616, %v1623
    %v1625 = vrot.slane %v1608, 4
    %v1626 = vsel %vm811, %v1625, %v1584
    %v1627 = vrot.slane %v1584, 4
    %v1628 = vsel %vm811, %v1608, %v1627
    %v1629 = vrot.slane %v1612, 4
    %v1630 = vsel %vm811, %v1629, %v1588
    %v1631 = vrot.slane %v1588, 4
    %v1632 = vsel %vm811, %v1612, %v1631
    %v1633 = vrot.slane %v1620, 4
    %v1634 = vsel %vm811, %v1633, %v1596
    %v1635 = vrot.slane %v1596, 4
    %v1636 = vsel %vm811, %v1620, %v1635
    %v1637 = vrot.slane %v1624, 4
    %v1638 = vsel %vm811, %v1637, %v1600
    %v1639 = vrot.slane %v1600, 4
    %v1640 = vsel %vm811, %v1624, %v1639
    %v1641 = vsel %vm811, %v1165, %v1146
    %v1643 = vunpack.c.l.s4 1983009808
    %v1644 = vunpack.c.0.s8 %v1643
    %v1645 = vperm.slane %v1641, %v1644
    %v1646 = vrot.slane %v1166, 4
    %v1647 = vsel %vm811, %v1646, %v1164
    %v1649 = vunpack.c.l.s4 1983009808
    %v1650 = vunpack.c.0.s8 %v1649
    %v1651 = vperm.slane %v1647, %v1650
    %v1652 = vsel %vm811, %v1169, %v1158
    %v1654 = vunpack.c.l.s4 1983009808
    %v1655 = vunpack.c.0.s8 %v1654
    %v1656 = vperm.slane %v1652, %v1655
    %v1657 = vrot.slane %v1170, 4
    %v1658 = vsel %vm811, %v1657, %v1168
    %v1660 = vunpack.c.l.s4 1983009808
    %v1661 = vunpack.c.0.s8 %v1660
    %v1662 = vperm.slane %v1658, %v1661
    %v1663 = vrot.slane %v1651, 4
    %v1664 = vsel %vm811, %v1663, %v1645
    %v1665 = vrot.slane %v1645, 4
    %v1666 = vsel %vm811, %v1651, %v1665
    %v1668 = vunpack.c.l.s4 1934713408
    %v1669 = vunpack.c.0.s8 %v1668
    %v1670 = vperm.slane %v1664, %v1669
    %v1672 = vunpack.c.l.s4 1934713408
    %v1673 = vunpack.c.0.s8 %v1672
    %v1674 = vperm.slane %v1666, %v1673
    %v1675 = vrot.slane %v1662, 4
    %v1676 = vsel %vm811, %v1675, %v1656
    %v1677 = vrot.slane %v1656, 4
    %v1678 = vsel %vm811, %v1662, %v1677
    %v1680 = vunpack.c.l.s4 1934713408
    %v1681 = vunpack.c.0.s8 %v1680
    %v1682 = vperm.slane %v1676, %v1681
    %v1684 = vunpack.c.l.s4 1934713408
    %v1685 = vunpack.c.0.s8 %v1684
    %v1686 = vperm.slane %v1678, %v1685
    %v1687 = vrot.slane %v1682, 4
    %v1688 = vsel %vm811, %v1687, %v1670
    %v1689 = vrot.slane %v1670, 4
    %v1690 = vsel %vm811, %v1682, %v1689
    %v1691 = vrot.slane %v1686, 4
    %v1692 = vsel %vm811, %v1691, %v1674
    %v1693 = vrot.slane %v1674, 4
    %v1694 = vsel %vm811, %v1686, %v1693
    %v1695 = vrot.slane %v1296, 4
    %v1696 = vsel %vm811, %v1695, %v1292
    %v1697 = vrot.slane %v1292, 4
    %v1698 = vsel %vm811, %v1296, %v1697
    %v1700 = vunpack.c.l.s4 1983009808
    %v1701 = vunpack.c.0.s8 %v1700
    %v1702 = vperm.slane %v1696, %v1701
    %v1704 = vunpack.c.l.s4 1983009808
    %v1705 = vunpack.c.0.s8 %v1704
    %v1706 = vperm.slane %v1698, %v1705
    %v1707 = vrot.slane %v1298, 4
    %v1708 = vsel %vm811, %v1707, %v1294
    %v1709 = vrot.slane %v1294, 4
    %v1710 = vsel %vm811, %v1298, %v1709
    %v1712 = vunpack.c.l.s4 1983009808
    %v1713 = vunpack.c.0.s8 %v1712
    %v1714 = vperm.slane %v1708, %v1713
    %v1716 = vunpack.c.l.s4 1983009808
    %v1717 = vunpack.c.0.s8 %v1716
    %v1718 = vperm.slane %v1710, %v1717
    %v1719 = vrot.slane %v1304, 4
    %v1720 = vsel %vm811, %v1719, %v1300
    %v1721 = vrot.slane %v1300, 4
    %v1722 = vsel %vm811, %v1304, %v1721
    %v1724 = vunpack.c.l.s4 1983009808
    %v1725 = vunpack.c.0.s8 %v1724
    %v1726 = vperm.slane %v1720, %v1725
    %v1728 = vunpack.c.l.s4 1983009808
    %v1729 = vunpack.c.0.s8 %v1728
    %v1730 = vperm.slane %v1722, %v1729
    %v1731 = vrot.slane %v1306, 4
    %v1732 = vsel %vm811, %v1731, %v1302
    %v1733 = vrot.slane %v1302, 4
    %v1734 = vsel %vm811, %v1306, %v1733
    %v1736 = vunpack.c.l.s4 1983009808
    %v1737 = vunpack.c.0.s8 %v1736
    %v1738 = vperm.slane %v1732, %v1737
    %v1740 = vunpack.c.l.s4 1983009808
    %v1741 = vunpack.c.0.s8 %v1740
    %v1742 = vperm.slane %v1734, %v1741
    %v1743 = vrot.slane %v1714, 4
    %v1744 = vsel %vm811, %v1743, %v1702
    %v1745 = vrot.slane %v1702, 4
    %v1746 = vsel %vm811, %v1714, %v1745
    %v1748 = vunpack.c.l.s4 1934713408
    %v1749 = vunpack.c.0.s8 %v1748
    %v1750 = vperm.slane %v1744, %v1749
    %v1752 = vunpack.c.l.s4 1934713408
    %v1753 = vunpack.c.0.s8 %v1752
    %v1754 = vperm.slane %v1746, %v1753
    %v1755 = vrot.slane %v1718, 4
    %v1756 = vsel %vm811, %v1755, %v1706
    %v1757 = vrot.slane %v1706, 4
    %v1758 = vsel %vm811, %v1718, %v1757
    %v1760 = vunpack.c.l.s4 1934713408
    %v1761 = vunpack.c.0.s8 %v1760
    %v1762 = vperm.slane %v1756, %v1761
    %v1764 = vunpack.c.l.s4 1934713408
    %v1765 = vunpack.c.0.s8 %v1764
    %v1766 = vperm.slane %v1758, %v1765
    %v1767 = vrot.slane %v1738, 4
    %v1768 = vsel %vm811, %v1767, %v1726
    %v1769 = vrot.slane %v1726, 4
    %v1770 = vsel %vm811, %v1738, %v1769
    %v1772 = vunpack.c.l.s4 1934713408
    %v1773 = vunpack.c.0.s8 %v1772
    %v1774 = vperm.slane %v1768, %v1773
    %v1776 = vunpack.c.l.s4 1934713408
    %v1777 = vunpack.c.0.s8 %v1776
    %v1778 = vperm.slane %v1770, %v1777
    %v1779 = vrot.slane %v1742, 4
    %v1780 = vsel %vm811, %v1779, %v1730
    %v1781 = vrot.slane %v1730, 4
    %v1782 = vsel %vm811, %v1742, %v1781
    %v1784 = vunpack.c.l.s4 1934713408
    %v1785 = vunpack.c.0.s8 %v1784
    %v1786 = vperm.slane %v1780, %v1785
    %v1788 = vunpack.c.l.s4 1934713408
    %v1789 = vunpack.c.0.s8 %v1788
    %v1790 = vperm.slane %v1782, %v1789
    %v1791 = vrot.slane %v1774, 4
    %v1792 = vsel %vm811, %v1791, %v1750
    %v1793 = vrot.slane %v1750, 4
    %v1794 = vsel %vm811, %v1774, %v1793
    %v1795 = vrot.slane %v1778, 4
    %v1796 = vsel %vm811, %v1795, %v1754
    %v1797 = vrot.slane %v1754, 4
    %v1798 = vsel %vm811, %v1778, %v1797
    %v1799 = vrot.slane %v1786, 4
    %v1800 = vsel %vm811, %v1799, %v1762
    %v1801 = vrot.slane %v1762, 4
    %v1802 = vsel %vm811, %v1786, %v1801
    %v1803 = vrot.slane %v1790, 4
    %v1804 = vsel %vm811, %v1803, %v1766
    %v1805 = vrot.slane %v1766, 4
    %v1806 = vsel %vm811, %v1790, %v1805
    %v1807 = vsel %vm811, %v1357, %v1338
    %v1809 = vunpack.c.l.s4 1983009808
    %v1810 = vunpack.c.0.s8 %v1809
    %v1811 = vperm.slane %v1807, %v1810
    %v1812 = vrot.slane %v1358, 4
    %v1813 = vsel %vm811, %v1812, %v1356
    %v1815 = vunpack.c.l.s4 1983009808
    %v1816 = vunpack.c.0.s8 %v1815
    %v1817 = vperm.slane %v1813, %v1816
    %v1818 = vsel %vm811, %v1361, %v1350
    %v1820 = vunpack.c.l.s4 1983009808
    %v1821 = vunpack.c.0.s8 %v1820
    %v1822 = vperm.slane %v1818, %v1821
    %v1823 = vrot.slane %v1362, 4
    %v1824 = vsel %vm811, %v1823, %v1360
    %v1826 = vunpack.c.l.s4 1983009808
    %v1827 = vunpack.c.0.s8 %v1826
    %v1828 = vperm.slane %v1824, %v1827
    %v1829 = vrot.slane %v1817, 4
    %v1830 = vsel %vm811, %v1829, %v1811
    %v1831 = vrot.slane %v1811, 4
    %v1832 = vsel %vm811, %v1817, %v1831
    %v1834 = vunpack.c.l.s4 1934713408
    %v1835 = vunpack.c.0.s8 %v1834
    %v1836 = vperm.slane %v1830, %v1835
    %v1838 = vunpack.c.l.s4 1934713408
    %v1839 = vunpack.c.0.s8 %v1838
    %v1840 = vperm.slane %v1832, %v1839
    %v1841 = vrot.slane %v1828, 4
    %v1842 = vsel %vm811, %v1841, %v1822
    %v1843 = vrot.slane %v1822, 4
    %v1844 = vsel %vm811, %v1828, %v1843
    %v1846 = vunpack.c.l.s4 1934713408
    %v1847 = vunpack.c.0.s8 %v1846
    %v1848 = vperm.slane %v1842, %v1847
    %v1850 = vunpack.c.l.s4 1934713408
    %v1851 = vunpack.c.0.s8 %v1850
    %v1852 = vperm.slane %v1844, %v1851
    %v1853 = vrot.slane %v1848, 4
    %v1854 = vsel %vm811, %v1853, %v1836
    %v1855 = vrot.slane %v1836, 4
    %v1856 = vsel %vm811, %v1848, %v1855
    %v1857 = vrot.slane %v1852, 4
    %v1858 = vsel %vm811, %v1857, %v1840
    %v1859 = vrot.slane %v1840, 4
    %v1860 = vsel %vm811, %v1852, %v1859
    %vm1861 = vcmask 523264
    %v1863 = vsel %vm1861, %v1460, 0
    %v1866 = vsel %vm1861, %v1626, 0
    %1868 = vmatpush.xpose.msra.mxu0 0.0
    %1869 = vmatpush.xpose.msra.mxu0 0.0
    %1870 = vmatpush.xpose.msra.mxu0 0.0
    %1871 = vmatpush.xpose.msra.mxu0 0.0
    %1872 = vmatpush.xpose.msra.mxu0 0.0
    %1873 = vmatpush.xpose.msra.mxu0 0.0
    %1874 = vmatpush.xpose.msra.mxu0 0.0
    %1875 = vmatpush.xpose.msra.mxu0 0.0
    %1876 = vmatpush.xpose.msra.mxu0 0.0
    %1877 = vmatpush.xpose.msra.mxu0 0.0
    %1878 = vmatpush.xpose.msra.mxu0 0.0
    %1879 = vmatpush.xpose.msra.mxu0 0.0
    %1880 = vmatpush.xpose.msra.mxu0 0.0
    %1881 = vmatpush.xpose.msra.mxu0 0.0
    %1882 = vmatpush.xpose.msra.mxu0 0.0
    %1883 = vmatpush.xpose.msra.mxu0 %v1866
    %1884 = vmatmul.f32.gmra.mxu0 %v1863
    %v1885 = vpop.f32.mrf.mxu0
    %v1886 = vadd.f32 0.0, %v1885
    %1887 = vdwg.mxu0
    %v1889 = vsel %vm1861, %v1462, 0
    %v1892 = vsel %vm1861, %v1628, 0
    %1894 = vmatpush.xpose.msra.mxu0 0.0
    %1895 = vmatpush.xpose.msra.mxu0 0.0
    %1896 = vmatpush.xpose.msra.mxu0 0.0
    %1897 = vmatpush.xpose.msra.mxu0 0.0
    %1898 = vmatpush.xpose.msra.mxu0 0.0
    %1899 = vmatpush.xpose.msra.mxu0 0.0
    %1900 = vmatpush.xpose.msra.mxu0 0.0
    %1901 = vmatpush.xpose.msra.mxu0 0.0
    %1902 = vmatpush.xpose.msra.mxu0 0.0
    %1903 = vmatpush.xpose.msra.mxu0 0.0
    %1904 = vmatpush.xpose.msra.mxu0 0.0
    %1905 = vmatpush.xpose.msra.mxu0 0.0
    %1906 = vmatpush.xpose.msra.mxu0 0.0
    %1907 = vmatpush.xpose.msra.mxu0 0.0
    %1908 = vmatpush.xpose.msra.mxu0 0.0
    %1909 = vmatpush.xpose.msra.mxu0 %v1892
    %1910 = vmatmul.f32.gmra.mxu0 %v1889
    %v1911 = vpop.f32.mrf.mxu0
    %v1912 = vadd.f32 0.0, %v1911
    %1913 = vdwg.mxu0
    %v1915 = vsel %vm1861, %v1464, 0
    %v1918 = vsel %vm1861, %v1630, 0
    %1920 = vmatpush.xpose.msra.mxu0 0.0
    %1921 = vmatpush.xpose.msra.mxu0 0.0
    %1922 = vmatpush.xpose.msra.mxu0 0.0
    %1923 = vmatpush.xpose.msra.mxu0 0.0
    %1924 = vmatpush.xpose.msra.mxu0 0.0
    %1925 = vmatpush.xpose.msra.mxu0 0.0
    %1926 = vmatpush.xpose.msra.mxu0 0.0
    %1927 = vmatpush.xpose.msra.mxu0 0.0
    %1928 = vmatpush.xpose.msra.mxu0 0.0
    %1929 = vmatpush.xpose.msra.mxu0 0.0
    %1930 = vmatpush.xpose.msra.mxu0 0.0
    %1931 = vmatpush.xpose.msra.mxu0 0.0
    %1932 = vmatpush.xpose.msra.mxu0 0.0
    %1933 = vmatpush.xpose.msra.mxu0 0.0
    %1934 = vmatpush.xpose.msra.mxu0 0.0
    %1935 = vmatpush.xpose.msra.mxu0 %v1918
    %1936 = vmatmul.f32.gmra.mxu0 %v1915
    %v1937 = vpop.f32.mrf.mxu0
    %v1938 = vadd.f32 0.0, %v1937
    %1939 = vdwg.mxu0
    %v1941 = vsel %vm1861, %v1466, 0
    %v1944 = vsel %vm1861, %v1632, 0
    %1946 = vmatpush.xpose.msra.mxu0 0.0
    %1947 = vmatpush.xpose.msra.mxu0 0.0
    %1948 = vmatpush.xpose.msra.mxu0 0.0
    %1949 = vmatpush.xpose.msra.mxu0 0.0
    %1950 = vmatpush.xpose.msra.mxu0 0.0
    %1951 = vmatpush.xpose.msra.mxu0 0.0
    %1952 = vmatpush.xpose.msra.mxu0 0.0
    %1953 = vmatpush.xpose.msra.mxu0 0.0
    %1954 = vmatpush.xpose.msra.mxu0 0.0
    %1955 = vmatpush.xpose.msra.mxu0 0.0
    %1956 = vmatpush.xpose.msra.mxu0 0.0
    %1957 = vmatpush.xpose.msra.mxu0 0.0
    %1958 = vmatpush.xpose.msra.mxu0 0.0
    %1959 = vmatpush.xpose.msra.mxu0 0.0
    %1960 = vmatpush.xpose.msra.mxu0 0.0
    %1961 = vmatpush.xpose.msra.mxu0 %v1944
    %1962 = vmatmul.f32.gmra.mxu0 %v1941
    %v1963 = vpop.f32.mrf.mxu0
    %v1964 = vadd.f32 0.0, %v1963
    %1965 = vdwg.mxu0
    %v1967 = vsel %vm1861, %v1468, 0
    %v1970 = vsel %vm1861, %v1634, 0
    %1972 = vmatpush.xpose.msra.mxu0 0.0
    %1973 = vmatpush.xpose.msra.mxu0 0.0
    %1974 = vmatpush.xpose.msra.mxu0 0.0
    %1975 = vmatpush.xpose.msra.mxu0 0.0
    %1976 = vmatpush.xpose.msra.mxu0 0.0
    %1977 = vmatpush.xpose.msra.mxu0 0.0
    %1978 = vmatpush.xpose.msra.mxu0 0.0
    %1979 = vmatpush.xpose.msra.mxu0 0.0
    %1980 = vmatpush.xpose.msra.mxu0 0.0
    %1981 = vmatpush.xpose.msra.mxu0 0.0
    %1982 = vmatpush.xpose.msra.mxu0 0.0
    %1983 = vmatpush.xpose.msra.mxu0 0.0
    %1984 = vmatpush.xpose.msra.mxu0 0.0
    %1985 = vmatpush.xpose.msra.mxu0 0.0
    %1986 = vmatpush.xpose.msra.mxu0 0.0
    %1987 = vmatpush.xpose.msra.mxu0 %v1970
    %1988 = vmatmul.f32.gmra.mxu0 %v1967
    %v1989 = vpop.f32.mrf.mxu0
    %v1990 = vadd.f32 0.0, %v1989
    %1991 = vdwg.mxu0
    %v1993 = vsel %vm1861, %v1470, 0
    %v1996 = vsel %vm1861, %v1636, 0
    %1998 = vmatpush.xpose.msra.mxu0 0.0
    %1999 = vmatpush.xpose.msra.mxu0 0.0
    %2000 = vmatpush.xpose.msra.mxu0 0.0
    %2001 = vmatpush.xpose.msra.mxu0 0.0
    %2002 = vmatpush.xpose.msra.mxu0 0.0
    %2003 = vmatpush.xpose.msra.mxu0 0.0
    %2004 = vmatpush.xpose.msra.mxu0 0.0
    %2005 = vmatpush.xpose.msra.mxu0 0.0
    %2006 = vmatpush.xpose.msra.mxu0 0.0
    %2007 = vmatpush.xpose.msra.mxu0 0.0
    %2008 = vmatpush.xpose.msra.mxu0 0.0
    %2009 = vmatpush.xpose.msra.mxu0 0.0
    %2010 = vmatpush.xpose.msra.mxu0 0.0
    %2011 = vmatpush.xpose.msra.mxu0 0.0
    %2012 = vmatpush.xpose.msra.mxu0 0.0
    %2013 = vmatpush.xpose.msra.mxu0 %v1996
    %2014 = vmatmul.f32.gmra.mxu0 %v1993
    %v2015 = vpop.f32.mrf.mxu0
    %v2016 = vadd.f32 0.0, %v2015
    %2017 = vdwg.mxu0
    %v2019 = vsel %vm1861, %v1472, 0
    %v2022 = vsel %vm1861, %v1638, 0
    %2024 = vmatpush.xpose.msra.mxu0 0.0
    %2025 = vmatpush.xpose.msra.mxu0 0.0
    %2026 = vmatpush.xpose.msra.mxu0 0.0
    %2027 = vmatpush.xpose.msra.mxu0 0.0
    %2028 = vmatpush.xpose.msra.mxu0 0.0
    %2029 = vmatpush.xpose.msra.mxu0 0.0
    %2030 = vmatpush.xpose.msra.mxu0 0.0
    %2031 = vmatpush.xpose.msra.mxu0 0.0
    %2032 = vmatpush.xpose.msra.mxu0 0.0
    %2033 = vmatpush.xpose.msra.mxu0 0.0
    %2034 = vmatpush.xpose.msra.mxu0 0.0
    %2035 = vmatpush.xpose.msra.mxu0 0.0
    %2036 = vmatpush.xpose.msra.mxu0 0.0
    %2037 = vmatpush.xpose.msra.mxu0 0.0
    %2038 = vmatpush.xpose.msra.mxu0 0.0
    %2039 = vmatpush.xpose.msra.mxu0 %v2022
    %2040 = vmatmul.f32.gmra.mxu0 %v2019
    %v2041 = vpop.f32.mrf.mxu0
    %v2042 = vadd.f32 0.0, %v2041
    %2043 = vdwg.mxu0
    %v2045 = vsel %vm1861, %v1474, 0
    %v2048 = vsel %vm1861, %v1640, 0
    %2050 = vmatpush.xpose.msra.mxu0 0.0
    %2051 = vmatpush.xpose.msra.mxu0 0.0
    %2052 = vmatpush.xpose.msra.mxu0 0.0
    %2053 = vmatpush.xpose.msra.mxu0 0.0
    %2054 = vmatpush.xpose.msra.mxu0 0.0
    %2055 = vmatpush.xpose.msra.mxu0 0.0
    %2056 = vmatpush.xpose.msra.mxu0 0.0
    %2057 = vmatpush.xpose.msra.mxu0 0.0
    %2058 = vmatpush.xpose.msra.mxu0 0.0
    %2059 = vmatpush.xpose.msra.mxu0 0.0
    %2060 = vmatpush.xpose.msra.mxu0 0.0
    %2061 = vmatpush.xpose.msra.mxu0 0.0
    %2062 = vmatpush.xpose.msra.mxu0 0.0
    %2063 = vmatpush.xpose.msra.mxu0 0.0
    %2064 = vmatpush.xpose.msra.mxu0 0.0
    %2065 = vmatpush.xpose.msra.mxu0 %v2048
    %2066 = vmatmul.f32.gmra.mxu0 %v2045
    %v2067 = vpop.f32.mrf.mxu0
    %v2068 = vadd.f32 0.0, %v2067
    %2069 = vdwg.mxu0
    %v2071 = vsel %vm1861, %v1522, 0
    %v2074 = vsel %vm1861, %v1688, 0
    %2076 = vmatpush.xpose.msra.mxu0 0.0
    %2077 = vmatpush.xpose.msra.mxu0 0.0
    %2078 = vmatpush.xpose.msra.mxu0 0.0
    %2079 = vmatpush.xpose.msra.mxu0 0.0
    %2080 = vmatpush.xpose.msra.mxu0 0.0
    %2081 = vmatpush.xpose.msra.mxu0 0.0
    %2082 = vmatpush.xpose.msra.mxu0 0.0
    %2083 = vmatpush.xpose.msra.mxu0 0.0
    %2084 = vmatpush.xpose.msra.mxu0 0.0
    %2085 = vmatpush.xpose.msra.mxu0 0.0
    %2086 = vmatpush.xpose.msra.mxu0 0.0
    %2087 = vmatpush.xpose.msra.mxu0 0.0
    %2088 = vmatpush.xpose.msra.mxu0 0.0
    %2089 = vmatpush.xpose.msra.mxu0 0.0
    %2090 = vmatpush.xpose.msra.mxu0 0.0
    %2091 = vmatpush.xpose.msra.mxu0 %v2074
    %2092 = vmatmul.f32.gmra.mxu0 %v2071
    %v2093 = vpop.f32.mrf.mxu0
    %v2094 = vadd.f32 0.0, %v2093
    %2095 = vdwg.mxu0
    %v2097 = vsel %vm1861, %v1524, 0
    %v2100 = vsel %vm1861, %v1690, 0
    %2102 = vmatpush.xpose.msra.mxu0 0.0
    %2103 = vmatpush.xpose.msra.mxu0 0.0
    %2104 = vmatpush.xpose.msra.mxu0 0.0
    %2105 = vmatpush.xpose.msra.mxu0 0.0
    %2106 = vmatpush.xpose.msra.mxu0 0.0
    %2107 = vmatpush.xpose.msra.mxu0 0.0
    %2108 = vmatpush.xpose.msra.mxu0 0.0
    %2109 = vmatpush.xpose.msra.mxu0 0.0
    %2110 = vmatpush.xpose.msra.mxu0 0.0
    %2111 = vmatpush.xpose.msra.mxu0 0.0
    %2112 = vmatpush.xpose.msra.mxu0 0.0
    %2113 = vmatpush.xpose.msra.mxu0 0.0
    %2114 = vmatpush.xpose.msra.mxu0 0.0
    %2115 = vmatpush.xpose.msra.mxu0 0.0
    %2116 = vmatpush.xpose.msra.mxu0 0.0
    %2117 = vmatpush.xpose.msra.mxu0 %v2100
    %2118 = vmatmul.f32.gmra.mxu0 %v2097
    %v2119 = vpop.f32.mrf.mxu0
    %v2120 = vadd.f32 0.0, %v2119
    %2121 = vdwg.mxu0
    %v2123 = vsel %vm1861, %v1526, 0
    %v2126 = vsel %vm1861, %v1692, 0
    %2128 = vmatpush.xpose.msra.mxu0 0.0
    %2129 = vmatpush.xpose.msra.mxu0 0.0
    %2130 = vmatpush.xpose.msra.mxu0 0.0
    %2131 = vmatpush.xpose.msra.mxu0 0.0
    %2132 = vmatpush.xpose.msra.mxu0 0.0
    %2133 = vmatpush.xpose.msra.mxu0 0.0
    %2134 = vmatpush.xpose.msra.mxu0 0.0
    %2135 = vmatpush.xpose.msra.mxu0 0.0
    %2136 = vmatpush.xpose.msra.mxu0 0.0
    %2137 = vmatpush.xpose.msra.mxu0 0.0
    %2138 = vmatpush.xpose.msra.mxu0 0.0
    %2139 = vmatpush.xpose.msra.mxu0 0.0
    %2140 = vmatpush.xpose.msra.mxu0 0.0
    %2141 = vmatpush.xpose.msra.mxu0 0.0
    %2142 = vmatpush.xpose.msra.mxu0 0.0
    %2143 = vmatpush.xpose.msra.mxu0 %v2126
    %2144 = vmatmul.f32.gmra.mxu0 %v2123
    %v2145 = vpop.f32.mrf.mxu0
    %v2146 = vadd.f32 0.0, %v2145
    %2147 = vdwg.mxu0
    %v2149 = vsel %vm1861, %v1528, 0
    %v2152 = vsel %vm1861, %v1694, 0
    %2154 = vmatpush.xpose.msra.mxu0 0.0
    %2155 = vmatpush.xpose.msra.mxu0 0.0
    %2156 = vmatpush.xpose.msra.mxu0 0.0
    %2157 = vmatpush.xpose.msra.mxu0 0.0
    %2158 = vmatpush.xpose.msra.mxu0 0.0
    %2159 = vmatpush.xpose.msra.mxu0 0.0
    %2160 = vmatpush.xpose.msra.mxu0 0.0
    %2161 = vmatpush.xpose.msra.mxu0 0.0
    %2162 = vmatpush.xpose.msra.mxu0 0.0
    %2163 = vmatpush.xpose.msra.mxu0 0.0
    %2164 = vmatpush.xpose.msra.mxu0 0.0
    %2165 = vmatpush.xpose.msra.mxu0 0.0
    %2166 = vmatpush.xpose.msra.mxu0 0.0
    %2167 = vmatpush.xpose.msra.mxu0 0.0
    %2168 = vmatpush.xpose.msra.mxu0 0.0
    %2169 = vmatpush.xpose.msra.mxu0 %v2152
    %2170 = vmatmul.f32.gmra.mxu0 %v2149
    %v2171 = vpop.f32.mrf.mxu0
    %v2172 = vadd.f32 0.0, %v2171
    %2173 = vdwg.mxu0
    %v2174 = vmul.f32 %v1886, 0.125
    %v2175 = vmul.f32 %v1912, 0.125
    %v2176 = vmul.f32 %v1938, 0.125
    %v2177 = vmul.f32 %v1964, 0.125
    %v2178 = vmul.f32 %v1990, 0.125
    %v2179 = vmul.f32 %v2016, 0.125
    %v2180 = vmul.f32 %v2042, 0.125
    %v2181 = vmul.f32 %v2068, 0.125
    %v2182 = vmul.f32 %v2094, 0.125
    %v2183 = vmul.f32 %v2120, 0.125
    %v2184 = vmul.f32 %v2146, 0.125
    %v2185 = vmul.f32 %v2172, 0.125
    %v2186 = vld [vmem:[%s1] sm:$0xff]
    %v2187 = vadd.f32 %v2174, %v2186
    %v2188 = vadd.f32 %v2175, %v2186
    %v2189 = vadd.f32 %v2176, %v2186
    %v2190 = vadd.f32 %v2177, %v2186
    %v2191 = vadd.f32 %v2178, %v2186
    %v2192 = vadd.f32 %v2179, %v2186
    %v2193 = vadd.f32 %v2180, %v2186
    %v2194 = vadd.f32 %v2181, %v2186
    %v2195 = vadd.f32 %v2182, %v2186
    %v2196 = vadd.f32 %v2183, %v2186
    %v2197 = vadd.f32 %v2184, %v2186
    %v2198 = vadd.f32 %v2185, %v2186
    %vm2199 = vcmask 64512
    %v2200 = vsel %vm2199, %v2187, -inf
    %2201 = vmax.xlane.f32.xlu0 %v2200
    %v2202 = vpop.xlane.xlu0 %2201
    %v2203 = vsel %vm2199, %v2188, -inf
    %2204 = vmax.xlane.f32.xlu0 %v2203
    %v2205 = vpop.xlane.xlu0 %2204
    %v2206 = vsel %vm2199, %v2189, -inf
    %2207 = vmax.xlane.f32.xlu0 %v2206
    %v2208 = vpop.xlane.xlu0 %2207
    %v2209 = vsel %vm2199, %v2190, -inf
    %2210 = vmax.xlane.f32.xlu0 %v2209
    %v2211 = vpop.xlane.xlu0 %2210
    %v2212 = vsel %vm2199, %v2191, -inf
    %2213 = vmax.xlane.f32.xlu0 %v2212
    %v2214 = vpop.xlane.xlu0 %2213
    %v2215 = vsel %vm2199, %v2192, -inf
    %2216 = vmax.xlane.f32.xlu0 %v2215
    %v2217 = vpop.xlane.xlu0 %2216
    %v2218 = vsel %vm2199, %v2193, -inf
    %2219 = vmax.xlane.f32.xlu0 %v2218
    %v2220 = vpop.xlane.xlu0 %2219
    %v2221 = vsel %vm2199, %v2194, -inf
    %2222 = vmax.xlane.f32.xlu0 %v2221
    %v2223 = vpop.xlane.xlu0 %2222
    %v2224 = vsel %vm2199, %v2195, -inf
    %2225 = vmax.xlane.f32.xlu0 %v2224
    %v2226 = vpop.xlane.xlu0 %2225
    %v2227 = vsel %vm2199, %v2196, -inf
    %2228 = vmax.xlane.f32.xlu0 %v2227
    %v2229 = vpop.xlane.xlu0 %2228
    %v2230 = vsel %vm2199, %v2197, -inf
    %2231 = vmax.xlane.f32.xlu0 %v2230
    %v2232 = vpop.xlane.xlu0 %2231
    %v2233 = vsel %vm2199, %v2198, -inf
    %2234 = vmax.xlane.f32.xlu0 %v2233
    %v2235 = vpop.xlane.xlu0 %2234
    %v2236 = vsub.f32 %v2187, %v2202
    %v2237 = vsub.f32 %v2188, %v2205
    %v2238 = vsub.f32 %v2189, %v2208
    %v2239 = vsub.f32 %v2190, %v2211
    %v2240 = vsub.f32 %v2191, %v2214
    %v2241 = vsub.f32 %v2192, %v2217
    %v2242 = vsub.f32 %v2193, %v2220
    %v2243 = vsub.f32 %v2194, %v2223
    %v2244 = vsub.f32 %v2195, %v2226
    %v2245 = vsub.f32 %v2196, %v2229
    %v2246 = vsub.f32 %v2197, %v2232
    %v2247 = vsub.f32 %v2198, %v2235
    %v2248 = vmul.f32 %v2236, 1.442695
    %v2249 = vpow.pop %v2248
    %v2250 = vmul.f32 %v2237, 1.442695
    %v2251 = vpow.pop %v2250
    %v2252 = vmul.f32 %v2238, 1.442695
    %v2253 = vpow.pop %v2252
    %v2254 = vmul.f32 %v2239, 1.442695
    %v2255 = vpow.pop %v2254
    %v2256 = vmul.f32 %v2240, 1.442695
    %v2257 = vpow.pop %v2256
    %v2258 = vmul.f32 %v2241, 1.442695
    %v2259 = vpow.pop %v2258
    %v2260 = vmul.f32 %v2242, 1.442695
    %v2261 = vpow.pop %v2260
    %v2262 = vmul.f32 %v2243, 1.442695
    %v2263 = vpow.pop %v2262
    %v2264 = vmul.f32 %v2244, 1.442695
    %v2265 = vpow.pop %v2264
    %v2266 = vmul.f32 %v2245, 1.442695
    %v2267 = vpow.pop %v2266
    %v2268 = vmul.f32 %v2246, 1.442695
    %v2269 = vpow.pop %v2268
    %v2270 = vmul.f32 %v2247, 1.442695
    %v2271 = vpow.pop %v2270
    %v2272 = vsel %vm2199, %v2249, 0.0
    %2273 = vadd.xlane.f32.xlu0 %v2272
    %v2274 = vpop.xlane.xlu0 %2273
    %v2275 = vsel %vm2199, %v2251, 0.0
    %2276 = vadd.xlane.f32.xlu0 %v2275
    %v2277 = vpop.xlane.xlu0 %2276
    %v2278 = vsel %vm2199, %v2253, 0.0
    %2279 = vadd.xlane.f32.xlu0 %v2278
    %v2280 = vpop.xlane.xlu0 %2279
    %v2281 = vsel %vm2199, %v2255, 0.0
    %2282 = vadd.xlane.f32.xlu0 %v2281
    %v2283 = vpop.xlane.xlu0 %2282
    %v2284 = vsel %vm2199, %v2257, 0.0
    %2285 = vadd.xlane.f32.xlu0 %v2284
    %v2286 = vpop.xlane.xlu0 %2285
    %v2287 = vsel %vm2199, %v2259, 0.0
    %2288 = vadd.xlane.f32.xlu0 %v2287
    %v2289 = vpop.xlane.xlu0 %2288
    %v2290 = vsel %vm2199, %v2261, 0.0
    %2291 = vadd.xlane.f32.xlu0 %v2290
    %v2292 = vpop.xlane.xlu0 %2291
    %v2293 = vsel %vm2199, %v2263, 0.0
    %2294 = vadd.xlane.f32.xlu0 %v2293
    %v2295 = vpop.xlane.xlu0 %2294
    %v2296 = vsel %vm2199, %v2265, 0.0
    %2297 = vadd.xlane.f32.xlu0 %v2296
    %v2298 = vpop.xlane.xlu0 %2297
    %v2299 = vsel %vm2199, %v2267, 0.0
    %2300 = vadd.xlane.f32.xlu0 %v2299
    %v2301 = vpop.xlane.xlu0 %2300
    %v2302 = vsel %vm2199, %v2269, 0.0
    %2303 = vadd.xlane.f32.xlu0 %v2302
    %v2304 = vpop.xlane.xlu0 %2303
    %v2305 = vsel %vm2199, %v2271, 0.0
    %2306 = vadd.xlane.f32.xlu0 %v2305
    %v2307 = vpop.xlane.xlu0 %2306
    %v2308 = vrcp.pop %v2274
    %v2309 = vrcp.pop %v2277
    %v2310 = vrcp.pop %v2280
    %v2311 = vrcp.pop %v2283
    %v2312 = vrcp.pop %v2286
    %v2313 = vrcp.pop %v2289
    %v2314 = vrcp.pop %v2292
    %v2315 = vrcp.pop %v2295
    %v2316 = vrcp.pop %v2298
    %v2317 = vrcp.pop %v2301
    %v2318 = vrcp.pop %v2304
    %v2319 = vrcp.pop %v2307
    %v2320 = vmul.f32 %v2249, %v2308
    %v2321 = vmul.f32 %v2251, %v2309
    %v2322 = vmul.f32 %v2253, %v2310
    %v2323 = vmul.f32 %v2255, %v2311
    %v2324 = vmul.f32 %v2257, %v2312
    %v2325 = vmul.f32 %v2259, %v2313
    %v2326 = vmul.f32 %v2261, %v2314
    %v2327 = vmul.f32 %v2263, %v2315
    %v2328 = vmul.f32 %v2265, %v2316
    %v2329 = vmul.f32 %v2267, %v2317
    %v2330 = vmul.f32 %v2269, %v2318
    %v2331 = vmul.f32 %v2271, %v2319
    %2332 = vst.msk [vmem:[%s13] sm:$0xff] %vm2199, %v2320
    %2333 = vst.msk [vmem:[%s13 + $0x8] sm:$0xff] %vm2199, %v2321
    %2334 = vst.msk [vmem:[%s13 + $0x10] sm:$0xff] %vm2199, %v2322
    %2335 = vst.msk [vmem:[%s13 + $0x18] sm:$0xff] %vm2199, %v2323
    %2336 = vst.msk [vmem:[%s13 + $0x20] sm:$0xff] %vm2199, %v2324
    %2337 = vst.msk [vmem:[%s13 + $0x28] sm:$0xff] %vm2199, %v2325
    %2338 = vst.msk [vmem:[%s13 + $0x30] sm:$0xff] %vm2199, %v2326
    %2339 = vst.msk [vmem:[%s13 + $0x38] sm:$0xff] %vm2199, %v2327
    %2340 = vst.msk [vmem:[%s13 + $0x40] sm:$0xff] %vm2199, %v2328
    %2341 = vst.msk [vmem:[%s13 + $0x48] sm:$0xff] %vm2199, %v2329
    %2342 = vst.msk [vmem:[%s13 + $0x50] sm:$0xff] %vm2199, %v2330
    %2343 = vst.msk [vmem:[%s13 + $0x58] sm:$0xff] %vm2199, %v2331
    %v2345 = vsel %vm2199, %v2320, 0
    %2347 = vmatpush.msra.mxu0 0.0
    %2348 = vmatpush.msra.mxu0 0.0
    %2349 = vmatpush.msra.mxu0 0.0
    %2350 = vmatpush.msra.mxu0 0.0
    %2351 = vmatpush.msra.mxu0 0.0
    %2352 = vmatpush.msra.mxu0 0.0
    %2353 = vmatpush.msra.mxu0 0.0
    %2354 = vmatpush.msra.mxu0 0.0
    %2355 = vmatpush.msra.mxu0 0.0
    %2356 = vmatpush.msra.mxu0 0.0
    %2357 = vmatpush.msra.mxu0 0.0
    %2358 = vmatpush.msra.mxu0 0.0
    %2359 = vmatpush.msra.mxu0 0.0
    %2360 = vmatpush.msra.mxu0 0.0
    %2361 = vmatpush.msra.mxu0 0.0
    %2362 = vmatpush.msra.mxu0 %v1792
    %2363 = vmatmul.f32.gmra.mxu0 %v2345
    %v2364 = vpop.f32.mrf.mxu0
    %v2365 = vadd.f32 0.0, %v2364
    %2366 = vdwg.mxu0
    %v2368 = vsel %vm2199, %v2321, 0
    %2370 = vmatpush.msra.mxu0 0.0
    %2371 = vmatpush.msra.mxu0 0.0
    %2372 = vmatpush.msra.mxu0 0.0
    %2373 = vmatpush.msra.mxu0 0.0
    %2374 = vmatpush.msra.mxu0 0.0
    %2375 = vmatpush.msra.mxu0 0.0
    %2376 = vmatpush.msra.mxu0 0.0
    %2377 = vmatpush.msra.mxu0 0.0
    %2378 = vmatpush.msra.mxu0 0.0
    %2379 = vmatpush.msra.mxu0 0.0
    %2380 = vmatpush.msra.mxu0 0.0
    %2381 = vmatpush.msra.mxu0 0.0
    %2382 = vmatpush.msra.mxu0 0.0
    %2383 = vmatpush.msra.mxu0 0.0
    %2384 = vmatpush.msra.mxu0 0.0
    %2385 = vmatpush.msra.mxu0 %v1794
    %2386 = vmatmul.f32.gmra.mxu0 %v2368
    %v2387 = vpop.f32.mrf.mxu0
    %v2388 = vadd.f32 0.0, %v2387
    %2389 = vdwg.mxu0
    %v2391 = vsel %vm2199, %v2322, 0
    %2393 = vmatpush.msra.mxu0 0.0
    %2394 = vmatpush.msra.mxu0 0.0
    %2395 = vmatpush.msra.mxu0 0.0
    %2396 = vmatpush.msra.mxu0 0.0
    %2397 = vmatpush.msra.mxu0 0.0
    %2398 = vmatpush.msra.mxu0 0.0
    %2399 = vmatpush.msra.mxu0 0.0
    %2400 = vmatpush.msra.mxu0 0.0
    %2401 = vmatpush.msra.mxu0 0.0
    %2402 = vmatpush.msra.mxu0 0.0
    %2403 = vmatpush.msra.mxu0 0.0
    %2404 = vmatpush.msra.mxu0 0.0
    %2405 = vmatpush.msra.mxu0 0.0
    %2406 = vmatpush.msra.mxu0 0.0
    %2407 = vmatpush.msra.mxu0 0.0
    %2408 = vmatpush.msra.mxu0 %v1796
    %2409 = vmatmul.f32.gmra.mxu0 %v2391
    %v2410 = vpop.f32.mrf.mxu0
    %v2411 = vadd.f32 0.0, %v2410
    %2412 = vdwg.mxu0
    %v2414 = vsel %vm2199, %v2323, 0
    %2416 = vmatpush.msra.mxu0 0.0
    %2417 = vmatpush.msra.mxu0 0.0
    %2418 = vmatpush.msra.mxu0 0.0
    %2419 = vmatpush.msra.mxu0 0.0
    %2420 = vmatpush.msra.mxu0 0.0
    %2421 = vmatpush.msra.mxu0 0.0
    %2422 = vmatpush.msra.mxu0 0.0
    %2423 = vmatpush.msra.mxu0 0.0
    %2424 = vmatpush.msra.mxu0 0.0
    %2425 = vmatpush.msra.mxu0 0.0
    %2426 = vmatpush.msra.mxu0 0.0
    %2427 = vmatpush.msra.mxu0 0.0
    %2428 = vmatpush.msra.mxu0 0.0
    %2429 = vmatpush.msra.mxu0 0.0
    %2430 = vmatpush.msra.mxu0 0.0
    %2431 = vmatpush.msra.mxu0 %v1798
    %2432 = vmatmul.f32.gmra.mxu0 %v2414
    %v2433 = vpop.f32.mrf.mxu0
    %v2434 = vadd.f32 0.0, %v2433
    %2435 = vdwg.mxu0
    %v2437 = vsel %vm2199, %v2324, 0
    %2439 = vmatpush.msra.mxu0 0.0
    %2440 = vmatpush.msra.mxu0 0.0
    %2441 = vmatpush.msra.mxu0 0.0
    %2442 = vmatpush.msra.mxu0 0.0
    %2443 = vmatpush.msra.mxu0 0.0
    %2444 = vmatpush.msra.mxu0 0.0
    %2445 = vmatpush.msra.mxu0 0.0
    %2446 = vmatpush.msra.mxu0 0.0
    %2447 = vmatpush.msra.mxu0 0.0
    %2448 = vmatpush.msra.mxu0 0.0
    %2449 = vmatpush.msra.mxu0 0.0
    %2450 = vmatpush.msra.mxu0 0.0
    %2451 = vmatpush.msra.mxu0 0.0
    %2452 = vmatpush.msra.mxu0 0.0
    %2453 = vmatpush.msra.mxu0 0.0
    %2454 = vmatpush.msra.mxu0 %v1800
    %2455 = vmatmul.f32.gmra.mxu0 %v2437
    %v2456 = vpop.f32.mrf.mxu0
    %v2457 = vadd.f32 0.0, %v2456
    %2458 = vdwg.mxu0
    %v2460 = vsel %vm2199, %v2325, 0
    %2462 = vmatpush.msra.mxu0 0.0
    %2463 = vmatpush.msra.mxu0 0.0
    %2464 = vmatpush.msra.mxu0 0.0
    %2465 = vmatpush.msra.mxu0 0.0
    %2466 = vmatpush.msra.mxu0 0.0
    %2467 = vmatpush.msra.mxu0 0.0
    %2468 = vmatpush.msra.mxu0 0.0
    %2469 = vmatpush.msra.mxu0 0.0
    %2470 = vmatpush.msra.mxu0 0.0
    %2471 = vmatpush.msra.mxu0 0.0
    %2472 = vmatpush.msra.mxu0 0.0
    %2473 = vmatpush.msra.mxu0 0.0
    %2474 = vmatpush.msra.mxu0 0.0
    %2475 = vmatpush.msra.mxu0 0.0
    %2476 = vmatpush.msra.mxu0 0.0
    %2477 = vmatpush.msra.mxu0 %v1802
    %2478 = vmatmul.f32.gmra.mxu0 %v2460
    %v2479 = vpop.f32.mrf.mxu0
    %v2480 = vadd.f32 0.0, %v2479
    %2481 = vdwg.mxu0
    %v2483 = vsel %vm2199, %v2326, 0
    %2485 = vmatpush.msra.mxu0 0.0
    %2486 = vmatpush.msra.mxu0 0.0
    %2487 = vmatpush.msra.mxu0 0.0
    %2488 = vmatpush.msra.mxu0 0.0
    %2489 = vmatpush.msra.mxu0 0.0
    %2490 = vmatpush.msra.mxu0 0.0
    %2491 = vmatpush.msra.mxu0 0.0
    %2492 = vmatpush.msra.mxu0 0.0
    %2493 = vmatpush.msra.mxu0 0.0
    %2494 = vmatpush.msra.mxu0 0.0
    %2495 = vmatpush.msra.mxu0 0.0
    %2496 = vmatpush.msra.mxu0 0.0
    %2497 = vmatpush.msra.mxu0 0.0
    %2498 = vmatpush.msra.mxu0 0.0
    %2499 = vmatpush.msra.mxu0 0.0
    %2500 = vmatpush.msra.mxu0 %v1804
    %2501 = vmatmul.f32.gmra.mxu0 %v2483
    %v2502 = vpop.f32.mrf.mxu0
    %v2503 = vadd.f32 0.0, %v2502
    %2504 = vdwg.mxu0
    %v2506 = vsel %vm2199, %v2327, 0
    %2508 = vmatpush.msra.mxu0 0.0
    %2509 = vmatpush.msra.mxu0 0.0
    %2510 = vmatpush.msra.mxu0 0.0
    %2511 = vmatpush.msra.mxu0 0.0
    %2512 = vmatpush.msra.mxu0 0.0
    %2513 = vmatpush.msra.mxu0 0.0
    %2514 = vmatpush.msra.mxu0 0.0
    %2515 = vmatpush.msra.mxu0 0.0
    %2516 = vmatpush.msra.mxu0 0.0
    %2517 = vmatpush.msra.mxu0 0.0
    %2518 = vmatpush.msra.mxu0 0.0
    %2519 = vmatpush.msra.mxu0 0.0
    %2520 = vmatpush.msra.mxu0 0.0
    %2521 = vmatpush.msra.mxu0 0.0
    %2522 = vmatpush.msra.mxu0 0.0
    %2523 = vmatpush.msra.mxu0 %v1806
    %2524 = vmatmul.f32.gmra.mxu0 %v2506
    %v2525 = vpop.f32.mrf.mxu0
    %v2526 = vadd.f32 0.0, %v2525
    %2527 = vdwg.mxu0
    %v2529 = vsel %vm2199, %v2328, 0
    %2531 = vmatpush.msra.mxu0 0.0
    %2532 = vmatpush.msra.mxu0 0.0
    %2533 = vmatpush.msra.mxu0 0.0
    %2534 = vmatpush.msra.mxu0 0.0
    %2535 = vmatpush.msra.mxu0 0.0
    %2536 = vmatpush.msra.mxu0 0.0
    %2537 = vmatpush.msra.mxu0 0.0
    %2538 = vmatpush.msra.mxu0 0.0
    %2539 = vmatpush.msra.mxu0 0.0
    %2540 = vmatpush.msra.mxu0 0.0
    %2541 = vmatpush.msra.mxu0 0.0
    %2542 = vmatpush.msra.mxu0 0.0
    %2543 = vmatpush.msra.mxu0 0.0
    %2544 = vmatpush.msra.mxu0 0.0
    %2545 = vmatpush.msra.mxu0 0.0
    %2546 = vmatpush.msra.mxu0 %v1854
    %2547 = vmatmul.f32.gmra.mxu0 %v2529
    %v2548 = vpop.f32.mrf.mxu0
    %v2549 = vadd.f32 0.0, %v2548
    %2550 = vdwg.mxu0
    %v2552 = vsel %vm2199, %v2329, 0
    %2554 = vmatpush.msra.mxu0 0.0
    %2555 = vmatpush.msra.mxu0 0.0
    %2556 = vmatpush.msra.mxu0 0.0
    %2557 = vmatpush.msra.mxu0 0.0
    %2558 = vmatpush.msra.mxu0 0.0
    %2559 = vmatpush.msra.mxu0 0.0
    %2560 = vmatpush.msra.mxu0 0.0
    %2561 = vmatpush.msra.mxu0 0.0
    %2562 = vmatpush.msra.mxu0 0.0
    %2563 = vmatpush.msra.mxu0 0.0
    %2564 = vmatpush.msra.mxu0 0.0
    %2565 = vmatpush.msra.mxu0 0.0
    %2566 = vmatpush.msra.mxu0 0.0
    %2567 = vmatpush.msra.mxu0 0.0
    %2568 = vmatpush.msra.mxu0 0.0
    %2569 = vmatpush.msra.mxu0 %v1856
    %2570 = vmatmul.f32.gmra.mxu0 %v2552
    %v2571 = vpop.f32.mrf.mxu0
    %v2572 = vadd.f32 0.0, %v2571
    %2573 = vdwg.mxu0
    %v2575 = vsel %vm2199, %v2330, 0
    %2577 = vmatpush.msra.mxu0 0.0
    %2578 = vmatpush.msra.mxu0 0.0
    %2579 = vmatpush.msra.mxu0 0.0
    %2580 = vmatpush.msra.mxu0 0.0
    %2581 = vmatpush.msra.mxu0 0.0
    %2582 = vmatpush.msra.mxu0 0.0
    %2583 = vmatpush.msra.mxu0 0.0
    %2584 = vmatpush.msra.mxu0 0.0
    %2585 = vmatpush.msra.mxu0 0.0
    %2586 = vmatpush.msra.mxu0 0.0
    %2587 = vmatpush.msra.mxu0 0.0
    %2588 = vmatpush.msra.mxu0 0.0
    %2589 = vmatpush.msra.mxu0 0.0
    %2590 = vmatpush.msra.mxu0 0.0
    %2591 = vmatpush.msra.mxu0 0.0
    %2592 = vmatpush.msra.mxu0 %v1858
    %2593 = vmatmul.f32.gmra.mxu0 %v2575
    %v2594 = vpop.f32.mrf.mxu0
    %v2595 = vadd.f32 0.0, %v2594
    %2596 = vdwg.mxu0
    %v2598 = vsel %vm2199, %v2331, 0
    %2600 = vmatpush.msra.mxu0 0.0
    %2601 = vmatpush.msra.mxu0 0.0
    %2602 = vmatpush.msra.mxu0 0.0
    %2603 = vmatpush.msra.mxu0 0.0
    %2604 = vmatpush.msra.mxu0 0.0
    %2605 = vmatpush.msra.mxu0 0.0
    %2606 = vmatpush.msra.mxu0 0.0
    %2607 = vmatpush.msra.mxu0 0.0
    %2608 = vmatpush.msra.mxu0 0.0
    %2609 = vmatpush.msra.mxu0 0.0
    %2610 = vmatpush.msra.mxu0 0.0
    %2611 = vmatpush.msra.mxu0 0.0
    %2612 = vmatpush.msra.mxu0 0.0
    %2613 = vmatpush.msra.mxu0 0.0
    %2614 = vmatpush.msra.mxu0 0.0
    %2615 = vmatpush.msra.mxu0 %v1860
    %2616 = vmatmul.f32.gmra.mxu0 %v2598
    %v2617 = vpop.f32.mrf.mxu0
    %v2618 = vadd.f32 0.0, %v2617
    %2619 = vdwg.mxu0
    %v2621 = vsel %vm1861, %v2365, 0
    %2623 = vmatpush.msra.mxu0 0.0
    %2624 = vmatpush.msra.mxu0 0.0
    %2625 = vmatpush.msra.mxu0 0.0
    %2626 = vmatpush.msra.mxu0 0.0
    %2627 = vmatpush.msra.mxu0 0.0
    %2628 = vmatpush.msra.mxu0 0.0
    %2629 = vmatpush.msra.mxu0 0.0
    %2630 = vmatpush.msra.mxu0 0.0
    %2631 = vmatpush.msra.mxu0 %v697
    %2632 = vmatpush.msra.mxu0 %v696
    %2633 = vmatpush.msra.mxu0 %v695
    %2634 = vmatpush.msra.mxu0 %v694
    %2635 = vmatpush.msra.mxu0 %v693
    %2636 = vmatpush.msra.mxu0 %v692
    %2637 = vmatpush.msra.mxu0 %v691
    %2638 = vmatpush.msra.mxu0 %v690
    %2639 = vmatmul.f32.gmra.mxu0 %v2621
    %v2640 = vpop.f32.mrf.mxu0
    %v2641 = vadd.f32 0.0, %v2640
    %2642 = vdwg.mxu0
    %v2644 = vsel %vm1861, %v2388, 0
    %2646 = vmatpush.msra.mxu0 0.0
    %2647 = vmatpush.msra.mxu0 0.0
    %2648 = vmatpush.msra.mxu0 0.0
    %2649 = vmatpush.msra.mxu0 0.0
    %2650 = vmatpush.msra.mxu0 0.0
    %2651 = vmatpush.msra.mxu0 0.0
    %2652 = vmatpush.msra.mxu0 0.0
    %2653 = vmatpush.msra.mxu0 0.0
    %2654 = vmatpush.msra.mxu0 %v705
    %2655 = vmatpush.msra.mxu0 %v704
    %2656 = vmatpush.msra.mxu0 %v703
    %2657 = vmatpush.msra.mxu0 %v702
    %2658 = vmatpush.msra.mxu0 %v701
    %2659 = vmatpush.msra.mxu0 %v700
    %2660 = vmatpush.msra.mxu0 %v699
    %2661 = vmatpush.msra.mxu0 %v698
    %2662 = vmatmul.f32.gmra.mxu0 %v2644
    %v2663 = vpop.f32.mrf.mxu0
    %v2664 = vadd.f32 0.0, %v2663
    %2665 = vdwg.mxu0
    %v2667 = vsel %vm1861, %v2411, 0
    %2669 = vmatpush.msra.mxu0 0.0
    %2670 = vmatpush.msra.mxu0 0.0
    %2671 = vmatpush.msra.mxu0 0.0
    %2672 = vmatpush.msra.mxu0 0.0
    %2673 = vmatpush.msra.mxu0 0.0
    %2674 = vmatpush.msra.mxu0 0.0
    %2675 = vmatpush.msra.mxu0 0.0
    %2676 = vmatpush.msra.mxu0 0.0
    %2677 = vmatpush.msra.mxu0 %v713
    %2678 = vmatpush.msra.mxu0 %v712
    %2679 = vmatpush.msra.mxu0 %v711
    %2680 = vmatpush.msra.mxu0 %v710
    %2681 = vmatpush.msra.mxu0 %v709
    %2682 = vmatpush.msra.mxu0 %v708
    %2683 = vmatpush.msra.mxu0 %v707
    %2684 = vmatpush.msra.mxu0 %v706
    %2685 = vmatmul.f32.gmra.mxu0 %v2667
    %v2686 = vpop.f32.mrf.mxu0
    %v2687 = vadd.f32 0.0, %v2686
    %2688 = vdwg.mxu0
    %v2690 = vsel %vm1861, %v2434, 0
    %2692 = vmatpush.msra.mxu0 0.0
    %2693 = vmatpush.msra.mxu0 0.0
    %2694 = vmatpush.msra.mxu0 0.0
    %2695 = vmatpush.msra.mxu0 0.0
    %2696 = vmatpush.msra.mxu0 0.0
    %2697 = vmatpush.msra.mxu0 0.0
    %2698 = vmatpush.msra.mxu0 0.0
    %2699 = vmatpush.msra.mxu0 0.0
    %2700 = vmatpush.msra.mxu0 %v721
    %2701 = vmatpush.msra.mxu0 %v720
    %2702 = vmatpush.msra.mxu0 %v719
    %2703 = vmatpush.msra.mxu0 %v718
    %2704 = vmatpush.msra.mxu0 %v717
    %2705 = vmatpush.msra.mxu0 %v716
    %2706 = vmatpush.msra.mxu0 %v715
    %2707 = vmatpush.msra.mxu0 %v714
    %2708 = vmatmul.f32.gmra.mxu0 %v2690
    %v2709 = vpop.f32.mrf.mxu0
    %v2710 = vadd.f32 0.0, %v2709
    %2711 = vdwg.mxu0
    %v2713 = vsel %vm1861, %v2457, 0
    %2715 = vmatpush.msra.mxu0 0.0
    %2716 = vmatpush.msra.mxu0 0.0
    %2717 = vmatpush.msra.mxu0 0.0
    %2718 = vmatpush.msra.mxu0 0.0
    %2719 = vmatpush.msra.mxu0 0.0
    %2720 = vmatpush.msra.mxu0 0.0
    %2721 = vmatpush.msra.mxu0 0.0
    %2722 = vmatpush.msra.mxu0 0.0
    %2723 = vmatpush.msra.mxu0 %v729
    %2724 = vmatpush.msra.mxu0 %v728
    %2725 = vmatpush.msra.mxu0 %v727
    %2726 = vmatpush.msra.mxu0 %v726
    %2727 = vmatpush.msra.mxu0 %v725
    %2728 = vmatpush.msra.mxu0 %v724
    %2729 = vmatpush.msra.mxu0 %v723
    %2730 = vmatpush.msra.mxu0 %v722
    %2731 = vmatmul.f32.gmra.mxu0 %v2713
    %v2732 = vpop.f32.mrf.mxu0
    %v2733 = vadd.f32 0.0, %v2732
    %2734 = vdwg.mxu0
    %v2736 = vsel %vm1861, %v2480, 0
    %2738 = vmatpush.msra.mxu0 0.0
    %2739 = vmatpush.msra.mxu0 0.0
    %2740 = vmatpush.msra.mxu0 0.0
    %2741 = vmatpush.msra.mxu0 0.0
    %2742 = vmatpush.msra.mxu0 0.0
    %2743 = vmatpush.msra.mxu0 0.0
    %2744 = vmatpush.msra.mxu0 0.0
    %2745 = vmatpush.msra.mxu0 0.0
    %2746 = vmatpush.msra.mxu0 %v737
    %2747 = vmatpush.msra.mxu0 %v736
    %2748 = vmatpush.msra.mxu0 %v735
    %2749 = vmatpush.msra.mxu0 %v734
    %2750 = vmatpush.msra.mxu0 %v733
    %2751 = vmatpush.msra.mxu0 %v732
    %2752 = vmatpush.msra.mxu0 %v731
    %2753 = vmatpush.msra.mxu0 %v730
    %2754 = vmatmul.f32.gmra.mxu0 %v2736
    %v2755 = vpop.f32.mrf.mxu0
    %v2756 = vadd.f32 0.0, %v2755
    %2757 = vdwg.mxu0
    %v2759 = vsel %vm1861, %v2503, 0
    %2761 = vmatpush.msra.mxu0 0.0
    %2762 = vmatpush.msra.mxu0 0.0
    %2763 = vmatpush.msra.mxu0 0.0
    %2764 = vmatpush.msra.mxu0 0.0
    %2765 = vmatpush.msra.mxu0 0.0
    %2766 = vmatpush.msra.mxu0 0.0
    %2767 = vmatpush.msra.mxu0 0.0
    %2768 = vmatpush.msra.mxu0 0.0
    %2769 = vmatpush.msra.mxu0 %v745
    %2770 = vmatpush.msra.mxu0 %v744
    %2771 = vmatpush.msra.mxu0 %v743
    %2772 = vmatpush.msra.mxu0 %v742
    %2773 = vmatpush.msra.mxu0 %v741
    %2774 = vmatpush.msra.mxu0 %v740
    %2775 = vmatpush.msra.mxu0 %v739
    %2776 = vmatpush.msra.mxu0 %v738
    %2777 = vmatmul.f32.gmra.mxu0 %v2759
    %v2778 = vpop.f32.mrf.mxu0
    %v2779 = vadd.f32 0.0, %v2778
    %2780 = vdwg.mxu0
    %v2782 = vsel %vm1861, %v2526, 0
    %2784 = vmatpush.msra.mxu0 0.0
    %2785 = vmatpush.msra.mxu0 0.0
    %2786 = vmatpush.msra.mxu0 0.0
    %2787 = vmatpush.msra.mxu0 0.0
    %2788 = vmatpush.msra.mxu0 0.0
    %2789 = vmatpush.msra.mxu0 0.0
    %2790 = vmatpush.msra.mxu0 0.0
    %2791 = vmatpush.msra.mxu0 0.0
    %2792 = vmatpush.msra.mxu0 %v753
    %2793 = vmatpush.msra.mxu0 %v752
    %2794 = vmatpush.msra.mxu0 %v751
    %2795 = vmatpush.msra.mxu0 %v750
    %2796 = vmatpush.msra.mxu0 %v749
    %2797 = vmatpush.msra.mxu0 %v748
    %2798 = vmatpush.msra.mxu0 %v747
    %2799 = vmatpush.msra.mxu0 %v746
    %2800 = vmatmul.f32.gmra.mxu0 %v2782
    %v2801 = vpop.f32.mrf.mxu0
    %v2802 = vadd.f32 0.0, %v2801
    %2803 = vdwg.mxu0
    %v2805 = vsel %vm1861, %v2549, 0
    %2807 = vmatpush.msra.mxu0 0.0
    %2808 = vmatpush.msra.mxu0 0.0
    %2809 = vmatpush.msra.mxu0 0.0
    %2810 = vmatpush.msra.mxu0 0.0
    %2811 = vmatpush.msra.mxu0 0.0
    %2812 = vmatpush.msra.mxu0 0.0
    %2813 = vmatpush.msra.mxu0 0.0
    %2814 = vmatpush.msra.mxu0 0.0
    %2815 = vmatpush.msra.mxu0 %v761
    %2816 = vmatpush.msra.mxu0 %v760
    %2817 = vmatpush.msra.mxu0 %v759
    %2818 = vmatpush.msra.mxu0 %v758
    %2819 = vmatpush.msra.mxu0 %v757
    %2820 = vmatpush.msra.mxu0 %v756
    %2821 = vmatpush.msra.mxu0 %v755
    %2822 = vmatpush.msra.mxu0 %v754
    %2823 = vmatmul.f32.gmra.mxu0 %v2805
    %v2824 = vpop.f32.mrf.mxu0
    %v2825 = vadd.f32 0.0, %v2824
    %2826 = vdwg.mxu0
    %v2828 = vsel %vm1861, %v2572, 0
    %2830 = vmatpush.msra.mxu0 0.0
    %2831 = vmatpush.msra.mxu0 0.0
    %2832 = vmatpush.msra.mxu0 0.0
    %2833 = vmatpush.msra.mxu0 0.0
    %2834 = vmatpush.msra.mxu0 0.0
    %2835 = vmatpush.msra.mxu0 0.0
    %2836 = vmatpush.msra.mxu0 0.0
    %2837 = vmatpush.msra.mxu0 0.0
    %2838 = vmatpush.msra.mxu0 %v769
    %2839 = vmatpush.msra.mxu0 %v768
    %2840 = vmatpush.msra.mxu0 %v767
    %2841 = vmatpush.msra.mxu0 %v766
    %2842 = vmatpush.msra.mxu0 %v765
    %2843 = vmatpush.msra.mxu0 %v764
    %2844 = vmatpush.msra.mxu0 %v763
    %2845 = vmatpush.msra.mxu0 %v762
    %2846 = vmatmul.f32.gmra.mxu0 %v2828
    %v2847 = vpop.f32.mrf.mxu0
    %v2848 = vadd.f32 0.0, %v2847
    %2849 = vdwg.mxu0
    %v2851 = vsel %vm1861, %v2595, 0
    %2853 = vmatpush.msra.mxu0 0.0
    %2854 = vmatpush.msra.mxu0 0.0
    %2855 = vmatpush.msra.mxu0 0.0
    %2856 = vmatpush.msra.mxu0 0.0
    %2857 = vmatpush.msra.mxu0 0.0
    %2858 = vmatpush.msra.mxu0 0.0
    %2859 = vmatpush.msra.mxu0 0.0
    %2860 = vmatpush.msra.mxu0 0.0
    %2861 = vmatpush.msra.mxu0 %v777
    %2862 = vmatpush.msra.mxu0 %v776
    %2863 = vmatpush.msra.mxu0 %v775
    %2864 = vmatpush.msra.mxu0 %v774
    %2865 = vmatpush.msra.mxu0 %v773
    %2866 = vmatpush.msra.mxu0 %v772
    %2867 = vmatpush.msra.mxu0 %v771
    %2868 = vmatpush.msra.mxu0 %v770
    %2869 = vmatmul.f32.gmra.mxu0 %v2851
    %v2870 = vpop.f32.mrf.mxu0
    %v2871 = vadd.f32 0.0, %v2870
    %2872 = vdwg.mxu0
    %v2874 = vsel %vm1861, %v2618, 0
    %2876 = vmatpush.msra.mxu0 0.0
    %2877 = vmatpush.msra.mxu0 0.0
    %2878 = vmatpush.msra.mxu0 0.0
    %2879 = vmatpush.msra.mxu0 0.0
    %2880 = vmatpush.msra.mxu0 0.0
    %2881 = vmatpush.msra.mxu0 0.0
    %2882 = vmatpush.msra.mxu0 0.0
    %2883 = vmatpush.msra.mxu0 0.0
    %2884 = vmatpush.msra.mxu0 %v785
    %2885 = vmatpush.msra.mxu0 %v784
    %2886 = vmatpush.msra.mxu0 %v783
    %2887 = vmatpush.msra.mxu0 %v782
    %2888 = vmatpush.msra.mxu0 %v781
    %2889 = vmatpush.msra.mxu0 %v780
    %2890 = vmatpush.msra.mxu0 %v779
    %2891 = vmatpush.msra.mxu0 %v778
    %2892 = vmatmul.f32.gmra.mxu0 %v2874
    %v2893 = vpop.f32.mrf.mxu0
    %v2894 = vadd.f32 0.0, %v2893
    %2895 = vdwg.mxu0
    %v2896 = vsel %vm214, %v2641, 0.0
    %v2897 = vsel %vm214, %v2664, 0.0
    %v2898 = vadd.f32 %v2896, %v2897
    %v2899 = vsel %vm214, %v2687, 0.0
    %v2900 = vadd.f32 %v2898, %v2899
    %v2901 = vsel %vm214, %v2710, 0.0
    %v2902 = vadd.f32 %v2900, %v2901
    %v2903 = vsel %vm214, %v2733, 0.0
    %v2904 = vadd.f32 %v2902, %v2903
    %v2905 = vsel %vm214, %v2756, 0.0
    %v2906 = vadd.f32 %v2904, %v2905
    %v2907 = vsel %vm214, %v2779, 0.0
    %v2908 = vadd.f32 %v2906, %v2907
    %v2909 = vsel %vm214, %v2802, 0.0
    %v2910 = vadd.f32 %v2908, %v2909
    %v2911 = vsel %vm214, %v2825, 0.0
    %v2912 = vadd.f32 %v2910, %v2911
    %v2913 = vsel %vm214, %v2848, 0.0
    %v2914 = vadd.f32 %v2912, %v2913
    %v2915 = vsel %vm214, %v2871, 0.0
    %v2916 = vadd.f32 %v2914, %v2915
    %v2917 = vsel %vm214, %v2894, 0.0
    %v2918 = vadd.f32 %v2916, %v2917
    %2920 = vrot.lane.b32.xlu0 %v297, 64
    %v2921 = vpop.permute.xlu0 %2920
    %2924 = vrot.lane.b32.xlu0 %v320, 64
    %v2925 = vpop.permute.xlu0 %2924
    %2928 = vrot.lane.b32.xlu0 %v343, 64
    %v2929 = vpop.permute.xlu0 %2928
    %2932 = vrot.lane.b32.xlu0 %v366, 64
    %v2933 = vpop.permute.xlu0 %2932
    %2936 = vrot.lane.b32.xlu0 %v389, 64
    %v2937 = vpop.permute.xlu0 %2936
    %2940 = vrot.lane.b32.xlu0 %v412, 64
    %v2941 = vpop.permute.xlu0 %2940
    %v2943 = vrot.slane %v320, 4
    %v2944 = vsel %vm811, %v2943, %v297
    %v2945 = vrot.slane %v297, 4
    %v2946 = vsel %vm811, %v320, %v2945
    %v2948 = vunpack.c.l.s4 1983009808
    %v2949 = vunpack.c.0.s8 %v2948
    %v2950 = vperm.slane %v2944, %v2949
    %v2952 = vunpack.c.l.s4 1983009808
    %v2953 = vunpack.c.0.s8 %v2952
    %v2954 = vperm.slane %v2946, %v2953
    %v2955 = vrot.slane %v2925, 4
    %v2956 = vsel %vm811, %v2955, %v2921
    %v2957 = vrot.slane %v2921, 4
    %v2958 = vsel %vm811, %v2925, %v2957
    %v2960 = vunpack.c.l.s4 1983009808
    %v2961 = vunpack.c.0.s8 %v2960
    %v2962 = vperm.slane %v2956, %v2961
    %v2964 = vunpack.c.l.s4 1983009808
    %v2965 = vunpack.c.0.s8 %v2964
    %v2966 = vperm.slane %v2958, %v2965
    %v2967 = vrot.slane %v366, 4
    %v2968 = vsel %vm811, %v2967, %v343
    %v2969 = vrot.slane %v343, 4
    %v2970 = vsel %vm811, %v366, %v2969
    %v2972 = vunpack.c.l.s4 1983009808
    %v2973 = vunpack.c.0.s8 %v2972
    %v2974 = vperm.slane %v2968, %v2973
    %v2976 = vunpack.c.l.s4 1983009808
    %v2977 = vunpack.c.0.s8 %v2976
    %v2978 = vperm.slane %v2970, %v2977
    %v2979 = vrot.slane %v2933, 4
    %v2980 = vsel %vm811, %v2979, %v2929
    %v2981 = vrot.slane %v2929, 4
    %v2982 = vsel %vm811, %v2933, %v2981
    %v2984 = vunpack.c.l.s4 1983009808
    %v2985 = vunpack.c.0.s8 %v2984
    %v2986 = vperm.slane %v2980, %v2985
    %v2988 = vunpack.c.l.s4 1983009808
    %v2989 = vunpack.c.0.s8 %v2988
    %v2990 = vperm.slane %v2982, %v2989
    %v2991 = vrot.slane %v2962, 4
    %v2992 = vsel %vm811, %v2991, %v2950
    %v2993 = vrot.slane %v2950, 4
    %v2994 = vsel %vm811, %v2962, %v2993
    %v2996 = vunpack.c.l.s4 1934713408
    %v2997 = vunpack.c.0.s8 %v2996
    %v2998 = vperm.slane %v2992, %v2997
    %v3000 = vunpack.c.l.s4 1934713408
    %v3001 = vunpack.c.0.s8 %v3000
    %v3002 = vperm.slane %v2994, %v3001
    %v3003 = vrot.slane %v2966, 4
    %v3004 = vsel %vm811, %v3003, %v2954
    %v3005 = vrot.slane %v2954, 4
    %v3006 = vsel %vm811, %v2966, %v3005
    %v3008 = vunpack.c.l.s4 1934713408
    %v3009 = vunpack.c.0.s8 %v3008
    %v3010 = vperm.slane %v3004, %v3009
    %v3012 = vunpack.c.l.s4 1934713408
    %v3013 = vunpack.c.0.s8 %v3012
    %v3014 = vperm.slane %v3006, %v3013
    %v3015 = vrot.slane %v2986, 4
    %v3016 = vsel %vm811, %v3015, %v2974
    %v3017 = vrot.slane %v2974, 4
    %v3018 = vsel %vm811, %v2986, %v3017
    %v3020 = vunpack.c.l.s4 1934713408
    %v3021 = vunpack.c.0.s8 %v3020
    %v3022 = vperm.slane %v3016, %v3021
    %v3024 = vunpack.c.l.s4 1934713408
    %v3025 = vunpack.c.0.s8 %v3024
    %v3026 = vperm.slane %v3018, %v3025
    %v3027 = vrot.slane %v2990, 4
    %v3028 = vsel %vm811, %v3027, %v2978
    %v3029 = vrot.slane %v2978, 4
    %v3030 = vsel %vm811, %v2990, %v3029
    %v3032 = vunpack.c.l.s4 1934713408
    %v3033 = vunpack.c.0.s8 %v3032
    %v3034 = vperm.slane %v3028, %v3033
    %v3036 = vunpack.c.l.s4 1934713408
    %v3037 = vunpack.c.0.s8 %v3036
    %v3038 = vperm.slane %v3030, %v3037
    %v3039 = vrot.slane %v3022, 4
    %v3040 = vsel %vm811, %v3039, %v2998
    %v3041 = vrot.slane %v2998, 4
    %v3042 = vsel %vm811, %v3022, %v3041
    %v3043 = vrot.slane %v3026, 4
    %v3044 = vsel %vm811, %v3043, %v3002
    %v3045 = vrot.slane %v3002, 4
    %v3046 = vsel %vm811, %v3026, %v3045
    %v3047 = vrot.slane %v3034, 4
    %v3048 = vsel %vm811, %v3047, %v3010
    %v3049 = vrot.slane %v3010, 4
    %v3050 = vsel %vm811, %v3034, %v3049
    %v3051 = vrot.slane %v3038, 4
    %v3052 = vsel %vm811, %v3051, %v3014
    %v3053 = vrot.slane %v3014, 4
    %v3054 = vsel %vm811, %v3038, %v3053
    %v3055 = vrot.slane %v412, 4
    %v3056 = vsel %vm811, %v3055, %v389
    %v3057 = vrot.slane %v389, 4
    %v3058 = vsel %vm811, %v412, %v3057
    %v3060 = vunpack.c.l.s4 1983009808
    %v3061 = vunpack.c.0.s8 %v3060
    %v3062 = vperm.slane %v3056, %v3061
    %v3064 = vunpack.c.l.s4 1983009808
    %v3065 = vunpack.c.0.s8 %v3064
    %v3066 = vperm.slane %v3058, %v3065
    %v3067 = vrot.slane %v2941, 4
    %v3068 = vsel %vm811, %v3067, %v2937
    %v3069 = vrot.slane %v2937, 4
    %v3070 = vsel %vm811, %v2941, %v3069
    %v3072 = vunpack.c.l.s4 1983009808
    %v3073 = vunpack.c.0.s8 %v3072
    %v3074 = vperm.slane %v3068, %v3073
    %v3076 = vunpack.c.l.s4 1983009808
    %v3077 = vunpack.c.0.s8 %v3076
    %v3078 = vperm.slane %v3070, %v3077
    %v3079 = vrot.slane %v3074, 4
    %v3080 = vsel %vm811, %v3079, %v3062
    %v3081 = vrot.slane %v3062, 4
    %v3082 = vsel %vm811, %v3074, %v3081
    %v3084 = vunpack.c.l.s4 1934713408
    %v3085 = vunpack.c.0.s8 %v3084
    %v3086 = vperm.slane %v3080, %v3085
    %v3088 = vunpack.c.l.s4 1934713408
    %v3089 = vunpack.c.0.s8 %v3088
    %v3090 = vperm.slane %v3082, %v3089
    %v3091 = vrot.slane %v3078, 4
    %v3092 = vsel %vm811, %v3091, %v3066
    %v3093 = vrot.slane %v3066, 4
    %v3094 = vsel %vm811, %v3078, %v3093
    %v3096 = vunpack.c.l.s4 1934713408
    %v3097 = vunpack.c.0.s8 %v3096
    %v3098 = vperm.slane %v3092, %v3097
    %v3100 = vunpack.c.l.s4 1934713408
    %v3101 = vunpack.c.0.s8 %v3100
    %v3102 = vperm.slane %v3094, %v3101
    %v3103 = vrot.slane %v3086, 4
    %v3104 = vsel %vm811, 0.0, %v3103
    %v3105 = vrot.slane %v3090, 4
    %v3106 = vsel %vm811, 0.0, %v3105
    %v3107 = vrot.slane %v3098, 4
    %v3108 = vsel %vm811, 0.0, %v3107
    %v3109 = vrot.slane %v3102, 4
    %v3110 = vsel %vm811, 0.0, %v3109
    %3112 = vrot.lane.b32.xlu0 %v435, 64
    %v3113 = vpop.permute.xlu0 %3112
    %3116 = vrot.lane.b32.xlu0 %v458, 64
    %v3117 = vpop.permute.xlu0 %3116
    %3120 = vrot.lane.b32.xlu0 %v481, 64
    %v3121 = vpop.permute.xlu0 %3120
    %3124 = vrot.lane.b32.xlu0 %v504, 64
    %v3125 = vpop.permute.xlu0 %3124
    %3128 = vrot.lane.b32.xlu0 %v527, 64
    %v3129 = vpop.permute.xlu0 %3128
    %3132 = vrot.lane.b32.xlu0 %v550, 64
    %v3133 = vpop.permute.xlu0 %3132
    %v3135 = vrot.slane %v458, 4
    %v3136 = vsel %vm811, %v3135, %v435
    %v3137 = vrot.slane %v435, 4
    %v3138 = vsel %vm811, %v458, %v3137
    %v3140 = vunpack.c.l.s4 1983009808
    %v3141 = vunpack.c.0.s8 %v3140
    %v3142 = vperm.slane %v3136, %v3141
    %v3144 = vunpack.c.l.s4 1983009808
    %v3145 = vunpack.c.0.s8 %v3144
    %v3146 = vperm.slane %v3138, %v3145
    %v3147 = vrot.slane %v3117, 4
    %v3148 = vsel %vm811, %v3147, %v3113
    %v3149 = vrot.slane %v3113, 4
    %v3150 = vsel %vm811, %v3117, %v3149
    %v3152 = vunpack.c.l.s4 1983009808
    %v3153 = vunpack.c.0.s8 %v3152
    %v3154 = vperm.slane %v3148, %v3153
    %v3156 = vunpack.c.l.s4 1983009808
    %v3157 = vunpack.c.0.s8 %v3156
    %v3158 = vperm.slane %v3150, %v3157
    %v3159 = vrot.slane %v504, 4
    %v3160 = vsel %vm811, %v3159, %v481
    %v3161 = vrot.slane %v481, 4
    %v3162 = vsel %vm811, %v504, %v3161
    %v3164 = vunpack.c.l.s4 1983009808
    %v3165 = vunpack.c.0.s8 %v3164
    %v3166 = vperm.slane %v3160, %v3165
    %v3168 = vunpack.c.l.s4 1983009808
    %v3169 = vunpack.c.0.s8 %v3168
    %v3170 = vperm.slane %v3162, %v3169
    %v3171 = vrot.slane %v3125, 4
    %v3172 = vsel %vm811, %v3171, %v3121
    %v3173 = vrot.slane %v3121, 4
    %v3174 = vsel %vm811, %v3125, %v3173
    %v3176 = vunpack.c.l.s4 1983009808
    %v3177 = vunpack.c.0.s8 %v3176
    %v3178 = vperm.slane %v3172, %v3177
    %v3180 = vunpack.c.l.s4 1983009808
    %v3181 = vunpack.c.0.s8 %v3180
    %v3182 = vperm.slane %v3174, %v3181
    %v3183 = vrot.slane %v3154, 4
    %v3184 = vsel %vm811, %v3183, %v3142
    %v3185 = vrot.slane %v3142, 4
    %v3186 = vsel %vm811, %v3154, %v3185
    %v3188 = vunpack.c.l.s4 1934713408
    %v3189 = vunpack.c.0.s8 %v3188
    %v3190 = vperm.slane %v3184, %v3189
    %v3192 = vunpack.c.l.s4 1934713408
    %v3193 = vunpack.c.0.s8 %v3192
    %v3194 = vperm.slane %v3186, %v3193
    %v3195 = vrot.slane %v3158, 4
    %v3196 = vsel %vm811, %v3195, %v3146
    %v3197 = vrot.slane %v3146, 4
    %v3198 = vsel %vm811, %v3158, %v3197
    %v3200 = vunpack.c.l.s4 1934713408
    %v3201 = vunpack.c.0.s8 %v3200
    %v3202 = vperm.slane %v3196, %v3201
    %v3204 = vunpack.c.l.s4 1934713408
    %v3205 = vunpack.c.0.s8 %v3204
    %v3206 = vperm.slane %v3198, %v3205
    %v3207 = vrot.slane %v3178, 4
    %v3208 = vsel %vm811, %v3207, %v3166
    %v3209 = vrot.slane %v3166, 4
    %v3210 = vsel %vm811, %v3178, %v3209
    %v3212 = vunpack.c.l.s4 1934713408
    %v3213 = vunpack.c.0.s8 %v3212
    %v3214 = vperm.slane %v3208, %v3213
    %v3216 = vunpack.c.l.s4 1934713408
    %v3217 = vunpack.c.0.s8 %v3216
    %v3218 = vperm.slane %v3210, %v3217
    %v3219 = vrot.slane %v3182, 4
    %v3220 = vsel %vm811, %v3219, %v3170
    %v3221 = vrot.slane %v3170, 4
    %v3222 = vsel %vm811, %v3182, %v3221
    %v3224 = vunpack.c.l.s4 1934713408
    %v3225 = vunpack.c.0.s8 %v3224
    %v3226 = vperm.slane %v3220, %v3225
    %v3228 = vunpack.c.l.s4 1934713408
    %v3229 = vunpack.c.0.s8 %v3228
    %v3230 = vperm.slane %v3222, %v3229
    %v3231 = vrot.slane %v3214, 4
    %v3232 = vsel %vm811, %v3231, %v3190
    %v3233 = vrot.slane %v3190, 4
    %v3234 = vsel %vm811, %v3214, %v3233
    %v3235 = vrot.slane %v3218, 4
    %v3236 = vsel %vm811, %v3235, %v3194
    %v3237 = vrot.slane %v3194, 4
    %v3238 = vsel %vm811, %v3218, %v3237
    %v3239 = vrot.slane %v3226, 4
    %v3240 = vsel %vm811, %v3239, %v3202
    %v3241 = vrot.slane %v3202, 4
    %v3242 = vsel %vm811, %v3226, %v3241
    %v3243 = vrot.slane %v3230, 4
    %v3244 = vsel %vm811, %v3243, %v3206
    %v3245 = vrot.slane %v3206, 4
    %v3246 = vsel %vm811, %v3230, %v3245
    %v3247 = vrot.slane %v550, 4
    %v3248 = vsel %vm811, %v3247, %v527
    %v3249 = vrot.slane %v527, 4
    %v3250 = vsel %vm811, %v550, %v3249
    %v3252 = vunpack.c.l.s4 1983009808
    %v3253 = vunpack.c.0.s8 %v3252
    %v3254 = vperm.slane %v3248, %v3253
    %v3256 = vunpack.c.l.s4 1983009808
    %v3257 = vunpack.c.0.s8 %v3256
    %v3258 = vperm.slane %v3250, %v3257
    %v3259 = vrot.slane %v3133, 4
    %v3260 = vsel %vm811, %v3259, %v3129
    %v3261 = vrot.slane %v3129, 4
    %v3262 = vsel %vm811, %v3133, %v3261
    %v3264 = vunpack.c.l.s4 1983009808
    %v3265 = vunpack.c.0.s8 %v3264
    %v3266 = vperm.slane %v3260, %v3265
    %v3268 = vunpack.c.l.s4 1983009808
    %v3269 = vunpack.c.0.s8 %v3268
    %v3270 = vperm.slane %v3262, %v3269
    %v3271 = vrot.slane %v3266, 4
    %v3272 = vsel %vm811, %v3271, %v3254
    %v3273 = vrot.slane %v3254, 4
    %v3274 = vsel %vm811, %v3266, %v3273
    %v3276 = vunpack.c.l.s4 1934713408
    %v3277 = vunpack.c.0.s8 %v3276
    %v3278 = vperm.slane %v3272, %v3277
    %v3280 = vunpack.c.l.s4 1934713408
    %v3281 = vunpack.c.0.s8 %v3280
    %v3282 = vperm.slane %v3274, %v3281
    %v3283 = vrot.slane %v3270, 4
    %v3284 = vsel %vm811, %v3283, %v3258
    %v3285 = vrot.slane %v3258, 4
    %v3286 = vsel %vm811, %v3270, %v3285
    %v3288 = vunpack.c.l.s4 1934713408
    %v3289 = vunpack.c.0.s8 %v3288
    %v3290 = vperm.slane %v3284, %v3289
    %v3292 = vunpack.c.l.s4 1934713408
    %v3293 = vunpack.c.0.s8 %v3292
    %v3294 = vperm.slane %v3286, %v3293
    %v3295 = vrot.slane %v3278, 4
    %v3296 = vsel %vm811, 0.0, %v3295
    %v3297 = vrot.slane %v3282, 4
    %v3298 = vsel %vm811, 0.0, %v3297
    %v3299 = vrot.slane %v3290, 4
    %v3300 = vsel %vm811, 0.0, %v3299
    %v3301 = vrot.slane %v3294, 4
    %v3302 = vsel %vm811, 0.0, %v3301
    %3304 = vrot.lane.b32.xlu0 %v573, 64
    %v3305 = vpop.permute.xlu0 %3304
    %3308 = vrot.lane.b32.xlu0 %v596, 64
    %v3309 = vpop.permute.xlu0 %3308
    %3312 = vrot.lane.b32.xlu0 %v619, 64
    %v3313 = vpop.permute.xlu0 %3312
    %3316 = vrot.lane.b32.xlu0 %v642, 64
    %v3317 = vpop.permute.xlu0 %3316
    %3320 = vrot.lane.b32.xlu0 %v665, 64
    %v3321 = vpop.permute.xlu0 %3320
    %3324 = vrot.lane.b32.xlu0 %v688, 64
    %v3325 = vpop.permute.xlu0 %3324
    %v3327 = vrot.slane %v596, 4
    %v3328 = vsel %vm811, %v3327, %v573
    %v3329 = vrot.slane %v573, 4
    %v3330 = vsel %vm811, %v596, %v3329
    %v3332 = vunpack.c.l.s4 1983009808
    %v3333 = vunpack.c.0.s8 %v3332
    %v3334 = vperm.slane %v3328, %v3333
    %v3336 = vunpack.c.l.s4 1983009808
    %v3337 = vunpack.c.0.s8 %v3336
    %v3338 = vperm.slane %v3330, %v3337
    %v3339 = vrot.slane %v3309, 4
    %v3340 = vsel %vm811, %v3339, %v3305
    %v3341 = vrot.slane %v3305, 4
    %v3342 = vsel %vm811, %v3309, %v3341
    %v3344 = vunpack.c.l.s4 1983009808
    %v3345 = vunpack.c.0.s8 %v3344
    %v3346 = vperm.slane %v3340, %v3345
    %v3348 = vunpack.c.l.s4 1983009808
    %v3349 = vunpack.c.0.s8 %v3348
    %v3350 = vperm.slane %v3342, %v3349
    %v3351 = vrot.slane %v642, 4
    %v3352 = vsel %vm811, %v3351, %v619
    %v3353 = vrot.slane %v619, 4
    %v3354 = vsel %vm811, %v642, %v3353
    %v3356 = vunpack.c.l.s4 1983009808
    %v3357 = vunpack.c.0.s8 %v3356
    %v3358 = vperm.slane %v3352, %v3357
    %v3360 = vunpack.c.l.s4 1983009808
    %v3361 = vunpack.c.0.s8 %v3360
    %v3362 = vperm.slane %v3354, %v3361
    %v3363 = vrot.slane %v3317, 4
    %v3364 = vsel %vm811, %v3363, %v3313
    %v3365 = vrot.slane %v3313, 4
    %v3366 = vsel %vm811, %v3317, %v3365
    %v3368 = vunpack.c.l.s4 1983009808
    %v3369 = vunpack.c.0.s8 %v3368
    %v3370 = vperm.slane %v3364, %v3369
    %v3372 = vunpack.c.l.s4 1983009808
    %v3373 = vunpack.c.0.s8 %v3372
    %v3374 = vperm.slane %v3366, %v3373
    %v3375 = vrot.slane %v3346, 4
    %v3376 = vsel %vm811, %v3375, %v3334
    %v3377 = vrot.slane %v3334, 4
    %v3378 = vsel %vm811, %v3346, %v3377
    %v3380 = vunpack.c.l.s4 1934713408
    %v3381 = vunpack.c.0.s8 %v3380
    %v3382 = vperm.slane %v3376, %v3381
    %v3384 = vunpack.c.l.s4 1934713408
    %v3385 = vunpack.c.0.s8 %v3384
    %v3386 = vperm.slane %v3378, %v3385
    %v3387 = vrot.slane %v3350, 4
    %v3388 = vsel %vm811, %v3387, %v3338
    %v3389 = vrot.slane %v3338, 4
    %v3390 = vsel %vm811, %v3350, %v3389
    %v3392 = vunpack.c.l.s4 1934713408
    %v3393 = vunpack.c.0.s8 %v3392
    %v3394 = vperm.slane %v3388, %v3393
    %v3396 = vunpack.c.l.s4 1934713408
    %v3397 = vunpack.c.0.s8 %v3396
    %v3398 = vperm.slane %v3390, %v3397
    %v3399 = vrot.slane %v3370, 4
    %v3400 = vsel %vm811, %v3399, %v3358
    %v3401 = vrot.slane %v3358, 4
    %v3402 = vsel %vm811, %v3370, %v3401
    %v3404 = vunpack.c.l.s4 1934713408
    %v3405 = vunpack.c.0.s8 %v3404
    %v3406 = vperm.slane %v3400, %v3405
    %v3408 = vunpack.c.l.s4 1934713408
    %v3409 = vunpack.c.0.s8 %v3408
    %v3410 = vperm.slane %v3402, %v3409
    %v3411 = vrot.slane %v3374, 4
    %v3412 = vsel %vm811, %v3411, %v3362
    %v3413 = vrot.slane %v3362, 4
    %v3414 = vsel %vm811, %v3374, %v3413
    %v3416 = vunpack.c.l.s4 1934713408
    %v3417 = vunpack.c.0.s8 %v3416
    %v3418 = vperm.slane %v3412, %v3417
    %v3420 = vunpack.c.l.s4 1934713408
    %v3421 = vunpack.c.0.s8 %v3420
    %v3422 = vperm.slane %v3414, %v3421
    %v3423 = vrot.slane %v3406, 4
    %v3424 = vsel %vm811, %v3423, %v3382
    %v3425 = vrot.slane %v3382, 4
    %v3426 = vsel %vm811, %v3406, %v3425
    %v3427 = vrot.slane %v3410, 4
    %v3428 = vsel %vm811, %v3427, %v3386
    %v3429 = vrot.slane %v3386, 4
    %v3430 = vsel %vm811, %v3410, %v3429
    %v3431 = vrot.slane %v3418, 4
    %v3432 = vsel %vm811, %v3431, %v3394
    %v3433 = vrot.slane %v3394, 4
    %v3434 = vsel %vm811, %v3418, %v3433
    %v3435 = vrot.slane %v3422, 4
    %v3436 = vsel %vm811, %v3435, %v3398
    %v3437 = vrot.slane %v3398, 4
    %v3438 = vsel %vm811, %v3422, %v3437
    %v3439 = vrot.slane %v688, 4
    %v3440 = vsel %vm811, %v3439, %v665
    %v3441 = vrot.slane %v665, 4
    %v3442 = vsel %vm811, %v688, %v3441
    %v3444 = vunpack.c.l.s4 1983009808
    %v3445 = vunpack.c.0.s8 %v3444
    %v3446 = vperm.slane %v3440, %v3445
    %v3448 = vunpack.c.l.s4 1983009808
    %v3449 = vunpack.c.0.s8 %v3448
    %v3450 = vperm.slane %v3442, %v3449
    %v3451 = vrot.slane %v3325, 4
    %v3452 = vsel %vm811, %v3451, %v3321
    %v3453 = vrot.slane %v3321, 4
    %v3454 = vsel %vm811, %v3325, %v3453
    %v3456 = vunpack.c.l.s4 1983009808
    %v3457 = vunpack.c.0.s8 %v3456
    %v3458 = vperm.slane %v3452, %v3457
    %v3460 = vunpack.c.l.s4 1983009808
    %v3461 = vunpack.c.0.s8 %v3460
    %v3462 = vperm.slane %v3454, %v3461
    %v3463 = vrot.slane %v3458, 4
    %v3464 = vsel %vm811, %v3463, %v3446
    %v3465 = vrot.slane %v3446, 4
    %v3466 = vsel %vm811, %v3458, %v3465
    %v3468 = vunpack.c.l.s4 1934713408
    %v3469 = vunpack.c.0.s8 %v3468
    %v3470 = vperm.slane %v3464, %v3469
    %v3472 = vunpack.c.l.s4 1934713408
    %v3473 = vunpack.c.0.s8 %v3472
    %v3474 = vperm.slane %v3466, %v3473
    %v3475 = vrot.slane %v3462, 4
    %v3476 = vsel %vm811, %v3475, %v3450
    %v3477 = vrot.slane %v3450, 4
    %v3478 = vsel %vm811, %v3462, %v3477
    %v3480 = vunpack.c.l.s4 1934713408
    %v3481 = vunpack.c.0.s8 %v3480
    %v3482 = vperm.slane %v3476, %v3481
    %v3484 = vunpack.c.l.s4 1934713408
    %v3485 = vunpack.c.0.s8 %v3484
    %v3486 = vperm.slane %v3478, %v3485
    %v3487 = vrot.slane %v3470, 4
    %v3488 = vsel %vm811, 0.0, %v3487
    %v3489 = vrot.slane %v3474, 4
    %v3490 = vsel %vm811, 0.0, %v3489
    %v3491 = vrot.slane %v3482, 4
    %v3492 = vsel %vm811, 0.0, %v3491
    %v3493 = vrot.slane %v3486, 4
    %v3494 = vsel %vm811, 0.0, %v3493
    %v3495 = vrot.slane %v3044, 4
    %v3496 = vsel %vm811, %v3495, %v3040
    %v3497 = vrot.slane %v3040, 4
    %v3498 = vsel %vm811, %v3044, %v3497
    %v3500 = vunpack.c.l.s4 1983009808
    %v3501 = vunpack.c.0.s8 %v3500
    %v3502 = vperm.slane %v3496, %v3501
    %v3504 = vunpack.c.l.s4 1983009808
    %v3505 = vunpack.c.0.s8 %v3504
    %v3506 = vperm.slane %v3498, %v3505
    %v3507 = vrot.slane %v3046, 4
    %v3508 = vsel %vm811, %v3507, %v3042
    %v3509 = vrot.slane %v3042, 4
    %v3510 = vsel %vm811, %v3046, %v3509
    %v3512 = vunpack.c.l.s4 1983009808
    %v3513 = vunpack.c.0.s8 %v3512
    %v3514 = vperm.slane %v3508, %v3513
    %v3516 = vunpack.c.l.s4 1983009808
    %v3517 = vunpack.c.0.s8 %v3516
    %v3518 = vperm.slane %v3510, %v3517
    %v3519 = vrot.slane %v3052, 4
    %v3520 = vsel %vm811, %v3519, %v3048
    %v3521 = vrot.slane %v3048, 4
    %v3522 = vsel %vm811, %v3052, %v3521
    %v3524 = vunpack.c.l.s4 1983009808
    %v3525 = vunpack.c.0.s8 %v3524
    %v3526 = vperm.slane %v3520, %v3525
    %v3528 = vunpack.c.l.s4 1983009808
    %v3529 = vunpack.c.0.s8 %v3528
    %v3530 = vperm.slane %v3522, %v3529
    %v3531 = vrot.slane %v3054, 4
    %v3532 = vsel %vm811, %v3531, %v3050
    %v3533 = vrot.slane %v3050, 4
    %v3534 = vsel %vm811, %v3054, %v3533
    %v3536 = vunpack.c.l.s4 1983009808
    %v3537 = vunpack.c.0.s8 %v3536
    %v3538 = vperm.slane %v3532, %v3537
    %v3540 = vunpack.c.l.s4 1983009808
    %v3541 = vunpack.c.0.s8 %v3540
    %v3542 = vperm.slane %v3534, %v3541
    %v3543 = vrot.slane %v3514, 4
    %v3544 = vsel %vm811, %v3543, %v3502
    %v3545 = vrot.slane %v3502, 4
    %v3546 = vsel %vm811, %v3514, %v3545
    %v3548 = vunpack.c.l.s4 1934713408
    %v3549 = vunpack.c.0.s8 %v3548
    %v3550 = vperm.slane %v3544, %v3549
    %v3552 = vunpack.c.l.s4 1934713408
    %v3553 = vunpack.c.0.s8 %v3552
    %v3554 = vperm.slane %v3546, %v3553
    %v3555 = vrot.slane %v3518, 4
    %v3556 = vsel %vm811, %v3555, %v3506
    %v3557 = vrot.slane %v3506, 4
    %v3558 = vsel %vm811, %v3518, %v3557
    %v3560 = vunpack.c.l.s4 1934713408
    %v3561 = vunpack.c.0.s8 %v3560
    %v3562 = vperm.slane %v3556, %v3561
    %v3564 = vunpack.c.l.s4 1934713408
    %v3565 = vunpack.c.0.s8 %v3564
    %v3566 = vperm.slane %v3558, %v3565
    %v3567 = vrot.slane %v3538, 4
    %v3568 = vsel %vm811, %v3567, %v3526
    %v3569 = vrot.slane %v3526, 4
    %v3570 = vsel %vm811, %v3538, %v3569
    %v3572 = vunpack.c.l.s4 1934713408
    %v3573 = vunpack.c.0.s8 %v3572
    %v3574 = vperm.slane %v3568, %v3573
    %v3576 = vunpack.c.l.s4 1934713408
    %v3577 = vunpack.c.0.s8 %v3576
    %v3578 = vperm.slane %v3570, %v3577
    %v3579 = vrot.slane %v3542, 4
    %v3580 = vsel %vm811, %v3579, %v3530
    %v3581 = vrot.slane %v3530, 4
    %v3582 = vsel %vm811, %v3542, %v3581
    %v3584 = vunpack.c.l.s4 1934713408
    %v3585 = vunpack.c.0.s8 %v3584
    %v3586 = vperm.slane %v3580, %v3585
    %v3588 = vunpack.c.l.s4 1934713408
    %v3589 = vunpack.c.0.s8 %v3588
    %v3590 = vperm.slane %v3582, %v3589
    %v3591 = vrot.slane %v3574, 4
    %v3592 = vsel %vm811, %v3591, %v3550
    %v3593 = vrot.slane %v3550, 4
    %v3594 = vsel %vm811, %v3574, %v3593
    %v3595 = vrot.slane %v3578, 4
    %v3596 = vsel %vm811, %v3595, %v3554
    %v3597 = vrot.slane %v3554, 4
    %v3598 = vsel %vm811, %v3578, %v3597
    %v3599 = vrot.slane %v3586, 4
    %v3600 = vsel %vm811, %v3599, %v3562
    %v3601 = vrot.slane %v3562, 4
    %v3602 = vsel %vm811, %v3586, %v3601
    %v3603 = vrot.slane %v3590, 4
    %v3604 = vsel %vm811, %v3603, %v3566
    %v3605 = vrot.slane %v3566, 4
    %v3606 = vsel %vm811, %v3590, %v3605
    %v3607 = vsel %vm811, %v3105, %v3086
    %v3609 = vunpack.c.l.s4 1983009808
    %v3610 = vunpack.c.0.s8 %v3609
    %v3611 = vperm.slane %v3607, %v3610
    %v3612 = vrot.slane %v3106, 4
    %v3613 = vsel %vm811, %v3612, %v3104
    %v3615 = vunpack.c.l.s4 1983009808
    %v3616 = vunpack.c.0.s8 %v3615
    %v3617 = vperm.slane %v3613, %v3616
    %v3618 = vsel %vm811, %v3109, %v3098
    %v3620 = vunpack.c.l.s4 1983009808
    %v3621 = vunpack.c.0.s8 %v3620
    %v3622 = vperm.slane %v3618, %v3621
    %v3623 = vrot.slane %v3110, 4
    %v3624 = vsel %vm811, %v3623, %v3108
    %v3626 = vunpack.c.l.s4 1983009808
    %v3627 = vunpack.c.0.s8 %v3626
    %v3628 = vperm.slane %v3624, %v3627
    %v3629 = vrot.slane %v3617, 4
    %v3630 = vsel %vm811, %v3629, %v3611
    %v3631 = vrot.slane %v3611, 4
    %v3632 = vsel %vm811, %v3617, %v3631
    %v3634 = vunpack.c.l.s4 1934713408
    %v3635 = vunpack.c.0.s8 %v3634
    %v3636 = vperm.slane %v3630, %v3635
    %v3638 = vunpack.c.l.s4 1934713408
    %v3639 = vunpack.c.0.s8 %v3638
    %v3640 = vperm.slane %v3632, %v3639
    %v3641 = vrot.slane %v3628, 4
    %v3642 = vsel %vm811, %v3641, %v3622
    %v3643 = vrot.slane %v3622, 4
    %v3644 = vsel %vm811, %v3628, %v3643
    %v3646 = vunpack.c.l.s4 1934713408
    %v3647 = vunpack.c.0.s8 %v3646
    %v3648 = vperm.slane %v3642, %v3647
    %v3650 = vunpack.c.l.s4 1934713408
    %v3651 = vunpack.c.0.s8 %v3650
    %v3652 = vperm.slane %v3644, %v3651
    %v3653 = vrot.slane %v3648, 4
    %v3654 = vsel %vm811, %v3653, %v3636
    %v3655 = vrot.slane %v3636, 4
    %v3656 = vsel %vm811, %v3648, %v3655
    %v3657 = vrot.slane %v3652, 4
    %v3658 = vsel %vm811, %v3657, %v3640
    %v3659 = vrot.slane %v3640, 4
    %v3660 = vsel %vm811, %v3652, %v3659
    %v3661 = vrot.slane %v3236, 4
    %v3662 = vsel %vm811, %v3661, %v3232
    %v3663 = vrot.slane %v3232, 4
    %v3664 = vsel %vm811, %v3236, %v3663
    %v3666 = vunpack.c.l.s4 1983009808
    %v3667 = vunpack.c.0.s8 %v3666
    %v3668 = vperm.slane %v3662, %v3667
    %v3670 = vunpack.c.l.s4 1983009808
    %v3671 = vunpack.c.0.s8 %v3670
    %v3672 = vperm.slane %v3664, %v3671
    %v3673 = vrot.slane %v3238, 4
    %v3674 = vsel %vm811, %v3673, %v3234
    %v3675 = vrot.slane %v3234, 4
    %v3676 = vsel %vm811, %v3238, %v3675
    %v3678 = vunpack.c.l.s4 1983009808
    %v3679 = vunpack.c.0.s8 %v3678
    %v3680 = vperm.slane %v3674, %v3679
    %v3682 = vunpack.c.l.s4 1983009808
    %v3683 = vunpack.c.0.s8 %v3682
    %v3684 = vperm.slane %v3676, %v3683
    %v3685 = vrot.slane %v3244, 4
    %v3686 = vsel %vm811, %v3685, %v3240
    %v3687 = vrot.slane %v3240, 4
    %v3688 = vsel %vm811, %v3244, %v3687
    %v3690 = vunpack.c.l.s4 1983009808
    %v3691 = vunpack.c.0.s8 %v3690
    %v3692 = vperm.slane %v3686, %v3691
    %v3694 = vunpack.c.l.s4 1983009808
    %v3695 = vunpack.c.0.s8 %v3694
    %v3696 = vperm.slane %v3688, %v3695
    %v3697 = vrot.slane %v3246, 4
    %v3698 = vsel %vm811, %v3697, %v3242
    %v3699 = vrot.slane %v3242, 4
    %v3700 = vsel %vm811, %v3246, %v3699
    %v3702 = vunpack.c.l.s4 1983009808
    %v3703 = vunpack.c.0.s8 %v3702
    %v3704 = vperm.slane %v3698, %v3703
    %v3706 = vunpack.c.l.s4 1983009808
    %v3707 = vunpack.c.0.s8 %v3706
    %v3708 = vperm.slane %v3700, %v3707
    %v3709 = vrot.slane %v3680, 4
    %v3710 = vsel %vm811, %v3709, %v3668
    %v3711 = vrot.slane %v3668, 4
    %v3712 = vsel %vm811, %v3680, %v3711
    %v3714 = vunpack.c.l.s4 1934713408
    %v3715 = vunpack.c.0.s8 %v3714
    %v3716 = vperm.slane %v3710, %v3715
    %v3718 = vunpack.c.l.s4 1934713408
    %v3719 = vunpack.c.0.s8 %v3718
    %v3720 = vperm.slane %v3712, %v3719
    %v3721 = vrot.slane %v3684, 4
    %v3722 = vsel %vm811, %v3721, %v3672
    %v3723 = vrot.slane %v3672, 4
    %v3724 = vsel %vm811, %v3684, %v3723
    %v3726 = vunpack.c.l.s4 1934713408
    %v3727 = vunpack.c.0.s8 %v3726
    %v3728 = vperm.slane %v3722, %v3727
    %v3730 = vunpack.c.l.s4 1934713408
    %v3731 = vunpack.c.0.s8 %v3730
    %v3732 = vperm.slane %v3724, %v3731
    %v3733 = vrot.slane %v3704, 4
    %v3734 = vsel %vm811, %v3733, %v3692
    %v3735 = vrot.slane %v3692, 4
    %v3736 = vsel %vm811, %v3704, %v3735
    %v3738 = vunpack.c.l.s4 1934713408
    %v3739 = vunpack.c.0.s8 %v3738
    %v3740 = vperm.slane %v3734, %v3739
    %v3742 = vunpack.c.l.s4 1934713408
    %v3743 = vunpack.c.0.s8 %v3742
    %v3744 = vperm.slane %v3736, %v3743
    %v3745 = vrot.slane %v3708, 4
    %v3746 = vsel %vm811, %v3745, %v3696
    %v3747 = vrot.slane %v3696, 4
    %v3748 = vsel %vm811, %v3708, %v3747
    %v3750 = vunpack.c.l.s4 1934713408
    %v3751 = vunpack.c.0.s8 %v3750
    %v3752 = vperm.slane %v3746, %v3751
    %v3754 = vunpack.c.l.s4 1934713408
    %v3755 = vunpack.c.0.s8 %v3754
    %v3756 = vperm.slane %v3748, %v3755
    %v3757 = vrot.slane %v3740, 4
    %v3758 = vsel %vm811, %v3757, %v3716
    %v3759 = vrot.slane %v3716, 4
    %v3760 = vsel %vm811, %v3740, %v3759
    %v3761 = vrot.slane %v3744, 4
    %v3762 = vsel %vm811, %v3761, %v3720
    %v3763 = vrot.slane %v3720, 4
    %v3764 = vsel %vm811, %v3744, %v3763
    %v3765 = vrot.slane %v3752, 4
    %v3766 = vsel %vm811, %v3765, %v3728
    %v3767 = vrot.slane %v3728, 4
    %v3768 = vsel %vm811, %v3752, %v3767
    %v3769 = vrot.slane %v3756, 4
    %v3770 = vsel %vm811, %v3769, %v3732
    %v3771 = vrot.slane %v3732, 4
    %v3772 = vsel %vm811, %v3756, %v3771
    %v3773 = vsel %vm811, %v3297, %v3278
    %v3775 = vunpack.c.l.s4 1983009808
    %v3776 = vunpack.c.0.s8 %v3775
    %v3777 = vperm.slane %v3773, %v3776
    %v3778 = vrot.slane %v3298, 4
    %v3779 = vsel %vm811, %v3778, %v3296
    %v3781 = vunpack.c.l.s4 1983009808
    %v3782 = vunpack.c.0.s8 %v3781
    %v3783 = vperm.slane %v3779, %v3782
    %v3784 = vsel %vm811, %v3301, %v3290
    %v3786 = vunpack.c.l.s4 1983009808
    %v3787 = vunpack.c.0.s8 %v3786
    %v3788 = vperm.slane %v3784, %v3787
    %v3789 = vrot.slane %v3302, 4
    %v3790 = vsel %vm811, %v3789, %v3300
    %v3792 = vunpack.c.l.s4 1983009808
    %v3793 = vunpack.c.0.s8 %v3792
    %v3794 = vperm.slane %v3790, %v3793
    %v3795 = vrot.slane %v3783, 4
    %v3796 = vsel %vm811, %v3795, %v3777
    %v3797 = vrot.slane %v3777, 4
    %v3798 = vsel %vm811, %v3783, %v3797
    %v3800 = vunpack.c.l.s4 1934713408
    %v3801 = vunpack.c.0.s8 %v3800
    %v3802 = vperm.slane %v3796, %v3801
    %v3804 = vunpack.c.l.s4 1934713408
    %v3805 = vunpack.c.0.s8 %v3804
    %v3806 = vperm.slane %v3798, %v3805
    %v3807 = vrot.slane %v3794, 4
    %v3808 = vsel %vm811, %v3807, %v3788
    %v3809 = vrot.slane %v3788, 4
    %v3810 = vsel %vm811, %v3794, %v3809
    %v3812 = vunpack.c.l.s4 1934713408
    %v3813 = vunpack.c.0.s8 %v3812
    %v3814 = vperm.slane %v3808, %v3813
    %v3816 = vunpack.c.l.s4 1934713408
    %v3817 = vunpack.c.0.s8 %v3816
    %v3818 = vperm.slane %v3810, %v3817
    %v3819 = vrot.slane %v3814, 4
    %v3820 = vsel %vm811, %v3819, %v3802
    %v3821 = vrot.slane %v3802, 4
    %v3822 = vsel %vm811, %v3814, %v3821
    %v3823 = vrot.slane %v3818, 4
    %v3824 = vsel %vm811, %v3823, %v3806
    %v3825 = vrot.slane %v3806, 4
    %v3826 = vsel %vm811, %v3818, %v3825
    %v3827 = vrot.slane %v3428, 4
    %v3828 = vsel %vm811, %v3827, %v3424
    %v3829 = vrot.slane %v3424, 4
    %v3830 = vsel %vm811, %v3428, %v3829
    %v3832 = vunpack.c.l.s4 1983009808
    %v3833 = vunpack.c.0.s8 %v3832
    %v3834 = vperm.slane %v3828, %v3833
    %v3836 = vunpack.c.l.s4 1983009808
    %v3837 = vunpack.c.0.s8 %v3836
    %v3838 = vperm.slane %v3830, %v3837
    %v3839 = vrot.slane %v3430, 4
    %v3840 = vsel %vm811, %v3839, %v3426
    %v3841 = vrot.slane %v3426, 4
    %v3842 = vsel %vm811, %v3430, %v3841
    %v3844 = vunpack.c.l.s4 1983009808
    %v3845 = vunpack.c.0.s8 %v3844
    %v3846 = vperm.slane %v3840, %v3845
    %v3848 = vunpack.c.l.s4 1983009808
    %v3849 = vunpack.c.0.s8 %v3848
    %v3850 = vperm.slane %v3842, %v3849
    %v3851 = vrot.slane %v3436, 4
    %v3852 = vsel %vm811, %v3851, %v3432
    %v3853 = vrot.slane %v3432, 4
    %v3854 = vsel %vm811, %v3436, %v3853
    %v3856 = vunpack.c.l.s4 1983009808
    %v3857 = vunpack.c.0.s8 %v3856
    %v3858 = vperm.slane %v3852, %v3857
    %v3860 = vunpack.c.l.s4 1983009808
    %v3861 = vunpack.c.0.s8 %v3860
    %v3862 = vperm.slane %v3854, %v3861
    %v3863 = vrot.slane %v3438, 4
    %v3864 = vsel %vm811, %v3863, %v3434
    %v3865 = vrot.slane %v3434, 4
    %v3866 = vsel %vm811, %v3438, %v3865
    %v3868 = vunpack.c.l.s4 1983009808
    %v3869 = vunpack.c.0.s8 %v3868
    %v3870 = vperm.slane %v3864, %v3869
    %v3872 = vunpack.c.l.s4 1983009808
    %v3873 = vunpack.c.0.s8 %v3872
    %v3874 = vperm.slane %v3866, %v3873
    %v3875 = vrot.slane %v3846, 4
    %v3876 = vsel %vm811, %v3875, %v3834
    %v3877 = vrot.slane %v3834, 4
    %v3878 = vsel %vm811, %v3846, %v3877
    %v3880 = vunpack.c.l.s4 1934713408
    %v3881 = vunpack.c.0.s8 %v3880
    %v3882 = vperm.slane %v3876, %v3881
    %v3884 = vunpack.c.l.s4 1934713408
    %v3885 = vunpack.c.0.s8 %v3884
    %v3886 = vperm.slane %v3878, %v3885
    %v3887 = vrot.slane %v3850, 4
    %v3888 = vsel %vm811, %v3887, %v3838
    %v3889 = vrot.slane %v3838, 4
    %v3890 = vsel %vm811, %v3850, %v3889
    %v3892 = vunpack.c.l.s4 1934713408
    %v3893 = vunpack.c.0.s8 %v3892
    %v3894 = vperm.slane %v3888, %v3893
    %v3896 = vunpack.c.l.s4 1934713408
    %v3897 = vunpack.c.0.s8 %v3896
    %v3898 = vperm.slane %v3890, %v3897
    %v3899 = vrot.slane %v3870, 4
    %v3900 = vsel %vm811, %v3899, %v3858
    %v3901 = vrot.slane %v3858, 4
    %v3902 = vsel %vm811, %v3870, %v3901
    %v3904 = vunpack.c.l.s4 1934713408
    %v3905 = vunpack.c.0.s8 %v3904
    %v3906 = vperm.slane %v3900, %v3905
    %v3908 = vunpack.c.l.s4 1934713408
    %v3909 = vunpack.c.0.s8 %v3908
    %v3910 = vperm.slane %v3902, %v3909
    %v3911 = vrot.slane %v3874, 4
    %v3912 = vsel %vm811, %v3911, %v3862
    %v3913 = vrot.slane %v3862, 4
    %v3914 = vsel %vm811, %v3874, %v3913
    %v3916 = vunpack.c.l.s4 1934713408
    %v3917 = vunpack.c.0.s8 %v3916
    %v3918 = vperm.slane %v3912, %v3917
    %v3920 = vunpack.c.l.s4 1934713408
    %v3921 = vunpack.c.0.s8 %v3920
    %v3922 = vperm.slane %v3914, %v3921
    %v3923 = vrot.slane %v3906, 4
    %v3924 = vsel %vm811, %v3923, %v3882
    %v3925 = vrot.slane %v3882, 4
    %v3926 = vsel %vm811, %v3906, %v3925
    %v3927 = vrot.slane %v3910, 4
    %v3928 = vsel %vm811, %v3927, %v3886
    %v3929 = vrot.slane %v3886, 4
    %v3930 = vsel %vm811, %v3910, %v3929
    %v3931 = vrot.slane %v3918, 4
    %v3932 = vsel %vm811, %v3931, %v3894
    %v3933 = vrot.slane %v3894, 4
    %v3934 = vsel %vm811, %v3918, %v3933
    %v3935 = vrot.slane %v3922, 4
    %v3936 = vsel %vm811, %v3935, %v3898
    %v3937 = vrot.slane %v3898, 4
    %v3938 = vsel %vm811, %v3922, %v3937
    %v3939 = vsel %vm811, %v3489, %v3470
    %v3941 = vunpack.c.l.s4 1983009808
    %v3942 = vunpack.c.0.s8 %v3941
    %v3943 = vperm.slane %v3939, %v3942
    %v3944 = vrot.slane %v3490, 4
    %v3945 = vsel %vm811, %v3944, %v3488
    %v3947 = vunpack.c.l.s4 1983009808
    %v3948 = vunpack.c.0.s8 %v3947
    %v3949 = vperm.slane %v3945, %v3948
    %v3950 = vsel %vm811, %v3493, %v3482
    %v3952 = vunpack.c.l.s4 1983009808
    %v3953 = vunpack.c.0.s8 %v3952
    %v3954 = vperm.slane %v3950, %v3953
    %v3955 = vrot.slane %v3494, 4
    %v3956 = vsel %vm811, %v3955, %v3492
    %v3958 = vunpack.c.l.s4 1983009808
    %v3959 = vunpack.c.0.s8 %v3958
    %v3960 = vperm.slane %v3956, %v3959
    %v3961 = vrot.slane %v3949, 4
    %v3962 = vsel %vm811, %v3961, %v3943
    %v3963 = vrot.slane %v3943, 4
    %v3964 = vsel %vm811, %v3949, %v3963
    %v3966 = vunpack.c.l.s4 1934713408
    %v3967 = vunpack.c.0.s8 %v3966
    %v3968 = vperm.slane %v3962, %v3967
    %v3970 = vunpack.c.l.s4 1934713408
    %v3971 = vunpack.c.0.s8 %v3970
    %v3972 = vperm.slane %v3964, %v3971
    %v3973 = vrot.slane %v3960, 4
    %v3974 = vsel %vm811, %v3973, %v3954
    %v3975 = vrot.slane %v3954, 4
    %v3976 = vsel %vm811, %v3960, %v3975
    %v3978 = vunpack.c.l.s4 1934713408
    %v3979 = vunpack.c.0.s8 %v3978
    %v3980 = vperm.slane %v3974, %v3979
    %v3982 = vunpack.c.l.s4 1934713408
    %v3983 = vunpack.c.0.s8 %v3982
    %v3984 = vperm.slane %v3976, %v3983
    %v3985 = vrot.slane %v3980, 4
    %v3986 = vsel %vm811, %v3985, %v3968
    %v3987 = vrot.slane %v3968, 4
    %v3988 = vsel %vm811, %v3980, %v3987
    %v3989 = vrot.slane %v3984, 4
    %v3990 = vsel %vm811, %v3989, %v3972
    %v3991 = vrot.slane %v3972, 4
    %v3992 = vsel %vm811, %v3984, %v3991
    %v3994 = vsel %vm1861, %v3592, 0
    %v3997 = vsel %vm1861, %v3758, 0
    %3999 = vmatpush.xpose.msra.mxu0 0.0
    %4000 = vmatpush.xpose.msra.mxu0 0.0
    %4001 = vmatpush.xpose.msra.mxu0 0.0
    %4002 = vmatpush.xpose.msra.mxu0 0.0
    %4003 = vmatpush.xpose.msra.mxu0 0.0
    %4004 = vmatpush.xpose.msra.mxu0 0.0
    %4005 = vmatpush.xpose.msra.mxu0 0.0
    %4006 = vmatpush.xpose.msra.mxu0 0.0
    %4007 = vmatpush.xpose.msra.mxu0 0.0
    %4008 = vmatpush.xpose.msra.mxu0 0.0
    %4009 = vmatpush.xpose.msra.mxu0 0.0
    %4010 = vmatpush.xpose.msra.mxu0 0.0
    %4011 = vmatpush.xpose.msra.mxu0 0.0
    %4012 = vmatpush.xpose.msra.mxu0 0.0
    %4013 = vmatpush.xpose.msra.mxu0 0.0
    %4014 = vmatpush.xpose.msra.mxu0 %v3997
    %4015 = vmatmul.f32.gmra.mxu0 %v3994
    %v4016 = vpop.f32.mrf.mxu0
    %v4017 = vadd.f32 0.0, %v4016
    %4018 = vdwg.mxu0
    %v4020 = vsel %vm1861, %v3594, 0
    %v4023 = vsel %vm1861, %v3760, 0
    %4025 = vmatpush.xpose.msra.mxu0 0.0
    %4026 = vmatpush.xpose.msra.mxu0 0.0
    %4027 = vmatpush.xpose.msra.mxu0 0.0
    %4028 = vmatpush.xpose.msra.mxu0 0.0
    %4029 = vmatpush.xpose.msra.mxu0 0.0
    %4030 = vmatpush.xpose.msra.mxu0 0.0
    %4031 = vmatpush.xpose.msra.mxu0 0.0
    %4032 = vmatpush.xpose.msra.mxu0 0.0
    %4033 = vmatpush.xpose.msra.mxu0 0.0
    %4034 = vmatpush.xpose.msra.mxu0 0.0
    %4035 = vmatpush.xpose.msra.mxu0 0.0
    %4036 = vmatpush.xpose.msra.mxu0 0.0
    %4037 = vmatpush.xpose.msra.mxu0 0.0
    %4038 = vmatpush.xpose.msra.mxu0 0.0
    %4039 = vmatpush.xpose.msra.mxu0 0.0
    %4040 = vmatpush.xpose.msra.mxu0 %v4023
    %4041 = vmatmul.f32.gmra.mxu0 %v4020
    %v4042 = vpop.f32.mrf.mxu0
    %v4043 = vadd.f32 0.0, %v4042
    %4044 = vdwg.mxu0
    %v4046 = vsel %vm1861, %v3596, 0
    %v4049 = vsel %vm1861, %v3762, 0
    %4051 = vmatpush.xpose.msra.mxu0 0.0
    %4052 = vmatpush.xpose.msra.mxu0 0.0
    %4053 = vmatpush.xpose.msra.mxu0 0.0
    %4054 = vmatpush.xpose.msra.mxu0 0.0
    %4055 = vmatpush.xpose.msra.mxu0 0.0
    %4056 = vmatpush.xpose.msra.mxu0 0.0
    %4057 = vmatpush.xpose.msra.mxu0 0.0
    %4058 = vmatpush.xpose.msra.mxu0 0.0
    %4059 = vmatpush.xpose.msra.mxu0 0.0
    %4060 = vmatpush.xpose.msra.mxu0 0.0
    %4061 = vmatpush.xpose.msra.mxu0 0.0
    %4062 = vmatpush.xpose.msra.mxu0 0.0
    %4063 = vmatpush.xpose.msra.mxu0 0.0
    %4064 = vmatpush.xpose.msra.mxu0 0.0
    %4065 = vmatpush.xpose.msra.mxu0 0.0
    %4066 = vmatpush.xpose.msra.mxu0 %v4049
    %4067 = vmatmul.f32.gmra.mxu0 %v4046
    %v4068 = vpop.f32.mrf.mxu0
    %v4069 = vadd.f32 0.0, %v4068
    %4070 = vdwg.mxu0
    %v4072 = vsel %vm1861, %v3598, 0
    %v4075 = vsel %vm1861, %v3764, 0
    %4077 = vmatpush.xpose.msra.mxu0 0.0
    %4078 = vmatpush.xpose.msra.mxu0 0.0
    %4079 = vmatpush.xpose.msra.mxu0 0.0
    %4080 = vmatpush.xpose.msra.mxu0 0.0
    %4081 = vmatpush.xpose.msra.mxu0 0.0
    %4082 = vmatpush.xpose.msra.mxu0 0.0
    %4083 = vmatpush.xpose.msra.mxu0 0.0
    %4084 = vmatpush.xpose.msra.mxu0 0.0
    %4085 = vmatpush.xpose.msra.mxu0 0.0
    %4086 = vmatpush.xpose.msra.mxu0 0.0
    %4087 = vmatpush.xpose.msra.mxu0 0.0
    %4088 = vmatpush.xpose.msra.mxu0 0.0
    %4089 = vmatpush.xpose.msra.mxu0 0.0
    %4090 = vmatpush.xpose.msra.mxu0 0.0
    %4091 = vmatpush.xpose.msra.mxu0 0.0
    %4092 = vmatpush.xpose.msra.mxu0 %v4075
    %4093 = vmatmul.f32.gmra.mxu0 %v4072
    %v4094 = vpop.f32.mrf.mxu0
    %v4095 = vadd.f32 0.0, %v4094
    %4096 = vdwg.mxu0
    %v4098 = vsel %vm1861, %v3600, 0
    %v4101 = vsel %vm1861, %v3766, 0
    %4103 = vmatpush.xpose.msra.mxu0 0.0
    %4104 = vmatpush.xpose.msra.mxu0 0.0
    %4105 = vmatpush.xpose.msra.mxu0 0.0
    %4106 = vmatpush.xpose.msra.mxu0 0.0
    %4107 = vmatpush.xpose.msra.mxu0 0.0
    %4108 = vmatpush.xpose.msra.mxu0 0.0
    %4109 = vmatpush.xpose.msra.mxu0 0.0
    %4110 = vmatpush.xpose.msra.mxu0 0.0
    %4111 = vmatpush.xpose.msra.mxu0 0.0
    %4112 = vmatpush.xpose.msra.mxu0 0.0
    %4113 = vmatpush.xpose.msra.mxu0 0.0
    %4114 = vmatpush.xpose.msra.mxu0 0.0
    %4115 = vmatpush.xpose.msra.mxu0 0.0
    %4116 = vmatpush.xpose.msra.mxu0 0.0
    %4117 = vmatpush.xpose.msra.mxu0 0.0
    %4118 = vmatpush.xpose.msra.mxu0 %v4101
    %4119 = vmatmul.f32.gmra.mxu0 %v4098
    %v4120 = vpop.f32.mrf.mxu0
    %v4121 = vadd.f32 0.0, %v4120
    %4122 = vdwg.mxu0
    %v4124 = vsel %vm1861, %v3602, 0
    %v4127 = vsel %vm1861, %v3768, 0
    %4129 = vmatpush.xpose.msra.mxu0 0.0
    %4130 = vmatpush.xpose.msra.mxu0 0.0
    %4131 = vmatpush.xpose.msra.mxu0 0.0
    %4132 = vmatpush.xpose.msra.mxu0 0.0
    %4133 = vmatpush.xpose.msra.mxu0 0.0
    %4134 = vmatpush.xpose.msra.mxu0 0.0
    %4135 = vmatpush.xpose.msra.mxu0 0.0
    %4136 = vmatpush.xpose.msra.mxu0 0.0
    %4137 = vmatpush.xpose.msra.mxu0 0.0
    %4138 = vmatpush.xpose.msra.mxu0 0.0
    %4139 = vmatpush.xpose.msra.mxu0 0.0
    %4140 = vmatpush.xpose.msra.mxu0 0.0
    %4141 = vmatpush.xpose.msra.mxu0 0.0
    %4142 = vmatpush.xpose.msra.mxu0 0.0
    %4143 = vmatpush.xpose.msra.mxu0 0.0
    %4144 = vmatpush.xpose.msra.mxu0 %v4127
    %4145 = vmatmul.f32.gmra.mxu0 %v4124
    %v4146 = vpop.f32.mrf.mxu0
    %v4147 = vadd.f32 0.0, %v4146
    %4148 = vdwg.mxu0
    %v4150 = vsel %vm1861, %v3604, 0
    %v4153 = vsel %vm1861, %v3770, 0
    %4155 = vmatpush.xpose.msra.mxu0 0.0
    %4156 = vmatpush.xpose.msra.mxu0 0.0
    %4157 = vmatpush.xpose.msra.mxu0 0.0
    %4158 = vmatpush.xpose.msra.mxu0 0.0
    %4159 = vmatpush.xpose.msra.mxu0 0.0
    %4160 = vmatpush.xpose.msra.mxu0 0.0
    %4161 = vmatpush.xpose.msra.mxu0 0.0
    %4162 = vmatpush.xpose.msra.mxu0 0.0
    %4163 = vmatpush.xpose.msra.mxu0 0.0
    %4164 = vmatpush.xpose.msra.mxu0 0.0
    %4165 = vmatpush.xpose.msra.mxu0 0.0
    %4166 = vmatpush.xpose.msra.mxu0 0.0
    %4167 = vmatpush.xpose.msra.mxu0 0.0
    %4168 = vmatpush.xpose.msra.mxu0 0.0
    %4169 = vmatpush.xpose.msra.mxu0 0.0
    %4170 = vmatpush.xpose.msra.mxu0 %v4153
    %4171 = vmatmul.f32.gmra.mxu0 %v4150
    %v4172 = vpop.f32.mrf.mxu0
    %v4173 = vadd.f32 0.0, %v4172
    %4174 = vdwg.mxu0
    %v4176 = vsel %vm1861, %v3606, 0
    %v4179 = vsel %vm1861, %v3772, 0
    %4181 = vmatpush.xpose.msra.mxu0 0.0
    %4182 = vmatpush.xpose.msra.mxu0 0.0
    %4183 = vmatpush.xpose.msra.mxu0 0.0
    %4184 = vmatpush.xpose.msra.mxu0 0.0
    %4185 = vmatpush.xpose.msra.mxu0 0.0
    %4186 = vmatpush.xpose.msra.mxu0 0.0
    %4187 = vmatpush.xpose.msra.mxu0 0.0
    %4188 = vmatpush.xpose.msra.mxu0 0.0
    %4189 = vmatpush.xpose.msra.mxu0 0.0
    %4190 = vmatpush.xpose.msra.mxu0 0.0
    %4191 = vmatpush.xpose.msra.mxu0 0.0
    %4192 = vmatpush.xpose.msra.mxu0 0.0
    %4193 = vmatpush.xpose.msra.mxu0 0.0
    %4194 = vmatpush.xpose.msra.mxu0 0.0
    %4195 = vmatpush.xpose.msra.mxu0 0.0
    %4196 = vmatpush.xpose.msra.mxu0 %v4179
    %4197 = vmatmul.f32.gmra.mxu0 %v4176
    %v4198 = vpop.f32.mrf.mxu0
    %v4199 = vadd.f32 0.0, %v4198
    %4200 = vdwg.mxu0
    %v4202 = vsel %vm1861, %v3654, 0
    %v4205 = vsel %vm1861, %v3820, 0
    %4207 = vmatpush.xpose.msra.mxu0 0.0
    %4208 = vmatpush.xpose.msra.mxu0 0.0
    %4209 = vmatpush.xpose.msra.mxu0 0.0
    %4210 = vmatpush.xpose.msra.mxu0 0.0
    %4211 = vmatpush.xpose.msra.mxu0 0.0
    %4212 = vmatpush.xpose.msra.mxu0 0.0
    %4213 = vmatpush.xpose.msra.mxu0 0.0
    %4214 = vmatpush.xpose.msra.mxu0 0.0
    %4215 = vmatpush.xpose.msra.mxu0 0.0
    %4216 = vmatpush.xpose.msra.mxu0 0.0
    %4217 = vmatpush.xpose.msra.mxu0 0.0
    %4218 = vmatpush.xpose.msra.mxu0 0.0
    %4219 = vmatpush.xpose.msra.mxu0 0.0
    %4220 = vmatpush.xpose.msra.mxu0 0.0
    %4221 = vmatpush.xpose.msra.mxu0 0.0
    %4222 = vmatpush.xpose.msra.mxu0 %v4205
    %4223 = vmatmul.f32.gmra.mxu0 %v4202
    %v4224 = vpop.f32.mrf.mxu0
    %v4225 = vadd.f32 0.0, %v4224
    %4226 = vdwg.mxu0
    %v4228 = vsel %vm1861, %v3656, 0
    %v4231 = vsel %vm1861, %v3822, 0
    %4233 = vmatpush.xpose.msra.mxu0 0.0
    %4234 = vmatpush.xpose.msra.mxu0 0.0
    %4235 = vmatpush.xpose.msra.mxu0 0.0
    %4236 = vmatpush.xpose.msra.mxu0 0.0
    %4237 = vmatpush.xpose.msra.mxu0 0.0
    %4238 = vmatpush.xpose.msra.mxu0 0.0
    %4239 = vmatpush.xpose.msra.mxu0 0.0
    %4240 = vmatpush.xpose.msra.mxu0 0.0
    %4241 = vmatpush.xpose.msra.mxu0 0.0
    %4242 = vmatpush.xpose.msra.mxu0 0.0
    %4243 = vmatpush.xpose.msra.mxu0 0.0
    %4244 = vmatpush.xpose.msra.mxu0 0.0
    %4245 = vmatpush.xpose.msra.mxu0 0.0
    %4246 = vmatpush.xpose.msra.mxu0 0.0
    %4247 = vmatpush.xpose.msra.mxu0 0.0
    %4248 = vmatpush.xpose.msra.mxu0 %v4231
    %4249 = vmatmul.f32.gmra.mxu0 %v4228
    %v4250 = vpop.f32.mrf.mxu0
    %v4251 = vadd.f32 0.0, %v4250
    %4252 = vdwg.mxu0
    %v4254 = vsel %vm1861, %v3658, 0
    %v4257 = vsel %vm1861, %v3824, 0
    %4259 = vmatpush.xpose.msra.mxu0 0.0
    %4260 = vmatpush.xpose.msra.mxu0 0.0
    %4261 = vmatpush.xpose.msra.mxu0 0.0
    %4262 = vmatpush.xpose.msra.mxu0 0.0
    %4263 = vmatpush.xpose.msra.mxu0 0.0
    %4264 = vmatpush.xpose.msra.mxu0 0.0
    %4265 = vmatpush.xpose.msra.mxu0 0.0
    %4266 = vmatpush.xpose.msra.mxu0 0.0
    %4267 = vmatpush.xpose.msra.mxu0 0.0
    %4268 = vmatpush.xpose.msra.mxu0 0.0
    %4269 = vmatpush.xpose.msra.mxu0 0.0
    %4270 = vmatpush.xpose.msra.mxu0 0.0
    %4271 = vmatpush.xpose.msra.mxu0 0.0
    %4272 = vmatpush.xpose.msra.mxu0 0.0
    %4273 = vmatpush.xpose.msra.mxu0 0.0
    %4274 = vmatpush.xpose.msra.mxu0 %v4257
    %4275 = vmatmul.f32.gmra.mxu0 %v4254
    %v4276 = vpop.f32.mrf.mxu0
    %v4277 = vadd.f32 0.0, %v4276
    %4278 = vdwg.mxu0
    %v4280 = vsel %vm1861, %v3660, 0
    %v4283 = vsel %vm1861, %v3826, 0
    %4285 = vmatpush.xpose.msra.mxu0 0.0
    %4286 = vmatpush.xpose.msra.mxu0 0.0
    %4287 = vmatpush.xpose.msra.mxu0 0.0
    %4288 = vmatpush.xpose.msra.mxu0 0.0
    %4289 = vmatpush.xpose.msra.mxu0 0.0
    %4290 = vmatpush.xpose.msra.mxu0 0.0
    %4291 = vmatpush.xpose.msra.mxu0 0.0
    %4292 = vmatpush.xpose.msra.mxu0 0.0
    %4293 = vmatpush.xpose.msra.mxu0 0.0
    %4294 = vmatpush.xpose.msra.mxu0 0.0
    %4295 = vmatpush.xpose.msra.mxu0 0.0
    %4296 = vmatpush.xpose.msra.mxu0 0.0
    %4297 = vmatpush.xpose.msra.mxu0 0.0
    %4298 = vmatpush.xpose.msra.mxu0 0.0
    %4299 = vmatpush.xpose.msra.mxu0 0.0
    %4300 = vmatpush.xpose.msra.mxu0 %v4283
    %4301 = vmatmul.f32.gmra.mxu0 %v4280
    %v4302 = vpop.f32.mrf.mxu0
    %v4303 = vadd.f32 0.0, %v4302
    %4304 = vdwg.mxu0
    %v4305 = vmul.f32 %v4017, 0.125
    %v4306 = vmul.f32 %v4043, 0.125
    %v4307 = vmul.f32 %v4069, 0.125
    %v4308 = vmul.f32 %v4095, 0.125
    %v4309 = vmul.f32 %v4121, 0.125
    %v4310 = vmul.f32 %v4147, 0.125
    %v4311 = vmul.f32 %v4173, 0.125
    %v4312 = vmul.f32 %v4199, 0.125
    %v4313 = vmul.f32 %v4225, 0.125
    %v4314 = vmul.f32 %v4251, 0.125
    %v4315 = vmul.f32 %v4277, 0.125
    %v4316 = vmul.f32 %v4303, 0.125
    %s4317 = scalar_lea.vmem %s1, 8
    %v4318 = vld [vmem:[%s4317] sm:$0xff]
    %v4319 = vadd.f32 %v4305, %v4318
    %v4320 = vadd.f32 %v4306, %v4318
    %v4321 = vadd.f32 %v4307, %v4318
    %v4322 = vadd.f32 %v4308, %v4318
    %v4323 = vadd.f32 %v4309, %v4318
    %v4324 = vadd.f32 %v4310, %v4318
    %v4325 = vadd.f32 %v4311, %v4318
    %v4326 = vadd.f32 %v4312, %v4318
    %v4327 = vadd.f32 %v4313, %v4318
    %v4328 = vadd.f32 %v4314, %v4318
    %v4329 = vadd.f32 %v4315, %v4318
    %v4330 = vadd.f32 %v4316, %v4318
    %v4331 = vsel %vm2199, %v4319, -inf
    %4332 = vmax.xlane.f32.xlu0 %v4331
    %v4333 = vpop.xlane.xlu0 %4332
    %v4334 = vsel %vm2199, %v4320, -inf
    %4335 = vmax.xlane.f32.xlu0 %v4334
    %v4336 = vpop.xlane.xlu0 %4335
    %v4337 = vsel %vm2199, %v4321, -inf
    %4338 = vmax.xlane.f32.xlu0 %v4337
    %v4339 = vpop.xlane.xlu0 %4338
    %v4340 = vsel %vm2199, %v4322, -inf
    %4341 = vmax.xlane.f32.xlu0 %v4340
    %v4342 = vpop.xlane.xlu0 %4341
    %v4343 = vsel %vm2199, %v4323, -inf
    %4344 = vmax.xlane.f32.xlu0 %v4343
    %v4345 = vpop.xlane.xlu0 %4344
    %v4346 = vsel %vm2199, %v4324, -inf
    %4347 = vmax.xlane.f32.xlu0 %v4346
    %v4348 = vpop.xlane.xlu0 %4347
    %v4349 = vsel %vm2199, %v4325, -inf
    %4350 = vmax.xlane.f32.xlu0 %v4349
    %v4351 = vpop.xlane.xlu0 %4350
    %v4352 = vsel %vm2199, %v4326, -inf
    %4353 = vmax.xlane.f32.xlu0 %v4352
    %v4354 = vpop.xlane.xlu0 %4353
    %v4355 = vsel %vm2199, %v4327, -inf
    %4356 = vmax.xlane.f32.xlu0 %v4355
    %v4357 = vpop.xlane.xlu0 %4356
    %v4358 = vsel %vm2199, %v4328, -inf
    %4359 = vmax.xlane.f32.xlu0 %v4358
    %v4360 = vpop.xlane.xlu0 %4359
    %v4361 = vsel %vm2199, %v4329, -inf
    %4362 = vmax.xlane.f32.xlu0 %v4361
    %v4363 = vpop.xlane.xlu0 %4362
    %v4364 = vsel %vm2199, %v4330, -inf
    %4365 = vmax.xlane.f32.xlu0 %v4364
    %v4366 = vpop.xlane.xlu0 %4365
    %v4367 = vsub.f32 %v4319, %v4333
    %v4368 = vsub.f32 %v4320, %v4336
    %v4369 = vsub.f32 %v4321, %v4339
    %v4370 = vsub.f32 %v4322, %v4342
    %v4371 = vsub.f32 %v4323, %v4345
    %v4372 = vsub.f32 %v4324, %v4348
    %v4373 = vsub.f32 %v4325, %v4351
    %v4374 = vsub.f32 %v4326, %v4354
    %v4375 = vsub.f32 %v4327, %v4357
    %v4376 = vsub.f32 %v4328, %v4360
    %v4377 = vsub.f32 %v4329, %v4363
    %v4378 = vsub.f32 %v4330, %v4366
    %v4379 = vmul.f32 %v4367, 1.442695
    %v4380 = vpow.pop %v4379
    %v4381 = vmul.f32 %v4368, 1.442695
    %v4382 = vpow.pop %v4381
    %v4383 = vmul.f32 %v4369, 1.442695
    %v4384 = vpow.pop %v4383
    %v4385 = vmul.f32 %v4370, 1.442695
    %v4386 = vpow.pop %v4385
    %v4387 = vmul.f32 %v4371, 1.442695
    %v4388 = vpow.pop %v4387
    %v4389 = vmul.f32 %v4372, 1.442695
    %v4390 = vpow.pop %v4389
    %v4391 = vmul.f32 %v4373, 1.442695
    %v4392 = vpow.pop %v4391
    %v4393 = vmul.f32 %v4374, 1.442695
    %v4394 = vpow.pop %v4393
    %v4395 = vmul.f32 %v4375, 1.442695
    %v4396 = vpow.pop %v4395
    %v4397 = vmul.f32 %v4376, 1.442695
    %v4398 = vpow.pop %v4397
    %v4399 = vmul.f32 %v4377, 1.442695
    %v4400 = vpow.pop %v4399
    %v4401 = vmul.f32 %v4378, 1.442695
    %v4402 = vpow.pop %v4401
    %v4403 = vsel %vm2199, %v4380, 0.0
    %4404 = vadd.xlane.f32.xlu0 %v4403
    %v4405 = vpop.xlane.xlu0 %4404
    %v4406 = vsel %vm2199, %v4382, 0.0
    %4407 = vadd.xlane.f32.xlu0 %v4406
    %v4408 = vpop.xlane.xlu0 %4407
    %v4409 = vsel %vm2199, %v4384, 0.0
    %4410 = vadd.xlane.f32.xlu0 %v4409
    %v4411 = vpop.xlane.xlu0 %4410
    %v4412 = vsel %vm2199, %v4386, 0.0
    %4413 = vadd.xlane.f32.xlu0 %v4412
    %v4414 = vpop.xlane.xlu0 %4413
    %v4415 = vsel %vm2199, %v4388, 0.0
    %4416 = vadd.xlane.f32.xlu0 %v4415
    %v4417 = vpop.xlane.xlu0 %4416
    %v4418 = vsel %vm2199, %v4390, 0.0
    %4419 = vadd.xlane.f32.xlu0 %v4418
    %v4420 = vpop.xlane.xlu0 %4419
    %v4421 = vsel %vm2199, %v4392, 0.0
    %4422 = vadd.xlane.f32.xlu0 %v4421
    %v4423 = vpop.xlane.xlu0 %4422
    %v4424 = vsel %vm2199, %v4394, 0.0
    %4425 = vadd.xlane.f32.xlu0 %v4424
    %v4426 = vpop.xlane.xlu0 %4425
    %v4427 = vsel %vm2199, %v4396, 0.0
    %4428 = vadd.xlane.f32.xlu0 %v4427
    %v4429 = vpop.xlane.xlu0 %4428
    %v4430 = vsel %vm2199, %v4398, 0.0
    %4431 = vadd.xlane.f32.xlu0 %v4430
    %v4432 = vpop.xlane.xlu0 %4431
    %v4433 = vsel %vm2199, %v4400, 0.0
    %4434 = vadd.xlane.f32.xlu0 %v4433
    %v4435 = vpop.xlane.xlu0 %4434
    %v4436 = vsel %vm2199, %v4402, 0.0
    %4437 = vadd.xlane.f32.xlu0 %v4436
    %v4438 = vpop.xlane.xlu0 %4437
    %v4439 = vrcp.pop %v4405
    %v4440 = vrcp.pop %v4408
    %v4441 = vrcp.pop %v4411
    %v4442 = vrcp.pop %v4414
    %v4443 = vrcp.pop %v4417
    %v4444 = vrcp.pop %v4420
    %v4445 = vrcp.pop %v4423
    %v4446 = vrcp.pop %v4426
    %v4447 = vrcp.pop %v4429
    %v4448 = vrcp.pop %v4432
    %v4449 = vrcp.pop %v4435
    %v4450 = vrcp.pop %v4438
    %v4451 = vmul.f32 %v4380, %v4439
    %v4452 = vmul.f32 %v4382, %v4440
    %v4453 = vmul.f32 %v4384, %v4441
    %v4454 = vmul.f32 %v4386, %v4442
    %v4455 = vmul.f32 %v4388, %v4443
    %v4456 = vmul.f32 %v4390, %v4444
    %v4457 = vmul.f32 %v4392, %v4445
    %v4458 = vmul.f32 %v4394, %v4446
    %v4459 = vmul.f32 %v4396, %v4447
    %v4460 = vmul.f32 %v4398, %v4448
    %v4461 = vmul.f32 %v4400, %v4449
    %v4462 = vmul.f32 %v4402, %v4450
    %s4463 = scalar_lea.vmem %s13, 96
    %4464 = vst.msk [vmem:[%s4463] sm:$0xff] %vm2199, %v4451
    %4465 = vst.msk [vmem:[%s4463 + $0x8] sm:$0xff] %vm2199, %v4452
    %4466 = vst.msk [vmem:[%s4463 + $0x10] sm:$0xff] %vm2199, %v4453
    %4467 = vst.msk [vmem:[%s4463 + $0x18] sm:$0xff] %vm2199, %v4454
    %4468 = vst.msk [vmem:[%s4463 + $0x20] sm:$0xff] %vm2199, %v4455
    %4469 = vst.msk [vmem:[%s4463 + $0x28] sm:$0xff] %vm2199, %v4456
    %4470 = vst.msk [vmem:[%s4463 + $0x30] sm:$0xff] %vm2199, %v4457
    %4471 = vst.msk [vmem:[%s4463 + $0x38] sm:$0xff] %vm2199, %v4458
    %4472 = vst.msk [vmem:[%s4463 + $0x40] sm:$0xff] %vm2199, %v4459
    %4473 = vst.msk [vmem:[%s4463 + $0x48] sm:$0xff] %vm2199, %v4460
    %4474 = vst.msk [vmem:[%s4463 + $0x50] sm:$0xff] %vm2199, %v4461
    %4475 = vst.msk [vmem:[%s4463 + $0x58] sm:$0xff] %vm2199, %v4462
    %v4477 = vsel %vm2199, %v4451, 0
    %4479 = vmatpush.msra.mxu0 0.0
    %4480 = vmatpush.msra.mxu0 0.0
    %4481 = vmatpush.msra.mxu0 0.0
    %4482 = vmatpush.msra.mxu0 0.0
    %4483 = vmatpush.msra.mxu0 0.0
    %4484 = vmatpush.msra.mxu0 0.0
    %4485 = vmatpush.msra.mxu0 0.0
    %4486 = vmatpush.msra.mxu0 0.0
    %4487 = vmatpush.msra.mxu0 0.0
    %4488 = vmatpush.msra.mxu0 0.0
    %4489 = vmatpush.msra.mxu0 0.0
    %4490 = vmatpush.msra.mxu0 0.0
    %4491 = vmatpush.msra.mxu0 0.0
    %4492 = vmatpush.msra.mxu0 0.0
    %4493 = vmatpush.msra.mxu0 0.0
    %4494 = vmatpush.msra.mxu0 %v3924
    %4495 = vmatmul.f32.gmra.mxu0 %v4477
    %v4496 = vpop.f32.mrf.mxu0
    %v4497 = vadd.f32 0.0, %v4496
    %4498 = vdwg.mxu0
    %v4500 = vsel %vm2199, %v4452, 0
    %4502 = vmatpush.msra.mxu0 0.0
    %4503 = vmatpush.msra.mxu0 0.0
    %4504 = vmatpush.msra.mxu0 0.0
    %4505 = vmatpush.msra.mxu0 0.0
    %4506 = vmatpush.msra.mxu0 0.0
    %4507 = vmatpush.msra.mxu0 0.0
    %4508 = vmatpush.msra.mxu0 0.0
    %4509 = vmatpush.msra.mxu0 0.0
    %4510 = vmatpush.msra.mxu0 0.0
    %4511 = vmatpush.msra.mxu0 0.0
    %4512 = vmatpush.msra.mxu0 0.0
    %4513 = vmatpush.msra.mxu0 0.0
    %4514 = vmatpush.msra.mxu0 0.0
    %4515 = vmatpush.msra.mxu0 0.0
    %4516 = vmatpush.msra.mxu0 0.0
    %4517 = vmatpush.msra.mxu0 %v3926
    %4518 = vmatmul.f32.gmra.mxu0 %v4500
    %v4519 = vpop.f32.mrf.mxu0
    %v4520 = vadd.f32 0.0, %v4519
    %4521 = vdwg.mxu0
    %v4523 = vsel %vm2199, %v4453, 0
    %4525 = vmatpush.msra.mxu0 0.0
    %4526 = vmatpush.msra.mxu0 0.0
    %4527 = vmatpush.msra.mxu0 0.0
    %4528 = vmatpush.msra.mxu0 0.0
    %4529 = vmatpush.msra.mxu0 0.0
    %4530 = vmatpush.msra.mxu0 0.0
    %4531 = vmatpush.msra.mxu0 0.0
    %4532 = vmatpush.msra.mxu0 0.0
    %4533 = vmatpush.msra.mxu0 0.0
    %4534 = vmatpush.msra.mxu0 0.0
    %4535 = vmatpush.msra.mxu0 0.0
    %4536 = vmatpush.msra.mxu0 0.0
    %4537 = vmatpush.msra.mxu0 0.0
    %4538 = vmatpush.msra.mxu0 0.0
    %4539 = vmatpush.msra.mxu0 0.0
    %4540 = vmatpush.msra.mxu0 %v3928
    %4541 = vmatmul.f32.gmra.mxu0 %v4523
    %v4542 = vpop.f32.mrf.mxu0
    %v4543 = vadd.f32 0.0, %v4542
    %4544 = vdwg.mxu0
    %v4546 = vsel %vm2199, %v4454, 0
    %4548 = vmatpush.msra.mxu0 0.0
    %4549 = vmatpush.msra.mxu0 0.0
    %4550 = vmatpush.msra.mxu0 0.0
    %4551 = vmatpush.msra.mxu0 0.0
    %4552 = vmatpush.msra.mxu0 0.0
    %4553 = vmatpush.msra.mxu0 0.0
    %4554 = vmatpush.msra.mxu0 0.0
    %4555 = vmatpush.msra.mxu0 0.0
    %4556 = vmatpush.msra.mxu0 0.0
    %4557 = vmatpush.msra.mxu0 0.0
    %4558 = vmatpush.msra.mxu0 0.0
    %4559 = vmatpush.msra.mxu0 0.0
    %4560 = vmatpush.msra.mxu0 0.0
    %4561 = vmatpush.msra.mxu0 0.0
    %4562 = vmatpush.msra.mxu0 0.0
    %4563 = vmatpush.msra.mxu0 %v3930
    %4564 = vmatmul.f32.gmra.mxu0 %v4546
    %v4565 = vpop.f32.mrf.mxu0
    %v4566 = vadd.f32 0.0, %v4565
    %4567 = vdwg.mxu0
    %v4569 = vsel %vm2199, %v4455, 0
    %4571 = vmatpush.msra.mxu0 0.0
    %4572 = vmatpush.msra.mxu0 0.0
    %4573 = vmatpush.msra.mxu0 0.0
    %4574 = vmatpush.msra.mxu0 0.0
    %4575 = vmatpush.msra.mxu0 0.0
    %4576 = vmatpush.msra.mxu0 0.0
    %4577 = vmatpush.msra.mxu0 0.0
    %4578 = vmatpush.msra.mxu0 0.0
    %4579 = vmatpush.msra.mxu0 0.0
    %4580 = vmatpush.msra.mxu0 0.0
    %4581 = vmatpush.msra.mxu0 0.0
    %4582 = vmatpush.msra.mxu0 0.0
    %4583 = vmatpush.msra.mxu0 0.0
    %4584 = vmatpush.msra.mxu0 0.0
    %4585 = vmatpush.msra.mxu0 0.0
    %4586 = vmatpush.msra.mxu0 %v3932
    %4587 = vmatmul.f32.gmra.mxu0 %v4569
    %v4588 = vpop.f32.mrf.mxu0
    %v4589 = vadd.f32 0.0, %v4588
    %4590 = vdwg.mxu0
    %v4592 = vsel %vm2199, %v4456, 0
    %4594 = vmatpush.msra.mxu0 0.0
    %4595 = vmatpush.msra.mxu0 0.0
    %4596 = vmatpush.msra.mxu0 0.0
    %4597 = vmatpush.msra.mxu0 0.0
    %4598 = vmatpush.msra.mxu0 0.0
    %4599 = vmatpush.msra.mxu0 0.0
    %4600 = vmatpush.msra.mxu0 0.0
    %4601 = vmatpush.msra.mxu0 0.0
    %4602 = vmatpush.msra.mxu0 0.0
    %4603 = vmatpush.msra.mxu0 0.0
    %4604 = vmatpush.msra.mxu0 0.0
    %4605 = vmatpush.msra.mxu0 0.0
    %4606 = vmatpush.msra.mxu0 0.0
    %4607 = vmatpush.msra.mxu0 0.0
    %4608 = vmatpush.msra.mxu0 0.0
    %4609 = vmatpush.msra.mxu0 %v3934
    %4610 = vmatmul.f32.gmra.mxu0 %v4592
    %v4611 = vpop.f32.mrf.mxu0
    %v4612 = vadd.f32 0.0, %v4611
    %4613 = vdwg.mxu0
    %v4615 = vsel %vm2199, %v4457, 0
    %4617 = vmatpush.msra.mxu0 0.0
    %4618 = vmatpush.msra.mxu0 0.0
    %4619 = vmatpush.msra.mxu0 0.0
    %4620 = vmatpush.msra.mxu0 0.0
    %4621 = vmatpush.msra.mxu0 0.0
    %4622 = vmatpush.msra.mxu0 0.0
    %4623 = vmatpush.msra.mxu0 0.0
    %4624 = vmatpush.msra.mxu0 0.0
    %4625 = vmatpush.msra.mxu0 0.0
    %4626 = vmatpush.msra.mxu0 0.0
    %4627 = vmatpush.msra.mxu0 0.0
    %4628 = vmatpush.msra.mxu0 0.0
    %4629 = vmatpush.msra.mxu0 0.0
    %4630 = vmatpush.msra.mxu0 0.0
    %4631 = vmatpush.msra.mxu0 0.0
    %4632 = vmatpush.msra.mxu0 %v3936
    %4633 = vmatmul.f32.gmra.mxu0 %v4615
    %v4634 = vpop.f32.mrf.mxu0
    %v4635 = vadd.f32 0.0, %v4634
    %4636 = vdwg.mxu0
    %v4638 = vsel %vm2199, %v4458, 0
    %4640 = vmatpush.msra.mxu0 0.0
    %4641 = vmatpush.msra.mxu0 0.0
    %4642 = vmatpush.msra.mxu0 0.0
    %4643 = vmatpush.msra.mxu0 0.0
    %4644 = vmatpush.msra.mxu0 0.0
    %4645 = vmatpush.msra.mxu0 0.0
    %4646 = vmatpush.msra.mxu0 0.0
    %4647 = vmatpush.msra.mxu0 0.0
    %4648 = vmatpush.msra.mxu0 0.0
    %4649 = vmatpush.msra.mxu0 0.0
    %4650 = vmatpush.msra.mxu0 0.0
    %4651 = vmatpush.msra.mxu0 0.0
    %4652 = vmatpush.msra.mxu0 0.0
    %4653 = vmatpush.msra.mxu0 0.0
    %4654 = vmatpush.msra.mxu0 0.0
    %4655 = vmatpush.msra.mxu0 %v3938
    %4656 = vmatmul.f32.gmra.mxu0 %v4638
    %v4657 = vpop.f32.mrf.mxu0
    %v4658 = vadd.f32 0.0, %v4657
    %4659 = vdwg.mxu0
    %v4661 = vsel %vm2199, %v4459, 0
    %4663 = vmatpush.msra.mxu0 0.0
    %4664 = vmatpush.msra.mxu0 0.0
    %4665 = vmatpush.msra.mxu0 0.0
    %4666 = vmatpush.msra.mxu0 0.0
    %4667 = vmatpush.msra.mxu0 0.0
    %4668 = vmatpush.msra.mxu0 0.0
    %4669 = vmatpush.msra.mxu0 0.0
    %4670 = vmatpush.msra.mxu0 0.0
    %4671 = vmatpush.msra.mxu0 0.0
    %4672 = vmatpush.msra.mxu0 0.0
    %4673 = vmatpush.msra.mxu0 0.0
    %4674 = vmatpush.msra.mxu0 0.0
    %4675 = vmatpush.msra.mxu0 0.0
    %4676 = vmatpush.msra.mxu0 0.0
    %4677 = vmatpush.msra.mxu0 0.0
    %4678 = vmatpush.msra.mxu0 %v3986
    %4679 = vmatmul.f32.gmra.mxu0 %v4661
    %v4680 = vpop.f32.mrf.mxu0
    %v4681 = vadd.f32 0.0, %v4680
    %4682 = vdwg.mxu0
    %v4684 = vsel %vm2199, %v4460, 0
    %4686 = vmatpush.msra.mxu0 0.0
    %4687 = vmatpush.msra.mxu0 0.0
    %4688 = vmatpush.msra.mxu0 0.0
    %4689 = vmatpush.msra.mxu0 0.0
    %4690 = vmatpush.msra.mxu0 0.0
    %4691 = vmatpush.msra.mxu0 0.0
    %4692 = vmatpush.msra.mxu0 0.0
    %4693 = vmatpush.msra.mxu0 0.0
    %4694 = vmatpush.msra.mxu0 0.0
    %4695 = vmatpush.msra.mxu0 0.0
    %4696 = vmatpush.msra.mxu0 0.0
    %4697 = vmatpush.msra.mxu0 0.0
    %4698 = vmatpush.msra.mxu0 0.0
    %4699 = vmatpush.msra.mxu0 0.0
    %4700 = vmatpush.msra.mxu0 0.0
    %4701 = vmatpush.msra.mxu0 %v3988
    %4702 = vmatmul.f32.gmra.mxu0 %v4684
    %v4703 = vpop.f32.mrf.mxu0
    %v4704 = vadd.f32 0.0, %v4703
    %4705 = vdwg.mxu0
    %v4707 = vsel %vm2199, %v4461, 0
    %4709 = vmatpush.msra.mxu0 0.0
    %4710 = vmatpush.msra.mxu0 0.0
    %4711 = vmatpush.msra.mxu0 0.0
    %4712 = vmatpush.msra.mxu0 0.0
    %4713 = vmatpush.msra.mxu0 0.0
    %4714 = vmatpush.msra.mxu0 0.0
    %4715 = vmatpush.msra.mxu0 0.0
    %4716 = vmatpush.msra.mxu0 0.0
    %4717 = vmatpush.msra.mxu0 0.0
    %4718 = vmatpush.msra.mxu0 0.0
    %4719 = vmatpush.msra.mxu0 0.0
    %4720 = vmatpush.msra.mxu0 0.0
    %4721 = vmatpush.msra.mxu0 0.0
    %4722 = vmatpush.msra.mxu0 0.0
    %4723 = vmatpush.msra.mxu0 0.0
    %4724 = vmatpush.msra.mxu0 %v3990
    %4725 = vmatmul.f32.gmra.mxu0 %v4707
    %v4726 = vpop.f32.mrf.mxu0
    %v4727 = vadd.f32 0.0, %v4726
    %4728 = vdwg.mxu0
    %v4730 = vsel %vm2199, %v4462, 0
    %4732 = vmatpush.msra.mxu0 0.0
    %4733 = vmatpush.msra.mxu0 0.0
    %4734 = vmatpush.msra.mxu0 0.0
    %4735 = vmatpush.msra.mxu0 0.0
    %4736 = vmatpush.msra.mxu0 0.0
    %4737 = vmatpush.msra.mxu0 0.0
    %4738 = vmatpush.msra.mxu0 0.0
    %4739 = vmatpush.msra.mxu0 0.0
    %4740 = vmatpush.msra.mxu0 0.0
    %4741 = vmatpush.msra.mxu0 0.0
    %4742 = vmatpush.msra.mxu0 0.0
    %4743 = vmatpush.msra.mxu0 0.0
    %4744 = vmatpush.msra.mxu0 0.0
    %4745 = vmatpush.msra.mxu0 0.0
    %4746 = vmatpush.msra.mxu0 0.0
    %4747 = vmatpush.msra.mxu0 %v3992
    %4748 = vmatmul.f32.gmra.mxu0 %v4730
    %v4749 = vpop.f32.mrf.mxu0
    %v4750 = vadd.f32 0.0, %v4749
    %4751 = vdwg.mxu0
    %v4753 = vsel %vm1861, %v4497, 0
    %4755 = vmatpush.msra.mxu0 0.0
    %4756 = vmatpush.msra.mxu0 0.0
    %4757 = vmatpush.msra.mxu0 0.0
    %4758 = vmatpush.msra.mxu0 0.0
    %4759 = vmatpush.msra.mxu0 0.0
    %4760 = vmatpush.msra.mxu0 0.0
    %4761 = vmatpush.msra.mxu0 0.0
    %4762 = vmatpush.msra.mxu0 0.0
    %4763 = vmatpush.msra.mxu0 %v697
    %4764 = vmatpush.msra.mxu0 %v696
    %4765 = vmatpush.msra.mxu0 %v695
    %4766 = vmatpush.msra.mxu0 %v694
    %4767 = vmatpush.msra.mxu0 %v693
    %4768 = vmatpush.msra.mxu0 %v692
    %4769 = vmatpush.msra.mxu0 %v691
    %4770 = vmatpush.msra.mxu0 %v690
    %4771 = vmatmul.f32.gmra.mxu0 %v4753
    %v4772 = vpop.f32.mrf.mxu0
    %v4773 = vadd.f32 0.0, %v4772
    %4774 = vdwg.mxu0
    %v4776 = vsel %vm1861, %v4520, 0
    %4778 = vmatpush.msra.mxu0 0.0
    %4779 = vmatpush.msra.mxu0 0.0
    %4780 = vmatpush.msra.mxu0 0.0
    %4781 = vmatpush.msra.mxu0 0.0
    %4782 = vmatpush.msra.mxu0 0.0
    %4783 = vmatpush.msra.mxu0 0.0
    %4784 = vmatpush.msra.mxu0 0.0
    %4785 = vmatpush.msra.mxu0 0.0
    %4786 = vmatpush.msra.mxu0 %v705
    %4787 = vmatpush.msra.mxu0 %v704
    %4788 = vmatpush.msra.mxu0 %v703
    %4789 = vmatpush.msra.mxu0 %v702
    %4790 = vmatpush.msra.mxu0 %v701
    %4791 = vmatpush.msra.mxu0 %v700
    %4792 = vmatpush.msra.mxu0 %v699
    %4793 = vmatpush.msra.mxu0 %v698
    %4794 = vmatmul.f32.gmra.mxu0 %v4776
    %v4795 = vpop.f32.mrf.mxu0
    %v4796 = vadd.f32 0.0, %v4795
    %4797 = vdwg.mxu0
    %v4799 = vsel %vm1861, %v4543, 0
    %4801 = vmatpush.msra.mxu0 0.0
    %4802 = vmatpush.msra.mxu0 0.0
    %4803 = vmatpush.msra.mxu0 0.0
    %4804 = vmatpush.msra.mxu0 0.0
    %4805 = vmatpush.msra.mxu0 0.0
    %4806 = vmatpush.msra.mxu0 0.0
    %4807 = vmatpush.msra.mxu0 0.0
    %4808 = vmatpush.msra.mxu0 0.0
    %4809 = vmatpush.msra.mxu0 %v713
    %4810 = vmatpush.msra.mxu0 %v712
    %4811 = vmatpush.msra.mxu0 %v711
    %4812 = vmatpush.msra.mxu0 %v710
    %4813 = vmatpush.msra.mxu0 %v709
    %4814 = vmatpush.msra.mxu0 %v708
    %4815 = vmatpush.msra.mxu0 %v707
    %4816 = vmatpush.msra.mxu0 %v706
    %4817 = vmatmul.f32.gmra.mxu0 %v4799
    %v4818 = vpop.f32.mrf.mxu0
    %v4819 = vadd.f32 0.0, %v4818
    %4820 = vdwg.mxu0
    %v4822 = vsel %vm1861, %v4566, 0
    %4824 = vmatpush.msra.mxu0 0.0
    %4825 = vmatpush.msra.mxu0 0.0
    %4826 = vmatpush.msra.mxu0 0.0
    %4827 = vmatpush.msra.mxu0 0.0
    %4828 = vmatpush.msra.mxu0 0.0
    %4829 = vmatpush.msra.mxu0 0.0
    %4830 = vmatpush.msra.mxu0 0.0
    %4831 = vmatpush.msra.mxu0 0.0
    %4832 = vmatpush.msra.mxu0 %v721
    %4833 = vmatpush.msra.mxu0 %v720
    %4834 = vmatpush.msra.mxu0 %v719
    %4835 = vmatpush.msra.mxu0 %v718
    %4836 = vmatpush.msra.mxu0 %v717
    %4837 = vmatpush.msra.mxu0 %v716
    %4838 = vmatpush.msra.mxu0 %v715
    %4839 = vmatpush.msra.mxu0 %v714
    %4840 = vmatmul.f32.gmra.mxu0 %v4822
    %v4841 = vpop.f32.mrf.mxu0
    %v4842 = vadd.f32 0.0, %v4841
    %4843 = vdwg.mxu0
    %v4845 = vsel %vm1861, %v4589, 0
    %4847 = vmatpush.msra.mxu0 0.0
    %4848 = vmatpush.msra.mxu0 0.0
    %4849 = vmatpush.msra.mxu0 0.0
    %4850 = vmatpush.msra.mxu0 0.0
    %4851 = vmatpush.msra.mxu0 0.0
    %4852 = vmatpush.msra.mxu0 0.0
    %4853 = vmatpush.msra.mxu0 0.0
    %4854 = vmatpush.msra.mxu0 0.0
    %4855 = vmatpush.msra.mxu0 %v729
    %4856 = vmatpush.msra.mxu0 %v728
    %4857 = vmatpush.msra.mxu0 %v727
    %4858 = vmatpush.msra.mxu0 %v726
    %4859 = vmatpush.msra.mxu0 %v725
    %4860 = vmatpush.msra.mxu0 %v724
    %4861 = vmatpush.msra.mxu0 %v723
    %4862 = vmatpush.msra.mxu0 %v722
    %4863 = vmatmul.f32.gmra.mxu0 %v4845
    %v4864 = vpop.f32.mrf.mxu0
    %v4865 = vadd.f32 0.0, %v4864
    %4866 = vdwg.mxu0
    %v4868 = vsel %vm1861, %v4612, 0
    %4870 = vmatpush.msra.mxu0 0.0
    %4871 = vmatpush.msra.mxu0 0.0
    %4872 = vmatpush.msra.mxu0 0.0
    %4873 = vmatpush.msra.mxu0 0.0
    %4874 = vmatpush.msra.mxu0 0.0
    %4875 = vmatpush.msra.mxu0 0.0
    %4876 = vmatpush.msra.mxu0 0.0
    %4877 = vmatpush.msra.mxu0 0.0
    %4878 = vmatpush.msra.mxu0 %v737
    %4879 = vmatpush.msra.mxu0 %v736
    %4880 = vmatpush.msra.mxu0 %v735
    %4881 = vmatpush.msra.mxu0 %v734
    %4882 = vmatpush.msra.mxu0 %v733
    %4883 = vmatpush.msra.mxu0 %v732
    %4884 = vmatpush.msra.mxu0 %v731
    %4885 = vmatpush.msra.mxu0 %v730
    %4886 = vmatmul.f32.gmra.mxu0 %v4868
    %v4887 = vpop.f32.mrf.mxu0
    %v4888 = vadd.f32 0.0, %v4887
    %4889 = vdwg.mxu0
    %v4891 = vsel %vm1861, %v4635, 0
    %4893 = vmatpush.msra.mxu0 0.0
    %4894 = vmatpush.msra.mxu0 0.0
    %4895 = vmatpush.msra.mxu0 0.0
    %4896 = vmatpush.msra.mxu0 0.0
    %4897 = vmatpush.msra.mxu0 0.0
    %4898 = vmatpush.msra.mxu0 0.0
    %4899 = vmatpush.msra.mxu0 0.0
    %4900 = vmatpush.msra.mxu0 0.0
    %4901 = vmatpush.msra.mxu0 %v745
    %4902 = vmatpush.msra.mxu0 %v744
    %4903 = vmatpush.msra.mxu0 %v743
    %4904 = vmatpush.msra.mxu0 %v742
    %4905 = vmatpush.msra.mxu0 %v741
    %4906 = vmatpush.msra.mxu0 %v740
    %4907 = vmatpush.msra.mxu0 %v739
    %4908 = vmatpush.msra.mxu0 %v738
    %4909 = vmatmul.f32.gmra.mxu0 %v4891
    %v4910 = vpop.f32.mrf.mxu0
    %v4911 = vadd.f32 0.0, %v4910
    %4912 = vdwg.mxu0
    %v4914 = vsel %vm1861, %v4658, 0
    %4916 = vmatpush.msra.mxu0 0.0
    %4917 = vmatpush.msra.mxu0 0.0
    %4918 = vmatpush.msra.mxu0 0.0
    %4919 = vmatpush.msra.mxu0 0.0
    %4920 = vmatpush.msra.mxu0 0.0
    %4921 = vmatpush.msra.mxu0 0.0
    %4922 = vmatpush.msra.mxu0 0.0
    %4923 = vmatpush.msra.mxu0 0.0
    %4924 = vmatpush.msra.mxu0 %v753
    %4925 = vmatpush.msra.mxu0 %v752
    %4926 = vmatpush.msra.mxu0 %v751
    %4927 = vmatpush.msra.mxu0 %v750
    %4928 = vmatpush.msra.mxu0 %v749
    %4929 = vmatpush.msra.mxu0 %v748
    %4930 = vmatpush.msra.mxu0 %v747
    %4931 = vmatpush.msra.mxu0 %v746
    %4932 = vmatmul.f32.gmra.mxu0 %v4914
    %v4933 = vpop.f32.mrf.mxu0
    %v4934 = vadd.f32 0.0, %v4933
    %4935 = vdwg.mxu0
    %v4937 = vsel %vm1861, %v4681, 0
    %4939 = vmatpush.msra.mxu0 0.0
    %4940 = vmatpush.msra.mxu0 0.0
    %4941 = vmatpush.msra.mxu0 0.0
    %4942 = vmatpush.msra.mxu0 0.0
    %4943 = vmatpush.msra.mxu0 0.0
    %4944 = vmatpush.msra.mxu0 0.0
    %4945 = vmatpush.msra.mxu0 0.0
    %4946 = vmatpush.msra.mxu0 0.0
    %4947 = vmatpush.msra.mxu0 %v761
    %4948 = vmatpush.msra.mxu0 %v760
    %4949 = vmatpush.msra.mxu0 %v759
    %4950 = vmatpush.msra.mxu0 %v758
    %4951 = vmatpush.msra.mxu0 %v757
    %4952 = vmatpush.msra.mxu0 %v756
    %4953 = vmatpush.msra.mxu0 %v755
    %4954 = vmatpush.msra.mxu0 %v754
    %4955 = vmatmul.f32.gmra.mxu0 %v4937
    %v4956 = vpop.f32.mrf.mxu0
    %v4957 = vadd.f32 0.0, %v4956
    %4958 = vdwg.mxu0
    %v4960 = vsel %vm1861, %v4704, 0
    %4962 = vmatpush.msra.mxu0 0.0
    %4963 = vmatpush.msra.mxu0 0.0
    %4964 = vmatpush.msra.mxu0 0.0
    %4965 = vmatpush.msra.mxu0 0.0
    %4966 = vmatpush.msra.mxu0 0.0
    %4967 = vmatpush.msra.mxu0 0.0
    %4968 = vmatpush.msra.mxu0 0.0
    %4969 = vmatpush.msra.mxu0 0.0
    %4970 = vmatpush.msra.mxu0 %v769
    %4971 = vmatpush.msra.mxu0 %v768
    %4972 = vmatpush.msra.mxu0 %v767
    %4973 = vmatpush.msra.mxu0 %v766
    %4974 = vmatpush.msra.mxu0 %v765
    %4975 = vmatpush.msra.mxu0 %v764
    %4976 = vmatpush.msra.mxu0 %v763
    %4977 = vmatpush.msra.mxu0 %v762
    %4978 = vmatmul.f32.gmra.mxu0 %v4960
    %v4979 = vpop.f32.mrf.mxu0
    %v4980 = vadd.f32 0.0, %v4979
    %4981 = vdwg.mxu0
    %v4983 = vsel %vm1861, %v4727, 0
    %4985 = vmatpush.msra.mxu0 0.0
    %4986 = vmatpush.msra.mxu0 0.0
    %4987 = vmatpush.msra.mxu0 0.0
    %4988 = vmatpush.msra.mxu0 0.0
    %4989 = vmatpush.msra.mxu0 0.0
    %4990 = vmatpush.msra.mxu0 0.0
    %4991 = vmatpush.msra.mxu0 0.0
    %4992 = vmatpush.msra.mxu0 0.0
    %4993 = vmatpush.msra.mxu0 %v777
    %4994 = vmatpush.msra.mxu0 %v776
    %4995 = vmatpush.msra.mxu0 %v775
    %4996 = vmatpush.msra.mxu0 %v774
    %4997 = vmatpush.msra.mxu0 %v773
    %4998 = vmatpush.msra.mxu0 %v772
    %4999 = vmatpush.msra.mxu0 %v771
    %5000 = vmatpush.msra.mxu0 %v770
    %5001 = vmatmul.f32.gmra.mxu0 %v4983
    %v5002 = vpop.f32.mrf.mxu0
    %v5003 = vadd.f32 0.0, %v5002
    %5004 = vdwg.mxu0
    %v5006 = vsel %vm1861, %v4750, 0
    %5008 = vmatpush.msra.mxu0 0.0
    %5009 = vmatpush.msra.mxu0 0.0
    %5010 = vmatpush.msra.mxu0 0.0
    %5011 = vmatpush.msra.mxu0 0.0
    %5012 = vmatpush.msra.mxu0 0.0
    %5013 = vmatpush.msra.mxu0 0.0
    %5014 = vmatpush.msra.mxu0 0.0
    %5015 = vmatpush.msra.mxu0 0.0
    %5016 = vmatpush.msra.mxu0 %v785
    %5017 = vmatpush.msra.mxu0 %v784
    %5018 = vmatpush.msra.mxu0 %v783
    %5019 = vmatpush.msra.mxu0 %v782
    %5020 = vmatpush.msra.mxu0 %v781
    %5021 = vmatpush.msra.mxu0 %v780
    %5022 = vmatpush.msra.mxu0 %v779
    %5023 = vmatpush.msra.mxu0 %v778
    %5024 = vmatmul.f32.gmra.mxu0 %v5006
    %v5025 = vpop.f32.mrf.mxu0
    %v5026 = vadd.f32 0.0, %v5025
    %5027 = vdwg.mxu0
    %v5028 = vsel %vm214, %v4773, 0.0
    %v5029 = vsel %vm214, %v4796, 0.0
    %v5030 = vadd.f32 %v5028, %v5029
    %v5031 = vsel %vm214, %v4819, 0.0
    %v5032 = vadd.f32 %v5030, %v5031
    %v5033 = vsel %vm214, %v4842, 0.0
    %v5034 = vadd.f32 %v5032, %v5033
    %v5035 = vsel %vm214, %v4865, 0.0
    %v5036 = vadd.f32 %v5034, %v5035
    %v5037 = vsel %vm214, %v4888, 0.0
    %v5038 = vadd.f32 %v5036, %v5037
    %v5039 = vsel %vm214, %v4911, 0.0
    %v5040 = vadd.f32 %v5038, %v5039
    %v5041 = vsel %vm214, %v4934, 0.0
    %v5042 = vadd.f32 %v5040, %v5041
    %v5043 = vsel %vm214, %v4957, 0.0
    %v5044 = vadd.f32 %v5042, %v5043
    %v5045 = vsel %vm214, %v4980, 0.0
    %v5046 = vadd.f32 %v5044, %v5045
    %v5047 = vsel %vm214, %v5003, 0.0
    %v5048 = vadd.f32 %v5046, %v5047
    %v5049 = vsel %vm214, %v5026, 0.0
    %v5050 = vadd.f32 %v5048, %v5049
    %v5051 = vld [vmem:[%s5] sm:$0x1]
    %v5053 = vperm.slane %v5051, 0
    %v5055 = vadd.f32 %v2918, %v5053
    %v5056 = vadd.f32 %v5050, %v5053
    %v5057 = vadd.f32 %v5055, %v44
    %v5058 = vadd.f32 %v5056, %v45
    %v5059 = vsel %vm214, %v5057, 0.0
    %5060 = vadd.xlane.f32.xlu0 %v5059
    %v5061 = vpop.xlane.xlu0 %5060
    %v5062 = vsel %vm214, %v5058, 0.0
    %5063 = vadd.xlane.f32.xlu0 %v5062
    %v5064 = vpop.xlane.xlu0 %5063
    %v5065 = vrcp.pop 50.0
    %v5066 = vmul.f32 50.0, %v5065
    %v5067 = vsub.f32 1.0, %v5066
    %v5068 = vmul.f32 %v5065, %v5067
    %v5069 = vadd.f32 %v5065, %v5068
    %vm5070 = vweird.f32 %v5065
    %v5071 = vsel %vm5070, %v5065, %v5069
    %v5072 = vmul.f32 %v5061, %v5071
    %v5073 = vmul.f32 %v5064, %v5071
    %v5074 = vsub.f32 %v5057, %v5072
    %v5075 = vsub.f32 %v5058, %v5073
    %v5076 = vmul.f32 %v5074, %v5074
    %v5077 = vmul.f32 %v5075, %v5075
    %v5078 = vsel %vm214, %v5076, 0.0
    %5079 = vadd.xlane.f32.xlu0 %v5078
    %v5080 = vpop.xlane.xlu0 %5079
    %v5081 = vsel %vm214, %v5077, 0.0
    %5082 = vadd.xlane.f32.xlu0 %v5081
    %v5083 = vpop.xlane.xlu0 %5082
    %v5084 = vmul.f32 %v5080, %v5071
    %v5085 = vmul.f32 %v5083, %v5071
    %v5086 = vadd.f32 %v5084, 1e-05
    %v5087 = vadd.f32 %v5085, 1e-05
    %v5088 = vrsqrt.pop %v5086
    %v5089 = vmul.f32 %v5088, %v5086
    %v5090 = vmul.f32 %v5089, %v5088
    %v5091 = vmul.f32 0.5, %v5090
    %v5092 = vsub.f32 1.5, %v5091
    %v5093 = vmul.f32 %v5088, %v5092
    %vm5094 = vweird.f32 %v5086
    %vm5095 = vweird.f32 %v5088
    %vm5096 = vmor %vm5094, %vm5095
    %v5097 = vsel %vm5096, %v5088, %v5093
    %v5098 = vrsqrt.pop %v5087
    %v5099 = vmul.f32 %v5098, %v5087
    %v5100 = vmul.f32 %v5099, %v5098
    %v5101 = vmul.f32 0.5, %v5100
    %v5102 = vsub.f32 1.5, %v5101
    %v5103 = vmul.f32 %v5098, %v5102
    %vm5104 = vweird.f32 %v5087
    %vm5105 = vweird.f32 %v5098
    %vm5106 = vmor %vm5104, %vm5105
    %v5107 = vsel %vm5106, %v5098, %v5103
    %v5108 = vmul.f32 %v5074, %v5097
    %v5109 = vmul.f32 %v5075, %v5107
    %v5110 = vld [vmem:[%s6] sm:$0x1]
    %v5112 = vperm.slane %v5110, 0
    %v5114 = vmul.f32 %v5108, %v5112
    %v5115 = vmul.f32 %v5109, %v5112
    %v5116 = vld [vmem:[%s7] sm:$0x1]
    %v5118 = vperm.slane %v5116, 0
    %v5120 = vadd.f32 %v5114, %v5118
    %v5121 = vadd.f32 %v5115, %v5118
    %v5122 = vld [vmem:[%s8] sm:$0xff]
    %v5123 = vld [vmem:[%s8 + $0x8] sm:$0xff]
    %v5124 = vld [vmem:[%s8 + $0x10] sm:$0xff]
    %v5125 = vld [vmem:[%s8 + $0x18] sm:$0xff]
    %v5126 = vld [vmem:[%s8 + $0x20] sm:$0xff]
    %v5127 = vld [vmem:[%s8 + $0x28] sm:$0xff]
    %v5128 = vld [vmem:[%s8 + $0x30] sm:$0xff]
    %v5129 = vld [vmem:[%s8 + $0x38] sm:$0xff]
    %v5130 = vld [vmem:[%s8 + $0x40] sm:$0xff]
    %v5131 = vld [vmem:[%s8 + $0x48] sm:$0xff]
    %v5132 = vld [vmem:[%s8 + $0x50] sm:$0xff]
    %v5133 = vld [vmem:[%s8 + $0x58] sm:$0xff]
    %v5134 = vld [vmem:[%s8 + $0x60] sm:$0x3]
    %v5135 = vld [vmem:[%s8 + $0x68] sm:$0x3]
    %v5136 = vld [vmem:[%s9] sm:$0x3]
    %v5138 = vperm.slane %v5136, 0
    %v5139 = vperm.slane %v5136, 1
    %v5143 = vsel %vm214, %v5120, 0
    %v5146 = vsel %vm214, %v5121, 0
    %v5149 = vsel %vm221, %v5134, 0
    %v5152 = vsel %vm221, %v5135, 0
    %5154 = vmatpush.msra.mxu0 0.0
    %5155 = vmatpush.msra.mxu0 0.0
    %5156 = vmatpush.msra.mxu0 0.0
    %5157 = vmatpush.msra.mxu0 0.0
    %5158 = vmatpush.msra.mxu0 0.0
    %5159 = vmatpush.msra.mxu0 0.0
    %5160 = vmatpush.msra.mxu0 0.0
    %5161 = vmatpush.msra.mxu0 0.0
    %5162 = vmatpush.msra.mxu0 0.0
    %5163 = vmatpush.msra.mxu0 %v5149
    %5164 = vmatpush.msra.mxu0 %v5132
    %5165 = vmatpush.msra.mxu0 %v5130
    %5166 = vmatpush.msra.mxu0 %v5128
    %5167 = vmatpush.msra.mxu0 %v5126
    %5168 = vmatpush.msra.mxu0 %v5124
    %5169 = vmatpush.msra.mxu0 %v5122
    %5170 = vmatmul.f32.gmra.mxu0 %v5143
    %v5171 = vpop.f32.mrf.mxu0
    %v5172 = vadd.f32 %v5138, %v5171
    %5173 = vmatmul.f32.gmra.mxu0 %v5146
    %v5174 = vpop.f32.mrf.mxu0
    %v5175 = vadd.f32 %v5138, %v5174
    %5176 = vdwg.mxu0
    %5177 = vmatpush.msra.mxu0 0.0
    %5178 = vmatpush.msra.mxu0 0.0
    %5179 = vmatpush.msra.mxu0 0.0
    %5180 = vmatpush.msra.mxu0 0.0
    %5181 = vmatpush.msra.mxu0 0.0
    %5182 = vmatpush.msra.mxu0 0.0
    %5183 = vmatpush.msra.mxu0 0.0
    %5184 = vmatpush.msra.mxu0 0.0
    %5185 = vmatpush.msra.mxu0 0.0
    %5186 = vmatpush.msra.mxu0 %v5152
    %5187 = vmatpush.msra.mxu0 %v5133
    %5188 = vmatpush.msra.mxu0 %v5131
    %5189 = vmatpush.msra.mxu0 %v5129
    %5190 = vmatpush.msra.mxu0 %v5127
    %5191 = vmatpush.msra.mxu0 %v5125
    %5192 = vmatpush.msra.mxu0 %v5123
    %5193 = vmatmul.f32.gmra.mxu0 %v5143
    %v5194 = vpop.f32.mrf.mxu0
    %v5195 = vadd.f32 %v5139, %v5194
    %5196 = vmatmul.f32.gmra.mxu0 %v5146
    %v5197 = vpop.f32.mrf.mxu0
    %v5198 = vadd.f32 %v5139, %v5197
    %5199 = vdwg.mxu0
    %v5200 = vmul.f32 %v5172, 0.5
    %v5201 = vmul.f32 %v5195, 0.5
    %v5202 = vmul.f32 %v5175, 0.5
    %v5203 = vmul.f32 %v5198, 0.5
    %v5204 = vmul.f32 %v5172, 0.70710677
    %v5205 = vmul.f32 %v5195, 0.70710677
    %v5206 = vmul.f32 %v5175, 0.70710677
    %v5207 = vmul.f32 %v5198, 0.70710677
    %v5208 = vmul.f32 %v5204, %v5204
    %v5209 = vmin.f32 16.0, %v5208
    %v5210 = vmul.f32 %v5209, 2.1237322e-06
    %v5211 = vadd.f32 %v5210, 0.00028619796
    %v5212 = vmul.f32 %v5209, %v5211
    %v5213 = vadd.f32 %v5212, 0.0036580483
    %v5214 = vmul.f32 %v5209, %v5213
    %v5215 = vadd.f32 %v5214, 0.05243302
    %v5216 = vmul.f32 %v5209, %v5215
    %v5217 = vadd.f32 %v5216, 0.18741608
    %v5218 = vmul.f32 %v5209, %v5217
    %v5219 = vadd.f32 %v5218, 1.1283791
    %v5220 = vmul.f32 %v5204, %v5219
    %v5221 = vmul.f32 %v5209, 3.8918573e-05
    %v5222 = vadd.f32 %v5221, 0.001143296
    %v5223 = vmul.f32 %v5209, %v5222
    %v5224 = vadd.f32 %v5223, 0.014752088
    %v5225 = vmul.f32 %v5209, %v5224
    %v5226 = vadd.f32 %v5225, 0.112945676
    %v5227 = vmul.f32 %v5209, %v5226
    %v5228 = vadd.f32 %v5227, 0.4994258
    %v5229 = vmul.f32 %v5209, %v5228
    %v5230 = vadd.f32 %v5229, 1.0
    %v5231 = vrcp.pop %v5230
    %v5232 = vmul.f32 %v5230, %v5231
    %v5233 = vsub.f32 1.0, %v5232
    %v5234 = vmul.f32 %v5231, %v5233
    %v5235 = vadd.f32 %v5231, %v5234
    %vm5236 = vweird.f32 %v5230
    %vm5237 = vweird.f32 %v5231
    %vm5238 = vmor %vm5236, %vm5237
    %v5239 = vsel %vm5238, %v5231, %v5235
    %v5240 = vand.u32 2147483647, %v5230
    %vm5241 = vcmp.eq.f32.partialorder %v5240, 8.507059e+37
    %v5242 = vand.u32 %v5230, 2147483648
    %v5243 = vor.u32 1.1754944e-38, %v5242
    %v5244 = vsel %vm5241, %v5243, %v5239
    %v5245 = vmul.f32 %v5220, %v5244
    %v5246 = vmin.f32 %v5245, 1.0
    %v5247 = vmax.f32 %v5246, -1.0
    %v5248 = vmul.f32 %v5205, %v5205
    %v5249 = vmin.f32 16.0, %v5248
    %v5250 = vmul.f32 %v5249, 2.1237322e-06
    %v5251 = vadd.f32 %v5250, 0.00028619796
    %v5252 = vmul.f32 %v5249, %v5251
    %v5253 = vadd.f32 %v5252, 0.0036580483
    %v5254 = vmul.f32 %v5249, %v5253
    %v5255 = vadd.f32 %v5254, 0.05243302
    %v5256 = vmul.f32 %v5249, %v5255
    %v5257 = vadd.f32 %v5256, 0.18741608
    %v5258 = vmul.f32 %v5249, %v5257
    %v5259 = vadd.f32 %v5258, 1.1283791
    %v5260 = vmul.f32 %v5205, %v5259
    %v5261 = vmul.f32 %v5249, 3.8918573e-05
    %v5262 = vadd.f32 %v5261, 0.001143296
    %v5263 = vmul.f32 %v5249, %v5262
    %v5264 = vadd.f32 %v5263, 0.014752088
    %v5265 = vmul.f32 %v5249, %v5264
    %v5266 = vadd.f32 %v5265, 0.112945676
    %v5267 = vmul.f32 %v5249, %v5266
    %v5268 = vadd.f32 %v5267, 0.4994258
    %v5269 = vmul.f32 %v5249, %v5268
    %v5270 = vadd.f32 %v5269, 1.0
    %v5271 = vrcp.pop %v5270
    %v5272 = vmul.f32 %v5270, %v5271
    %v5273 = vsub.f32 1.0, %v5272
    %v5274 = vmul.f32 %v5271, %v5273
    %v5275 = vadd.f32 %v5271, %v5274
    %vm5276 = vweird.f32 %v5270
    %vm5277 = vweird.f32 %v5271
    %vm5278 = vmor %vm5276, %vm5277
    %v5279 = vsel %vm5278, %v5271, %v5275
    %v5280 = vand.u32 2147483647, %v5270
    %vm5281 = vcmp.eq.f32.partialorder %v5280, 8.507059e+37
    %v5282 = vand.u32 %v5270, 2147483648
    %v5283 = vor.u32 1.1754944e-38, %v5282
    %v5284 = vsel %vm5281, %v5283, %v5279
    %v5285 = vmul.f32 %v5260, %v5284
    %v5286 = vmin.f32 %v5285, 1.0
    %v5287 = vmax.f32 %v5286, -1.0
    %v5288 = vmul.f32 %v5206, %v5206
    %v5289 = vmin.f32 16.0, %v5288
    %v5290 = vmul.f32 %v5289, 2.1237322e-06
    %v5291 = vadd.f32 %v5290, 0.00028619796
    %v5292 = vmul.f32 %v5289, %v5291
    %v5293 = vadd.f32 %v5292, 0.0036580483
    %v5294 = vmul.f32 %v5289, %v5293
    %v5295 = vadd.f32 %v5294, 0.05243302
    %v5296 = vmul.f32 %v5289, %v5295
    %v5297 = vadd.f32 %v5296, 0.18741608
    %v5298 = vmul.f32 %v5289, %v5297
    %v5299 = vadd.f32 %v5298, 1.1283791
    %v5300 = vmul.f32 %v5206, %v5299
    %v5301 = vmul.f32 %v5289, 3.8918573e-05
    %v5302 = vadd.f32 %v5301, 0.001143296
    %v5303 = vmul.f32 %v5289, %v5302
    %v5304 = vadd.f32 %v5303, 0.014752088
    %v5305 = vmul.f32 %v5289, %v5304
    %v5306 = vadd.f32 %v5305, 0.112945676
    %v5307 = vmul.f32 %v5289, %v5306
    %v5308 = vadd.f32 %v5307, 0.4994258
    %v5309 = vmul.f32 %v5289, %v5308
    %v5310 = vadd.f32 %v5309, 1.0
    %v5311 = vrcp.pop %v5310
    %v5312 = vmul.f32 %v5310, %v5311
    %v5313 = vsub.f32 1.0, %v5312
    %v5314 = vmul.f32 %v5311, %v5313
    %v5315 = vadd.f32 %v5311, %v5314
    %vm5316 = vweird.f32 %v5310
    %vm5317 = vweird.f32 %v5311
    %vm5318 = vmor %vm5316, %vm5317
    %v5319 = vsel %vm5318, %v5311, %v5315
    %v5320 = vand.u32 2147483647, %v5310
    %vm5321 = vcmp.eq.f32.partialorder %v5320, 8.507059e+37
    %v5322 = vand.u32 %v5310, 2147483648
    %v5323 = vor.u32 1.1754944e-38, %v5322
    %v5324 = vsel %vm5321, %v5323, %v5319
    %v5325 = vmul.f32 %v5300, %v5324
    %v5326 = vmin.f32 %v5325, 1.0
    %v5327 = vmax.f32 %v5326, -1.0
    %v5328 = vmul.f32 %v5207, %v5207
    %v5329 = vmin.f32 16.0, %v5328
    %v5330 = vmul.f32 %v5329, 2.1237322e-06
    %v5331 = vadd.f32 %v5330, 0.00028619796
    %v5332 = vmul.f32 %v5329, %v5331
    %v5333 = vadd.f32 %v5332, 0.0036580483
    %v5334 = vmul.f32 %v5329, %v5333
    %v5335 = vadd.f32 %v5334, 0.05243302
    %v5336 = vmul.f32 %v5329, %v5335
    %v5337 = vadd.f32 %v5336, 0.18741608
    %v5338 = vmul.f32 %v5329, %v5337
    %v5339 = vadd.f32 %v5338, 1.1283791
    %v5340 = vmul.f32 %v5207, %v5339
    %v5341 = vmul.f32 %v5329, 3.8918573e-05
    %v5342 = vadd.f32 %v5341, 0.001143296
    %v5343 = vmul.f32 %v5329, %v5342
    %v5344 = vadd.f32 %v5343, 0.014752088
    %v5345 = vmul.f32 %v5329, %v5344
    %v5346 = vadd.f32 %v5345, 0.112945676
    %v5347 = vmul.f32 %v5329, %v5346
    %v5348 = vadd.f32 %v5347, 0.4994258
    %v5349 = vmul.f32 %v5329, %v5348
    %v5350 = vadd.f32 %v5349, 1.0
    %v5351 = vrcp.pop %v5350
    %v5352 = vmul.f32 %v5350, %v5351
    %v5353 = vsub.f32 1.0, %v5352
    %v5354 = vmul.f32 %v5351, %v5353
    %v5355 = vadd.f32 %v5351, %v5354
    %vm5356 = vweird.f32 %v5350
    %vm5357 = vweird.f32 %v5351
    %vm5358 = vmor %vm5356, %vm5357
    %v5359 = vsel %vm5358, %v5351, %v5355
    %v5360 = vand.u32 2147483647, %v5350
    %vm5361 = vcmp.eq.f32.partialorder %v5360, 8.507059e+37
    %v5362 = vand.u32 %v5350, 2147483648
    %v5363 = vor.u32 1.1754944e-38, %v5362
    %v5364 = vsel %vm5361, %v5363, %v5359
    %v5365 = vmul.f32 %v5340, %v5364
    %v5366 = vmin.f32 %v5365, 1.0
    %v5367 = vmax.f32 %v5366, -1.0
    %v5368 = vadd.f32 %v5247, 1.0
    %v5369 = vadd.f32 %v5287, 1.0
    %v5370 = vadd.f32 %v5327, 1.0
    %v5371 = vadd.f32 %v5367, 1.0
    %v5372 = vmul.f32 %v5200, %v5368
    %v5373 = vmul.f32 %v5201, %v5369
    %v5374 = vmul.f32 %v5202, %v5370
    %v5375 = vmul.f32 %v5203, %v5371
    %v5376 = vld [vmem:[%s10] sm:$0xff]
    %v5377 = vld [vmem:[%s10 + $0x8] sm:$0xff]
    %v5378 = vld [vmem:[%s10 + $0x10] sm:$0xff]
    %v5379 = vld [vmem:[%s10 + $0x18] sm:$0xff]
    %v5380 = vld [vmem:[%s10 + $0x20] sm:$0xff]
    %v5381 = vld [vmem:[%s10 + $0x28] sm:$0xff]
    %v5382 = vld [vmem:[%s10 + $0x30] sm:$0xff]
    %v5383 = vld [vmem:[%s10 + $0x38] sm:$0xff]
    %v5384 = vld [vmem:[%s10 + $0x40] sm:$0xff]
    %v5385 = vld [vmem:[%s10 + $0x48] sm:$0xff]
    %v5386 = vld [vmem:[%s10 + $0x50] sm:$0xff]
    %v5387 = vld [vmem:[%s10 + $0x58] sm:$0xff]
    %v5388 = vld [vmem:[%s10 + $0x60] sm:$0xff]
    %v5389 = vld [vmem:[%s10 + $0x68] sm:$0xff]
    %v5390 = vld [vmem:[%s10 + $0x70] sm:$0xff]
    %v5391 = vld [vmem:[%s10 + $0x78] sm:$0xff]
    %v5392 = vld [vmem:[%s10 + $0x80] sm:$0xff]
    %v5393 = vld [vmem:[%s10 + $0x88] sm:$0xff]
    %v5394 = vld [vmem:[%s10 + $0x90] sm:$0xff]
    %v5395 = vld [vmem:[%s10 + $0x98] sm:$0xff]
    %v5396 = vld [vmem:[%s10 + $0xa0] sm:$0xff]
    %v5397 = vld [vmem:[%s10 + $0xa8] sm:$0xff]
    %v5398 = vld [vmem:[%s10 + $0xb0] sm:$0xff]
    %v5399 = vld [vmem:[%s10 + $0xb8] sm:$0xff]
    %v5400 = vld [vmem:[%s10 + $0xc0] sm:$0xff]
    %v5401 = vld [vmem:[%s11] sm:$0x1]
    %v5403 = vperm.slane %v5401, 0
    %vm5405 = vcmask 588800
    %v5407 = vsel %vm5405, %v5373, 0
    %v5410 = vsel %vm5405, %v5375, 0
    %5412 = vmatpush.msra.mxu0 %v5391
    %5413 = vmatpush.msra.mxu0 %v5390
    %5414 = vmatpush.msra.mxu0 %v5389
    %5415 = vmatpush.msra.mxu0 %v5388
    %5416 = vmatpush.msra.mxu0 %v5387
    %5417 = vmatpush.msra.mxu0 %v5386
    %5418 = vmatpush.msra.mxu0 %v5385
    %5419 = vmatpush.msra.mxu0 %v5384
    %5420 = vmatpush.msra.mxu0 %v5383
    %5421 = vmatpush.msra.mxu0 %v5382
    %5422 = vmatpush.msra.mxu0 %v5381
    %5423 = vmatpush.msra.mxu0 %v5380
    %5424 = vmatpush.msra.mxu0 %v5379
    %5425 = vmatpush.msra.mxu0 %v5378
    %5426 = vmatpush.msra.mxu0 %v5377
    %5427 = vmatpush.msra.mxu0 %v5376
    %5428 = vmatmul.f32.gmra.mxu0 %v5372
    %v5429 = vpop.f32.mrf.mxu0
    %v5430 = vadd.f32 %v5403, %v5429
    %5431 = vmatmul.f32.gmra.mxu0 %v5374
    %v5432 = vpop.f32.mrf.mxu0
    %v5433 = vadd.f32 %v5403, %v5432
    %5434 = vdwg.mxu0
    %5435 = vmatpush.msra.mxu0 0.0
    %5436 = vmatpush.msra.mxu0 0.0
    %5437 = vmatpush.msra.mxu0 0.0
    %5438 = vmatpush.msra.mxu0 0.0
    %5439 = vmatpush.msra.mxu0 0.0
    %5440 = vmatpush.msra.mxu0 0.0
    %5441 = vmatpush.msra.mxu0 0.0
    %5442 = vmatpush.msra.mxu0 %v5400
    %5443 = vmatpush.msra.mxu0 %v5399
    %5444 = vmatpush.msra.mxu0 %v5398
    %5445 = vmatpush.msra.mxu0 %v5397
    %5446 = vmatpush.msra.mxu0 %v5396
    %5447 = vmatpush.msra.mxu0 %v5395
    %5448 = vmatpush.msra.mxu0 %v5394
    %5449 = vmatpush.msra.mxu0 %v5393
    %5450 = vmatpush.msra.mxu0 %v5392
    %5451 = vmatmul.f32.gmra.mxu0 %v5407
    %v5452 = vpop.f32.mrf.mxu0
    %v5453 = vadd.f32 %v5430, %v5452
    %5454 = vmatmul.f32.gmra.mxu0 %v5410
    %v5455 = vpop.f32.mrf.mxu0
    %v5456 = vadd.f32 %v5433, %v5455
    %5457 = vdwg.mxu0
    %5458 = vst.msk [vmem:[#allocation2] sm:$0xff] %vm214, %v5453
    %5459 = vst.msk [vmem:[#allocation2 + $0x8] sm:$0xff] %vm214, %v5456
    // Predicated region
    $region50: #{tpu_custom_call.1} parent=1 // pred_check
      _
    $region51: #{tpu_custom_call.1} parent=1 // pred_check_branch
      %5461 = sbr.rel (0) target = $region53
    $region52: #{tpu_custom_call.1} parent=1 // pred_region
      %5463 = vsyncadd [#allocation3], 0
      %s5464 = sshll.u32 [#allocation2], 4
      %s5465 = int_to_ptr.vmem [resolvable:$true] %s5464
      %s5466 = sshll.u32 %s12, 4
      %s5467 = int_to_ptr.hbm [resolvable:$true] %s5466
      %5472 = dma.vmem_to_hbm [thread:$0]  %s5465, 256, %s5467, [#allocation3], 128, 128, 8
    $region53: #{tpu_custom_call.1} parent=1 // pred_fallthru
      _
    // Predicated region
    $region54: #{tpu_custom_call.1} parent=1 // pred_check
      _
    $region55: #{tpu_custom_call.1} parent=1 // pred_check_branch
      %5474 = sbr.rel (0) target = $region57
    $region56: #{tpu_custom_call.1} parent=1 // pred_region
      _
    $region57: #{tpu_custom_call.1} parent=1 // pred_fallthru
      _
    // Predicated region
    $region58: #{tpu_custom_call.1} parent=1 // pred_check
      _
    $region59: #{tpu_custom_call.1} parent=1 // pred_check_branch
      %5476 = sbr.rel (0) target = $region61
    $region60: #{tpu_custom_call.1} parent=1 // pred_region
      %5478 = dma.done [#allocation3], 256
    $region61: #{tpu_custom_call.1} parent=1 // pred_fallthru
      _
    // Predicated region
    $region62: #{tpu_custom_call.1} parent=1 // pred_check
      _
    $region63: #{tpu_custom_call.1} parent=1 // pred_check_branch
      %5480 = sbr.rel (0) target = $region65
    $region64: #{tpu_custom_call.1} parent=1 // pred_region
      _
    $region65: #{tpu_custom_call.1} parent=1 // pred_fallthru
      _
    %5481 = vsyncpa [#allocation3], 1

</llo_original>
